<compile_context>
chip_gen: v6e
topology: v6e:2x2x1
jax: 0.10.0
libtpu: 0.0.40
codegen_flags: <defaults>
</compile_context>

<pallas_src>
import functools

import numpy as np
import jax
import jax.numpy as jnp
from jax.experimental import pallas as pl
from jax.experimental.pallas import tpu as pltpu


def _round_up(x, m):
    return (x + m - 1) // m * m


def _tap_offsets(d):
    """Spatial offsets (dh, dw) of the 9 taps of a 3x3 conv, dilation d, pad d."""
    return [((kh - 1) * d, (kw - 1) * d) for kh in range(3) for kw in range(3)]


def _tap_masks(H, W, d):
    """(9, H*W) f32 masks: 1 where the tap lands inside the image, 0 where it
    falls into the zero padding."""
    hh = np.arange(H)[:, None]
    ww = np.arange(W)[None, :]
    out = np.zeros((9, H * W), np.float32)
    for t, (dh, dw) in enumerate(_tap_offsets(d)):
        valid = ((hh + dh >= 0) & (hh + dh < H) &
                 (ww + dw >= 0) & (ww + dw < W))
        out[t] = valid.reshape(-1).astype(np.float32)
    return out


# ----------------------------------------------------------------------------
# The fused kernel: one grid step == one image, everything resident in VMEM.
# ----------------------------------------------------------------------------
def _rdb_kernel(x_ref, masks_ref, wd_ref, bd_ref, wp_ref, bp_ref, o_ref,
                stack_ref, *, n_layers, inter, shifts):
    C, M = x_ref.shape                       # (in_channel, H*W)
    x0 = x_ref[...]                          # f32

    # Channel stack layout (rows of stack_ref):
    #   [0*inter..)    y_0   (layer-0 output)
    #   [1*inter..)    y_1
    #   ...
    #   [L*inter..)    x     (block input)
    #   tail           zeros (weights there are zero as well)
    stack_ref[...] = jnp.zeros(stack_ref.shape, jnp.float32)   # NaN-safe init
    x_row = n_layers * inter
    stack_ref[x_row:x_row + C, :] = x0

    for i in range(n_layers):                # statically unrolled layers
        stack = stack_ref[...]               # (c_pad, M), read once per layer
        acc = jnp.zeros((inter, M), jnp.float32)
        for t in range(9):                   # fused im2col: 9 dilated taps
            k = i * 9 + t
            w_tap = wd_ref[k * inter:(k + 1) * inter, :]   # (inter, c_pad)
            s = shifts[i][t]                 # static flat offset dh*W + dw
            if s == 0:                       # centre tap: no shift, full mask
                rhs = stack
            else:
                # rolled[:, m] == stack[:, m + s]; mask zeroes positions whose
                # neighbour falls outside the image (== the conv zero padding).
                rolled = pltpu.roll(stack, (-s) % M, 1)
                rhs = rolled * masks_ref[k:k + 1, :]
            acc = acc + jnp.dot(w_tap, rhs, preferred_element_type=jnp.float32)
        acc = acc + bd_ref[i * inter:(i + 1) * inter, :]    # bias (inter, 1)
        stack_ref[i * inter:(i + 1) * inter, :] = jnp.maximum(acc, 0.0)  # ReLU

    # 1x1 post-conv over the whole dense stack + residual add, in-kernel.
    out = jnp.dot(wp_ref[...], stack_ref[...],
                  preferred_element_type=jnp.float32) + bp_ref[...]
    o_ref[...] = (out + x0).astype(o_ref.dtype)


# ----------------------------------------------------------------------------
# Parameters (equivalent to the PyTorch module) + host-side packing.
# ----------------------------------------------------------------------------
def make_rdb(key, in_channel, d_list, inter_num):
    keys = jax.random.split(key, len(d_list) + 1)
    layers, c = [], in_channel
    for i, _ in enumerate(d_list):
        kw_, kb = jax.random.split(keys[i])
        layers.append({
            "w": 0.1 * jax.random.normal(kw_, (inter_num, c, 3, 3), jnp.float32),
            "b": 0.1 * jax.random.normal(kb, (inter_num,), jnp.float32),
        })
        c += inter_num
    kw_, kb = jax.random.split(keys[-1])
    post = {
        "w": 0.1 * jax.random.normal(kw_, (in_channel, c, 1, 1), jnp.float32),
        "b": 0.1 * jax.random.normal(kb, (in_channel,), jnp.float32),
    }
    return {"layers": layers, "post": post,
            "d_list": tuple(int(d) for d in d_list),
            "inter_num": int(inter_num), "in_channel": int(in_channel)}


def pack_rdb(params, H, W):
    """Repack weights/biases into the fixed stack layout, precompute the static
    per-tap flat shifts and the boundary masks (done once, on the host)."""
    C = params["in_channel"]
    inter = params["inter_num"]
    d_list = params["d_list"]
    L = len(d_list)
    M = H * W
    c_total = L * inter + C
    c_pad = _round_up(c_total, 8)
    x_row = L * inter

    def stack_rows(n_prev):
        # torch channel order feeding conv #n_prev is [y_{n_prev-1},...,y_0,x].
        rows = []
        for c in range(n_prev * inter + C):
            if c < n_prev * inter:
                src = n_prev - 1 - (c // inter)
                rows.append(src * inter + (c % inter))
            else:
                rows.append(x_row + (c - n_prev * inter))
        return np.asarray(rows, np.int64)

    wd = np.zeros((L * 9 * inter, c_pad), np.float32)
    bd = np.zeros((L * inter, 1), np.float32)
    masks = np.zeros((L * 9, M), np.float32)
    shifts = []
    for i, d in enumerate(d_list):
        w = np.asarray(params["layers"][i]["w"], np.float32)  # (inter, cin_i, 3, 3)
        rows = stack_rows(i)
        layer_shifts = []
        for t, (dh, dw) in enumerate(_tap_offsets(d)):
            kh, kw = divmod(t, 3)
            wd[(i * 9 + t) * inter:(i * 9 + t + 1) * inter, rows] = w[:, :, kh, kw]
            layer_shifts.append(int(dh * W + dw))
        masks[i * 9:(i + 1) * 9] = _tap_masks(H, W, d)
        bd[i * inter:(i + 1) * inter, 0] = np.asarray(params["layers"][i]["b"])
        shifts.append(tuple(layer_shifts))

    wp = np.zeros((C, c_pad), np.float32)
    wp[:, stack_rows(L)] = np.asarray(params["post"]["w"], np.float32)[:, :, 0, 0]
    bp = np.asarray(params["post"]["b"], np.float32).reshape(C, 1)

    return {"wd": jnp.asarray(wd), "bd": jnp.asarray(bd),
            "wp": jnp.asarray(wp), "bp": jnp.asarray(bp),
            "masks": jnp.asarray(masks), "shifts": tuple(shifts),
            "L": L, "inter": inter, "C": C, "c_pad": c_pad, "H": H, "W": W}


# ----------------------------------------------------------------------------
# RDB forward (single pallas_call; matches the PyTorch module semantics)
# ----------------------------------------------------------------------------
def rdb_fwd(packed, x):
    B, C, H, W = x.shape
    assert (C, H, W) == (packed["C"], packed["H"], packed["W"])
    L, inter, c_pad = packed["L"], packed["inter"], packed["c_pad"]
    M = H * W
    assert c_pad * M * 4 <= 8 * 1024 * 1024, "image too large for resident stack"

    x_flat = x.reshape(B, C, M)              # contiguous reshape; no transposes

    kernel = functools.partial(_rdb_kernel, n_layers=L, inter=inter,
                               shifts=packed["shifts"])

    flops = 2 * B * M * (sum((i * inter + C) * inter * 9 for i in range(L))
                         + (L * inter + C) * C)
    bytes_accessed = 4 * (2 * B * C * M + packed["wd"].size + packed["bd"].size
                          + packed["wp"].size + packed["bp"].size
                          + packed["masks"].size)

    out = pl.pallas_call(
        kernel,
        out_shape=jax.ShapeDtypeStruct((B, C, M), jnp.float32),
        grid=(B,),                                            # >=2 steps (v7x)
        in_specs=[
            pl.BlockSpec((None, C, M), lambda b: (b, 0, 0)),  # x: one image/step
            pl.BlockSpec(packed["masks"].shape, lambda b: (0, 0)),  # resident
            pl.BlockSpec(packed["wd"].shape, lambda b: (0, 0)),     # resident
            pl.BlockSpec(packed["bd"].shape, lambda b: (0, 0)),     # resident
            pl.BlockSpec(packed["wp"].shape, lambda b: (0, 0)),     # resident
            pl.BlockSpec(packed["bp"].shape, lambda b: (0, 0)),     # resident
        ],
        out_specs=pl.BlockSpec((None, C, M), lambda b: (b, 0, 0)),
        scratch_shapes=[pltpu.VMEM((c_pad, M), jnp.float32)],       # dense stack
        compiler_params=pltpu.CompilerParams(
            dimension_semantics=("parallel",),
            vmem_limit_bytes=32 * 1024 * 1024),
        cost_estimate=pl.CostEstimate(flops=int(flops), transcendentals=0,
                                      bytes_accessed=int(bytes_accessed)),
    )(x_flat, packed["masks"], packed["wd"], packed["bd"],
      packed["wp"], packed["bp"])
    return out.reshape(B, C, H, W)


# ----------------------------------------------------------------------------
# Pure-JAX reference (for the tolerance self-check)
# ----------------------------------------------------------------------------
def _conv_ref(x, w, b, dilation, padding):
    y = jax.lax.conv_general_dilated(
        x, w, window_strides=(1, 1),
        padding=((padding, padding), (padding, padding)),
        rhs_dilation=(dilation, dilation),
        dimension_numbers=("NCHW", "OIHW", "NCHW"),
        precision=jax.lax.Precision.HIGHEST)
    return y + b.reshape(1, -1, 1, 1)


def rdb_ref(params, x):
    t = x
    for lp, d in zip(params["layers"], params["d_list"]):
        _t = jax.nn.relu(_conv_ref(t, lp["w"], lp["b"], d, d))
        t = jnp.concatenate([_t, t], axis=1)
    y = _conv_ref(t, params["post"]["w"], params["post"]["b"], 1, 0)
    return y + x


# ----------------------------------------------------------------------------
if __name__ == "__main__":
    key = jax.random.PRNGKey(0)
    kp, kx = jax.random.split(key)
    B, C, H, W = 2, 4, 16, 16
    params = make_rdb(kp, in_channel=C, d_list=(1, 2, 1), inter_num=8)
    x = jax.random.normal(kx, (B, C, H, W), jnp.float32)

    packed = pack_rdb(params, H, W)
    fwd = jax.jit(functools.partial(rdb_fwd, packed))
    out = fwd(x)
    jax.block_until_ready(out)
    assert out.shape == x.shape and out.dtype == jnp.float32

    ref = jax.jit(functools.partial(rdb_ref, params))(x)
    err = float(jnp.max(jnp.abs(out - ref)))
    assert err < 2e-2, f"max abs error vs reference: {err}"
    print("KERNEL_OK")
</pallas_src>

<mosaic_0001>
module attributes {stable_mosaic.version = 11 : i64} {
  func.func @_rdb_kernel(%arg0: i32, %arg1: memref<1x4x256xf32, #tpu.memory_space<vmem>>, %arg2: memref<27x256xf32, #tpu.memory_space<vmem>>, %arg3: memref<216x32xf32, #tpu.memory_space<vmem>>, %arg4: memref<24x1xf32, #tpu.memory_space<vmem>>, %arg5: memref<4x32xf32, #tpu.memory_space<vmem>>, %arg6: memref<4x1xf32, #tpu.memory_space<vmem>>, %arg7: memref<1x4x256xf32, #tpu.memory_space<vmem>>, %arg8: memref<32x256xf32, #tpu.memory_space<vmem>>) attributes {dimension_semantics = [#tpu.dimension_semantics<parallel>], iteration_bounds = array<i64: 2>, scalar_prefetch = 0 : i64, scratch_operands = 1 : i64, tpu.core_type = #tpu.core_type<tc>, window_params = [{transform_indices = @transform_0, window_bounds = array<i64: 1, 4, 256>}, {pipeline_mode = #tpu.pipeline_mode<synchronous>, transform_indices = @transform_1, window_bounds = array<i64: 27, 256>}, {pipeline_mode = #tpu.pipeline_mode<synchronous>, transform_indices = @transform_2, window_bounds = array<i64: 216, 32>}, {pipeline_mode = #tpu.pipeline_mode<synchronous>, transform_indices = @transform_3, window_bounds = array<i64: 24, 1>}, {pipeline_mode = #tpu.pipeline_mode<synchronous>, transform_indices = @transform_4, window_bounds = array<i64: 4, 32>}, {pipeline_mode = #tpu.pipeline_mode<synchronous>, transform_indices = @transform_5, window_bounds = array<i64: 4, 1>}, {transform_indices = @transform_6, window_bounds = array<i64: 1, 4, 256>}]} {
    %c0 = arith.constant 0 : index
    %c0_0 = arith.constant 0 : index
    %c0_1 = arith.constant 0 : index
    %0 = vector.load %arg1[%c0, %c0_0, %c0_1] : memref<1x4x256xf32, #tpu.memory_space<vmem>>, vector<1x4x256xf32>
    %1 = vector.shape_cast %0 : vector<1x4x256xf32> to vector<4x256xf32>
    %cst = arith.constant 0.000000e+00 : f32
    %2 = vector.broadcast %cst : f32 to vector<32x256xf32>
    %c0_2 = arith.constant 0 : index
    %c0_3 = arith.constant 0 : index
    %3 = vector.load %arg8[%c0_2, %c0_3] : memref<32x256xf32, #tpu.memory_space<vmem>>, vector<32x256xf32>
    tpu.vector_store %arg8[%c0_2, %c0_3], %2 {strides = array<i32>} : memref<32x256xf32, #tpu.memory_space<vmem>>, vector<32x256xf32>,
    %c24 = arith.constant 24 : index
    %c0_4 = arith.constant 0 : index
    %4 = vector.load %arg8[%c24, %c0_4] : memref<32x256xf32, #tpu.memory_space<vmem>>, vector<4x256xf32>
    tpu.vector_store %arg8[%c24, %c0_4], %1 {strides = array<i32>} : memref<32x256xf32, #tpu.memory_space<vmem>>, vector<4x256xf32>,
    %c0_5 = arith.constant 0 : index
    %c0_6 = arith.constant 0 : index
    %5 = vector.load %arg8[%c0_5, %c0_6] : memref<32x256xf32, #tpu.memory_space<vmem>>, vector<32x256xf32>
    %cst_7 = arith.constant 0.000000e+00 : f32
    %6 = vector.broadcast %cst_7 : f32 to vector<8x256xf32>
    %c0_8 = arith.constant 0 : index
    %c0_9 = arith.constant 0 : index
    %7 = vector.load %arg3[%c0_8, %c0_9] : memref<216x32xf32, #tpu.memory_space<vmem>>, vector<8x32xf32>
    %c17_i32 = arith.constant 17 : i32
    %8 = tpu.dynamic_rotate %5 by %c17_i32 dim 1 : vector<32x256xf32>, i32 -> vector<32x256xf32>
    %c0_10 = arith.constant 0 : index
    %c0_11 = arith.constant 0 : index
    %9 = vector.load %arg2[%c0_10, %c0_11] : memref<27x256xf32, #tpu.memory_space<vmem>>, vector<1x256xf32>
    %10 = vector.broadcast %9 : vector<1x256xf32> to vector<32x256xf32>
    %11 = arith.mulf %8, %10 : vector<32x256xf32>
    %cst_12 = arith.constant dense<0.000000e+00> : vector<8x256xf32>
    %12 = tpu.matmul %7, %11, %cst_12 {dimension_numbers = #tpu.dot_dimension_numbers<[1], [0], [0], [1], [0, 0, 1, 1], [], []>} : vector<8x32xf32>, vector<32x256xf32>, vector<8x256xf32> -> vector<8x256xf32>
    %13 = arith.addf %6, %12 : vector<8x256xf32>
    %c8 = arith.constant 8 : index
    %c0_13 = arith.constant 0 : index
    %14 = vector.load %arg3[%c8, %c0_13] : memref<216x32xf32, #tpu.memory_space<vmem>>, vector<8x32xf32>
    %c16_i32 = arith.constant 16 : i32
    %15 = tpu.dynamic_rotate %5 by %c16_i32 dim 1 : vector<32x256xf32>, i32 -> vector<32x256xf32>
    %c1 = arith.constant 1 : index
    %c0_14 = arith.constant 0 : index
    %16 = vector.load %arg2[%c1, %c0_14] : memref<27x256xf32, #tpu.memory_space<vmem>>, vector<1x256xf32>
    %17 = vector.broadcast %16 : vector<1x256xf32> to vector<32x256xf32>
    %18 = arith.mulf %15, %17 : vector<32x256xf32>
    %cst_15 = arith.constant dense<0.000000e+00> : vector<8x256xf32>
    %19 = tpu.matmul %14, %18, %cst_15 {dimension_numbers = #tpu.dot_dimension_numbers<[1], [0], [0], [1], [0, 0, 1, 1], [], []>} : vector<8x32xf32>, vector<32x256xf32>, vector<8x256xf32> -> vector<8x256xf32>
    %20 = arith.addf %13, %19 : vector<8x256xf32>
    %c16 = arith.constant 16 : index
    %c0_16 = arith.constant 0 : index
    %21 = vector.load %arg3[%c16, %c0_16] : memref<216x32xf32, #tpu.memory_space<vmem>>, vector<8x32xf32>
    %c15_i32 = arith.constant 15 : i32
    %22 = tpu.dynamic_rotate %5 by %c15_i32 dim 1 : vector<32x256xf32>, i32 -> vector<32x256xf32>
    %c2 = arith.constant 2 : index
    %c0_17 = arith.constant 0 : index
    %23 = vector.load %arg2[%c2, %c0_17] : memref<27x256xf32, #tpu.memory_space<vmem>>, vector<1x256xf32>
    %24 = vector.broadcast %23 : vector<1x256xf32> to vector<32x256xf32>
    %25 = arith.mulf %22, %24 : vector<32x256xf32>
    %cst_18 = arith.constant dense<0.000000e+00> : vector<8x256xf32>
    %26 = tpu.matmul %21, %25, %cst_18 {dimension_numbers = #tpu.dot_dimension_numbers<[1], [0], [0], [1], [0, 0, 1, 1], [], []>} : vector<8x32xf32>, vector<32x256xf32>, vector<8x256xf32> -> vector<8x256xf32>
    %27 = arith.addf %20, %26 : vector<8x256xf32>
    %c24_19 = arith.constant 24 : index
    %c0_20 = arith.constant 0 : index
    %28 = vector.load %arg3[%c24_19, %c0_20] : memref<216x32xf32, #tpu.memory_space<vmem>>, vector<8x32xf32>
    %c1_i32 = arith.constant 1 : i32
    %29 = tpu.dynamic_rotate %5 by %c1_i32 dim 1 : vector<32x256xf32>, i32 -> vector<32x256xf32>
    %c3 = arith.constant 3 : index
    %c0_21 = arith.constant 0 : index
    %30 = vector.load %arg2[%c3, %c0_21] : memref<27x256xf32, #tpu.memory_space<vmem>>, vector<1x256xf32>
    %31 = vector.broadcast %30 : vector<1x256xf32> to vector<32x256xf32>
    %32 = arith.mulf %29, %31 : vector<32x256xf32>
    %cst_22 = arith.constant dense<0.000000e+00> : vector<8x256xf32>
    %33 = tpu.matmul %28, %32, %cst_22 {dimension_numbers = #tpu.dot_dimension_numbers<[1], [0], [0], [1], [0, 0, 1, 1], [], []>} : vector<8x32xf32>, vector<32x256xf32>, vector<8x256xf32> -> vector<8x256xf32>
    %34 = arith.addf %27, %33 : vector<8x256xf32>
    %c32 = arith.constant 32 : index
    %c0_23 = arith.constant 0 : index
    %35 = vector.load %arg3[%c32, %c0_23] : memref<216x32xf32, #tpu.memory_space<vmem>>, vector<8x32xf32>
    %cst_24 = arith.constant dense<0.000000e+00> : vector<8x256xf32>
    %36 = tpu.matmul %35, %5, %cst_24 {dimension_numbers = #tpu.dot_dimension_numbers<[1], [0], [0], [1], [0, 0, 1, 1], [], []>} : vector<8x32xf32>, vector<32x256xf32>, vector<8x256xf32> -> vector<8x256xf32>
    %37 = arith.addf %34, %36 : vector<8x256xf32>
    %c40 = arith.constant 40 : index
    %c0_25 = arith.constant 0 : index
    %38 = vector.load %arg3[%c40, %c0_25] : memref<216x32xf32, #tpu.memory_space<vmem>>, vector<8x32xf32>
    %c255_i32 = arith.constant 255 : i32
    %39 = tpu.dynamic_rotate %5 by %c255_i32 dim 1 : vector<32x256xf32>, i32 -> vector<32x256xf32>
    %c5 = arith.constant 5 : index
    %c0_26 = arith.constant 0 : index
    %40 = vector.load %arg2[%c5, %c0_26] : memref<27x256xf32, #tpu.memory_space<vmem>>, vector<1x256xf32>
    %41 = vector.broadcast %40 : vector<1x256xf32> to vector<32x256xf32>
    %42 = arith.mulf %39, %41 : vector<32x256xf32>
    %cst_27 = arith.constant dense<0.000000e+00> : vector<8x256xf32>
    %43 = tpu.matmul %38, %42, %cst_27 {dimension_numbers = #tpu.dot_dimension_numbers<[1], [0], [0], [1], [0, 0, 1, 1], [], []>} : vector<8x32xf32>, vector<32x256xf32>, vector<8x256xf32> -> vector<8x256xf32>
    %44 = arith.addf %37, %43 : vector<8x256xf32>
    %c48 = arith.constant 48 : index
    %c0_28 = arith.constant 0 : index
    %45 = vector.load %arg3[%c48, %c0_28] : memref<216x32xf32, #tpu.memory_space<vmem>>, vector<8x32xf32>
    %c241_i32 = arith.constant 241 : i32
    %46 = tpu.dynamic_rotate %5 by %c241_i32 dim 1 : vector<32x256xf32>, i32 -> vector<32x256xf32>
    %c6 = arith.constant 6 : index
    %c0_29 = arith.constant 0 : index
    %47 = vector.load %arg2[%c6, %c0_29] : memref<27x256xf32, #tpu.memory_space<vmem>>, vector<1x256xf32>
    %48 = vector.broadcast %47 : vector<1x256xf32> to vector<32x256xf32>
    %49 = arith.mulf %46, %48 : vector<32x256xf32>
    %cst_30 = arith.constant dense<0.000000e+00> : vector<8x256xf32>
    %50 = tpu.matmul %45, %49, %cst_30 {dimension_numbers = #tpu.dot_dimension_numbers<[1], [0], [0], [1], [0, 0, 1, 1], [], []>} : vector<8x32xf32>, vector<32x256xf32>, vector<8x256xf32> -> vector<8x256xf32>
    %51 = arith.addf %44, %50 : vector<8x256xf32>
    %c56 = arith.constant 56 : index
    %c0_31 = arith.constant 0 : index
    %52 = vector.load %arg3[%c56, %c0_31] : memref<216x32xf32, #tpu.memory_space<vmem>>, vector<8x32xf32>
    %c240_i32 = arith.constant 240 : i32
    %53 = tpu.dynamic_rotate %5 by %c240_i32 dim 1 : vector<32x256xf32>, i32 -> vector<32x256xf32>
    %c7 = arith.constant 7 : index
    %c0_32 = arith.constant 0 : index
    %54 = vector.load %arg2[%c7, %c0_32] : memref<27x256xf32, #tpu.memory_space<vmem>>, vector<1x256xf32>
    %55 = vector.broadcast %54 : vector<1x256xf32> to vector<32x256xf32>
    %56 = arith.mulf %53, %55 : vector<32x256xf32>
    %cst_33 = arith.constant dense<0.000000e+00> : vector<8x256xf32>
    %57 = tpu.matmul %52, %56, %cst_33 {dimension_numbers = #tpu.dot_dimension_numbers<[1], [0], [0], [1], [0, 0, 1, 1], [], []>} : vector<8x32xf32>, vector<32x256xf32>, vector<8x256xf32> -> vector<8x256xf32>
    %58 = arith.addf %51, %57 : vector<8x256xf32>
    %c64 = arith.constant 64 : index
    %c0_34 = arith.constant 0 : index
    %59 = vector.load %arg3[%c64, %c0_34] : memref<216x32xf32, #tpu.memory_space<vmem>>, vector<8x32xf32>
    %c239_i32 = arith.constant 239 : i32
    %60 = tpu.dynamic_rotate %5 by %c239_i32 dim 1 : vector<32x256xf32>, i32 -> vector<32x256xf32>
    %c8_35 = arith.constant 8 : index
    %c0_36 = arith.constant 0 : index
    %61 = vector.load %arg2[%c8_35, %c0_36] : memref<27x256xf32, #tpu.memory_space<vmem>>, vector<1x256xf32>
    %62 = vector.broadcast %61 : vector<1x256xf32> to vector<32x256xf32>
    %63 = arith.mulf %60, %62 : vector<32x256xf32>
    %cst_37 = arith.constant dense<0.000000e+00> : vector<8x256xf32>
    %64 = tpu.matmul %59, %63, %cst_37 {dimension_numbers = #tpu.dot_dimension_numbers<[1], [0], [0], [1], [0, 0, 1, 1], [], []>} : vector<8x32xf32>, vector<32x256xf32>, vector<8x256xf32> -> vector<8x256xf32>
    %65 = arith.addf %58, %64 : vector<8x256xf32>
    %c0_38 = arith.constant 0 : index
    %c0_39 = arith.constant 0 : index
    %66 = vector.load %arg4[%c0_38, %c0_39] : memref<24x1xf32, #tpu.memory_space<vmem>>, vector<8x1xf32>
    %67 = vector.broadcast %66 : vector<8x1xf32> to vector<8x256xf32>
    %68 = arith.addf %65, %67 : vector<8x256xf32>
    %cst_40 = arith.constant 0.000000e+00 : f32
    %69 = vector.broadcast %cst_40 : f32 to vector<8x256xf32>
    %70 = arith.maximumf %68, %69 : vector<8x256xf32>
    %c0_41 = arith.constant 0 : index
    %c0_42 = arith.constant 0 : index
    %71 = vector.load %arg8[%c0_41, %c0_42] : memref<32x256xf32, #tpu.memory_space<vmem>>, vector<8x256xf32>
    tpu.vector_store %arg8[%c0_41, %c0_42], %70 {strides = array<i32>} : memref<32x256xf32, #tpu.memory_space<vmem>>, vector<8x256xf32>,
    %c0_43 = arith.constant 0 : index
    %c0_44 = arith.constant 0 : index
    %72 = vector.load %arg8[%c0_43, %c0_44] : memref<32x256xf32, #tpu.memory_space<vmem>>, vector<32x256xf32>
    %cst_45 = arith.constant 0.000000e+00 : f32
    %73 = vector.broadcast %cst_45 : f32 to vector<8x256xf32>
    %c72 = arith.constant 72 : index
    %c0_46 = arith.constant 0 : index
    %74 = vector.load %arg3[%c72, %c0_46] : memref<216x32xf32, #tpu.memory_space<vmem>>, vector<8x32xf32>
    %c34_i32 = arith.constant 34 : i32
    %75 = tpu.dynamic_rotate %72 by %c34_i32 dim 1 : vector<32x256xf32>, i32 -> vector<32x256xf32>
    %c9 = arith.constant 9 : index
    %c0_47 = arith.constant 0 : index
    %76 = vector.load %arg2[%c9, %c0_47] : memref<27x256xf32, #tpu.memory_space<vmem>>, vector<1x256xf32>
    %77 = vector.broadcast %76 : vector<1x256xf32> to vector<32x256xf32>
    %78 = arith.mulf %75, %77 : vector<32x256xf32>
    %cst_48 = arith.constant dense<0.000000e+00> : vector<8x256xf32>
    %79 = tpu.matmul %74, %78, %cst_48 {dimension_numbers = #tpu.dot_dimension_numbers<[1], [0], [0], [1], [0, 0, 1, 1], [], []>} : vector<8x32xf32>, vector<32x256xf32>, vector<8x256xf32> -> vector<8x256xf32>
    %80 = arith.addf %73, %79 : vector<8x256xf32>
    %c80 = arith.constant 80 : index
    %c0_49 = arith.constant 0 : index
    %81 = vector.load %arg3[%c80, %c0_49] : memref<216x32xf32, #tpu.memory_space<vmem>>, vector<8x32xf32>
    %c32_i32 = arith.constant 32 : i32
    %82 = tpu.dynamic_rotate %72 by %c32_i32 dim 1 : vector<32x256xf32>, i32 -> vector<32x256xf32>
    %c10 = arith.constant 10 : index
    %c0_50 = arith.constant 0 : index
    %83 = vector.load %arg2[%c10, %c0_50] : memref<27x256xf32, #tpu.memory_space<vmem>>, vector<1x256xf32>
    %84 = vector.broadcast %83 : vector<1x256xf32> to vector<32x256xf32>
    %85 = arith.mulf %82, %84 : vector<32x256xf32>
    %cst_51 = arith.constant dense<0.000000e+00> : vector<8x256xf32>
    %86 = tpu.matmul %81, %85, %cst_51 {dimension_numbers = #tpu.dot_dimension_numbers<[1], [0], [0], [1], [0, 0, 1, 1], [], []>} : vector<8x32xf32>, vector<32x256xf32>, vector<8x256xf32> -> vector<8x256xf32>
    %87 = arith.addf %80, %86 : vector<8x256xf32>
    %c88 = arith.constant 88 : index
    %c0_52 = arith.constant 0 : index
    %88 = vector.load %arg3[%c88, %c0_52] : memref<216x32xf32, #tpu.memory_space<vmem>>, vector<8x32xf32>
    %c30_i32 = arith.constant 30 : i32
    %89 = tpu.dynamic_rotate %72 by %c30_i32 dim 1 : vector<32x256xf32>, i32 -> vector<32x256xf32>
    %c11 = arith.constant 11 : index
    %c0_53 = arith.constant 0 : index
    %90 = vector.load %arg2[%c11, %c0_53] : memref<27x256xf32, #tpu.memory_space<vmem>>, vector<1x256xf32>
    %91 = vector.broadcast %90 : vector<1x256xf32> to vector<32x256xf32>
    %92 = arith.mulf %89, %91 : vector<32x256xf32>
    %cst_54 = arith.constant dense<0.000000e+00> : vector<8x256xf32>
    %93 = tpu.matmul %88, %92, %cst_54 {dimension_numbers = #tpu.dot_dimension_numbers<[1], [0], [0], [1], [0, 0, 1, 1], [], []>} : vector<8x32xf32>, vector<32x256xf32>, vector<8x256xf32> -> vector<8x256xf32>
    %94 = arith.addf %87, %93 : vector<8x256xf32>
    %c96 = arith.constant 96 : index
    %c0_55 = arith.constant 0 : index
    %95 = vector.load %arg3[%c96, %c0_55] : memref<216x32xf32, #tpu.memory_space<vmem>>, vector<8x32xf32>
    %c2_i32 = arith.constant 2 : i32
    %96 = tpu.dynamic_rotate %72 by %c2_i32 dim 1 : vector<32x256xf32>, i32 -> vector<32x256xf32>
    %c12 = arith.constant 12 : index
    %c0_56 = arith.constant 0 : index
    %97 = vector.load %arg2[%c12, %c0_56] : memref<27x256xf32, #tpu.memory_space<vmem>>, vector<1x256xf32>
    %98 = vector.broadcast %97 : vector<1x256xf32> to vector<32x256xf32>
    %99 = arith.mulf %96, %98 : vector<32x256xf32>
    %cst_57 = arith.constant dense<0.000000e+00> : vector<8x256xf32>
    %100 = tpu.matmul %95, %99, %cst_57 {dimension_numbers = #tpu.dot_dimension_numbers<[1], [0], [0], [1], [0, 0, 1, 1], [], []>} : vector<8x32xf32>, vector<32x256xf32>, vector<8x256xf32> -> vector<8x256xf32>
    %101 = arith.addf %94, %100 : vector<8x256xf32>
    %c104 = arith.constant 104 : index
    %c0_58 = arith.constant 0 : index
    %102 = vector.load %arg3[%c104, %c0_58] : memref<216x32xf32, #tpu.memory_space<vmem>>, vector<8x32xf32>
    %cst_59 = arith.constant dense<0.000000e+00> : vector<8x256xf32>
    %103 = tpu.matmul %102, %72, %cst_59 {dimension_numbers = #tpu.dot_dimension_numbers<[1], [0], [0], [1], [0, 0, 1, 1], [], []>} : vector<8x32xf32>, vector<32x256xf32>, vector<8x256xf32> -> vector<8x256xf32>
    %104 = arith.addf %101, %103 : vector<8x256xf32>
    %c112 = arith.constant 112 : index
    %c0_60 = arith.constant 0 : index
    %105 = vector.load %arg3[%c112, %c0_60] : memref<216x32xf32, #tpu.memory_space<vmem>>, vector<8x32xf32>
    %c254_i32 = arith.constant 254 : i32
    %106 = tpu.dynamic_rotate %72 by %c254_i32 dim 1 : vector<32x256xf32>, i32 -> vector<32x256xf32>
    %c14 = arith.constant 14 : index
    %c0_61 = arith.constant 0 : index
    %107 = vector.load %arg2[%c14, %c0_61] : memref<27x256xf32, #tpu.memory_space<vmem>>, vector<1x256xf32>
    %108 = vector.broadcast %107 : vector<1x256xf32> to vector<32x256xf32>
    %109 = arith.mulf %106, %108 : vector<32x256xf32>
    %cst_62 = arith.constant dense<0.000000e+00> : vector<8x256xf32>
    %110 = tpu.matmul %105, %109, %cst_62 {dimension_numbers = #tpu.dot_dimension_numbers<[1], [0], [0], [1], [0, 0, 1, 1], [], []>} : vector<8x32xf32>, vector<32x256xf32>, vector<8x256xf32> -> vector<8x256xf32>
    %111 = arith.addf %104, %110 : vector<8x256xf32>
    %c120 = arith.constant 120 : index
    %c0_63 = arith.constant 0 : index
    %112 = vector.load %arg3[%c120, %c0_63] : memref<216x32xf32, #tpu.memory_space<vmem>>, vector<8x32xf32>
    %c226_i32 = arith.constant 226 : i32
    %113 = tpu.dynamic_rotate %72 by %c226_i32 dim 1 : vector<32x256xf32>, i32 -> vector<32x256xf32>
    %c15 = arith.constant 15 : index
    %c0_64 = arith.constant 0 : index
    %114 = vector.load %arg2[%c15, %c0_64] : memref<27x256xf32, #tpu.memory_space<vmem>>, vector<1x256xf32>
    %115 = vector.broadcast %114 : vector<1x256xf32> to vector<32x256xf32>
    %116 = arith.mulf %113, %115 : vector<32x256xf32>
    %cst_65 = arith.constant dense<0.000000e+00> : vector<8x256xf32>
    %117 = tpu.matmul %112, %116, %cst_65 {dimension_numbers = #tpu.dot_dimension_numbers<[1], [0], [0], [1], [0, 0, 1, 1], [], []>} : vector<8x32xf32>, vector<32x256xf32>, vector<8x256xf32> -> vector<8x256xf32>
    %118 = arith.addf %111, %117 : vector<8x256xf32>
    %c128 = arith.constant 128 : index
    %c0_66 = arith.constant 0 : index
    %119 = vector.load %arg3[%c128, %c0_66] : memref<216x32xf32, #tpu.memory_space<vmem>>, vector<8x32xf32>
    %c224_i32 = arith.constant 224 : i32
    %120 = tpu.dynamic_rotate %72 by %c224_i32 dim 1 : vector<32x256xf32>, i32 -> vector<32x256xf32>
    %c16_67 = arith.constant 16 : index
    %c0_68 = arith.constant 0 : index
    %121 = vector.load %arg2[%c16_67, %c0_68] : memref<27x256xf32, #tpu.memory_space<vmem>>, vector<1x256xf32>
    %122 = vector.broadcast %121 : vector<1x256xf32> to vector<32x256xf32>
    %123 = arith.mulf %120, %122 : vector<32x256xf32>
    %cst_69 = arith.constant dense<0.000000e+00> : vector<8x256xf32>
    %124 = tpu.matmul %119, %123, %cst_69 {dimension_numbers = #tpu.dot_dimension_numbers<[1], [0], [0], [1], [0, 0, 1, 1], [], []>} : vector<8x32xf32>, vector<32x256xf32>, vector<8x256xf32> -> vector<8x256xf32>
    %125 = arith.addf %118, %124 : vector<8x256xf32>
    %c136 = arith.constant 136 : index
    %c0_70 = arith.constant 0 : index
    %126 = vector.load %arg3[%c136, %c0_70] : memref<216x32xf32, #tpu.memory_space<vmem>>, vector<8x32xf32>
    %c222_i32 = arith.constant 222 : i32
    %127 = tpu.dynamic_rotate %72 by %c222_i32 dim 1 : vector<32x256xf32>, i32 -> vector<32x256xf32>
    %c17 = arith.constant 17 : index
    %c0_71 = arith.constant 0 : index
    %128 = vector.load %arg2[%c17, %c0_71] : memref<27x256xf32, #tpu.memory_space<vmem>>, vector<1x256xf32>
    %129 = vector.broadcast %128 : vector<1x256xf32> to vector<32x256xf32>
    %130 = arith.mulf %127, %129 : vector<32x256xf32>
    %cst_72 = arith.constant dense<0.000000e+00> : vector<8x256xf32>
    %131 = tpu.matmul %126, %130, %cst_72 {dimension_numbers = #tpu.dot_dimension_numbers<[1], [0], [0], [1], [0, 0, 1, 1], [], []>} : vector<8x32xf32>, vector<32x256xf32>, vector<8x256xf32> -> vector<8x256xf32>
    %132 = arith.addf %125, %131 : vector<8x256xf32>
    %c8_73 = arith.constant 8 : index
    %c0_74 = arith.constant 0 : index
    %133 = vector.load %arg4[%c8_73, %c0_74] : memref<24x1xf32, #tpu.memory_space<vmem>>, vector<8x1xf32>
    %134 = vector.broadcast %133 : vector<8x1xf32> to vector<8x256xf32>
    %135 = arith.addf %132, %134 : vector<8x256xf32>
    %cst_75 = arith.constant 0.000000e+00 : f32
    %136 = vector.broadcast %cst_75 : f32 to vector<8x256xf32>
    %137 = arith.maximumf %135, %136 : vector<8x256xf32>
    %c8_76 = arith.constant 8 : index
    %c0_77 = arith.constant 0 : index
    %138 = vector.load %arg8[%c8_76, %c0_77] : memref<32x256xf32, #tpu.memory_space<vmem>>, vector<8x256xf32>
    tpu.vector_store %arg8[%c8_76, %c0_77], %137 {strides = array<i32>} : memref<32x256xf32, #tpu.memory_space<vmem>>, vector<8x256xf32>,
    %c0_78 = arith.constant 0 : index
    %c0_79 = arith.constant 0 : index
    %139 = vector.load %arg8[%c0_78, %c0_79] : memref<32x256xf32, #tpu.memory_space<vmem>>, vector<32x256xf32>
    %cst_80 = arith.constant 0.000000e+00 : f32
    %140 = vector.broadcast %cst_80 : f32 to vector<8x256xf32>
    %c144 = arith.constant 144 : index
    %c0_81 = arith.constant 0 : index
    %141 = vector.load %arg3[%c144, %c0_81] : memref<216x32xf32, #tpu.memory_space<vmem>>, vector<8x32xf32>
    %c17_i32_82 = arith.constant 17 : i32
    %142 = tpu.dynamic_rotate %139 by %c17_i32_82 dim 1 : vector<32x256xf32>, i32 -> vector<32x256xf32>
    %c18 = arith.constant 18 : index
    %c0_83 = arith.constant 0 : index
    %143 = vector.load %arg2[%c18, %c0_83] : memref<27x256xf32, #tpu.memory_space<vmem>>, vector<1x256xf32>
    %144 = vector.broadcast %143 : vector<1x256xf32> to vector<32x256xf32>
    %145 = arith.mulf %142, %144 : vector<32x256xf32>
    %cst_84 = arith.constant dense<0.000000e+00> : vector<8x256xf32>
    %146 = tpu.matmul %141, %145, %cst_84 {dimension_numbers = #tpu.dot_dimension_numbers<[1], [0], [0], [1], [0, 0, 1, 1], [], []>} : vector<8x32xf32>, vector<32x256xf32>, vector<8x256xf32> -> vector<8x256xf32>
    %147 = arith.addf %140, %146 : vector<8x256xf32>
    %c152 = arith.constant 152 : index
    %c0_85 = arith.constant 0 : index
    %148 = vector.load %arg3[%c152, %c0_85] : memref<216x32xf32, #tpu.memory_space<vmem>>, vector<8x32xf32>
    %c16_i32_86 = arith.constant 16 : i32
    %149 = tpu.dynamic_rotate %139 by %c16_i32_86 dim 1 : vector<32x256xf32>, i32 -> vector<32x256xf32>
    %c19 = arith.constant 19 : index
    %c0_87 = arith.constant 0 : index
    %150 = vector.load %arg2[%c19, %c0_87] : memref<27x256xf32, #tpu.memory_space<vmem>>, vector<1x256xf32>
    %151 = vector.broadcast %150 : vector<1x256xf32> to vector<32x256xf32>
    %152 = arith.mulf %149, %151 : vector<32x256xf32>
    %cst_88 = arith.constant dense<0.000000e+00> : vector<8x256xf32>
    %153 = tpu.matmul %148, %152, %cst_88 {dimension_numbers = #tpu.dot_dimension_numbers<[1], [0], [0], [1], [0, 0, 1, 1], [], []>} : vector<8x32xf32>, vector<32x256xf32>, vector<8x256xf32> -> vector<8x256xf32>
    %154 = arith.addf %147, %153 : vector<8x256xf32>
    %c160 = arith.constant 160 : index
    %c0_89 = arith.constant 0 : index
    %155 = vector.load %arg3[%c160, %c0_89] : memref<216x32xf32, #tpu.memory_space<vmem>>, vector<8x32xf32>
    %c15_i32_90 = arith.constant 15 : i32
    %156 = tpu.dynamic_rotate %139 by %c15_i32_90 dim 1 : vector<32x256xf32>, i32 -> vector<32x256xf32>
    %c20 = arith.constant 20 : index
    %c0_91 = arith.constant 0 : index
    %157 = vector.load %arg2[%c20, %c0_91] : memref<27x256xf32, #tpu.memory_space<vmem>>, vector<1x256xf32>
    %158 = vector.broadcast %157 : vector<1x256xf32> to vector<32x256xf32>
    %159 = arith.mulf %156, %158 : vector<32x256xf32>
    %cst_92 = arith.constant dense<0.000000e+00> : vector<8x256xf32>
    %160 = tpu.matmul %155, %159, %cst_92 {dimension_numbers = #tpu.dot_dimension_numbers<[1], [0], [0], [1], [0, 0, 1, 1], [], []>} : vector<8x32xf32>, vector<32x256xf32>, vector<8x256xf32> -> vector<8x256xf32>
    %161 = arith.addf %154, %160 : vector<8x256xf32>
    %c168 = arith.constant 168 : index
    %c0_93 = arith.constant 0 : index
    %162 = vector.load %arg3[%c168, %c0_93] : memref<216x32xf32, #tpu.memory_space<vmem>>, vector<8x32xf32>
    %c1_i32_94 = arith.constant 1 : i32
    %163 = tpu.dynamic_rotate %139 by %c1_i32_94 dim 1 : vector<32x256xf32>, i32 -> vector<32x256xf32>
    %c21 = arith.constant 21 : index
    %c0_95 = arith.constant 0 : index
    %164 = vector.load %arg2[%c21, %c0_95] : memref<27x256xf32, #tpu.memory_space<vmem>>, vector<1x256xf32>
    %165 = vector.broadcast %164 : vector<1x256xf32> to vector<32x256xf32>
    %166 = arith.mulf %163, %165 : vector<32x256xf32>
    %cst_96 = arith.constant dense<0.000000e+00> : vector<8x256xf32>
    %167 = tpu.matmul %162, %166, %cst_96 {dimension_numbers = #tpu.dot_dimension_numbers<[1], [0], [0], [1], [0, 0, 1, 1], [], []>} : vector<8x32xf32>, vector<32x256xf32>, vector<8x256xf32> -> vector<8x256xf32>
    %168 = arith.addf %161, %167 : vector<8x256xf32>
    %c176 = arith.constant 176 : index
    %c0_97 = arith.constant 0 : index
    %169 = vector.load %arg3[%c176, %c0_97] : memref<216x32xf32, #tpu.memory_space<vmem>>, vector<8x32xf32>
    %cst_98 = arith.constant dense<0.000000e+00> : vector<8x256xf32>
    %170 = tpu.matmul %169, %139, %cst_98 {dimension_numbers = #tpu.dot_dimension_numbers<[1], [0], [0], [1], [0, 0, 1, 1], [], []>} : vector<8x32xf32>, vector<32x256xf32>, vector<8x256xf32> -> vector<8x256xf32>
    %171 = arith.addf %168, %170 : vector<8x256xf32>
    %c184 = arith.constant 184 : index
    %c0_99 = arith.constant 0 : index
    %172 = vector.load %arg3[%c184, %c0_99] : memref<216x32xf32, #tpu.memory_space<vmem>>, vector<8x32xf32>
    %c255_i32_100 = arith.constant 255 : i32
    %173 = tpu.dynamic_rotate %139 by %c255_i32_100 dim 1 : vector<32x256xf32>, i32 -> vector<32x256xf32>
    %c23 = arith.constant 23 : index
    %c0_101 = arith.constant 0 : index
    %174 = vector.load %arg2[%c23, %c0_101] : memref<27x256xf32, #tpu.memory_space<vmem>>, vector<1x256xf32>
    %175 = vector.broadcast %174 : vector<1x256xf32> to vector<32x256xf32>
    %176 = arith.mulf %173, %175 : vector<32x256xf32>
    %cst_102 = arith.constant dense<0.000000e+00> : vector<8x256xf32>
    %177 = tpu.matmul %172, %176, %cst_102 {dimension_numbers = #tpu.dot_dimension_numbers<[1], [0], [0], [1], [0, 0, 1, 1], [], []>} : vector<8x32xf32>, vector<32x256xf32>, vector<8x256xf32> -> vector<8x256xf32>
    %178 = arith.addf %171, %177 : vector<8x256xf32>
    %c192 = arith.constant 192 : index
    %c0_103 = arith.constant 0 : index
    %179 = vector.load %arg3[%c192, %c0_103] : memref<216x32xf32, #tpu.memory_space<vmem>>, vector<8x32xf32>
    %c241_i32_104 = arith.constant 241 : i32
    %180 = tpu.dynamic_rotate %139 by %c241_i32_104 dim 1 : vector<32x256xf32>, i32 -> vector<32x256xf32>
    %c24_105 = arith.constant 24 : index
    %c0_106 = arith.constant 0 : index
    %181 = vector.load %arg2[%c24_105, %c0_106] : memref<27x256xf32, #tpu.memory_space<vmem>>, vector<1x256xf32>
    %182 = vector.broadcast %181 : vector<1x256xf32> to vector<32x256xf32>
    %183 = arith.mulf %180, %182 : vector<32x256xf32>
    %cst_107 = arith.constant dense<0.000000e+00> : vector<8x256xf32>
    %184 = tpu.matmul %179, %183, %cst_107 {dimension_numbers = #tpu.dot_dimension_numbers<[1], [0], [0], [1], [0, 0, 1, 1], [], []>} : vector<8x32xf32>, vector<32x256xf32>, vector<8x256xf32> -> vector<8x256xf32>
    %185 = arith.addf %178, %184 : vector<8x256xf32>
    %c200 = arith.constant 200 : index
    %c0_108 = arith.constant 0 : index
    %186 = vector.load %arg3[%c200, %c0_108] : memref<216x32xf32, #tpu.memory_space<vmem>>, vector<8x32xf32>
    %c240_i32_109 = arith.constant 240 : i32
    %187 = tpu.dynamic_rotate %139 by %c240_i32_109 dim 1 : vector<32x256xf32>, i32 -> vector<32x256xf32>
    %c25 = arith.constant 25 : index
    %c0_110 = arith.constant 0 : index
    %188 = vector.load %arg2[%c25, %c0_110] : memref<27x256xf32, #tpu.memory_space<vmem>>, vector<1x256xf32>
    %189 = vector.broadcast %188 : vector<1x256xf32> to vector<32x256xf32>
    %190 = arith.mulf %187, %189 : vector<32x256xf32>
    %cst_111 = arith.constant dense<0.000000e+00> : vector<8x256xf32>
    %191 = tpu.matmul %186, %190, %cst_111 {dimension_numbers = #tpu.dot_dimension_numbers<[1], [0], [0], [1], [0, 0, 1, 1], [], []>} : vector<8x32xf32>, vector<32x256xf32>, vector<8x256xf32> -> vector<8x256xf32>
    %192 = arith.addf %185, %191 : vector<8x256xf32>
    %c208 = arith.constant 208 : index
    %c0_112 = arith.constant 0 : index
    %193 = vector.load %arg3[%c208, %c0_112] : memref<216x32xf32, #tpu.memory_space<vmem>>, vector<8x32xf32>
    %c239_i32_113 = arith.constant 239 : i32
    %194 = tpu.dynamic_rotate %139 by %c239_i32_113 dim 1 : vector<32x256xf32>, i32 -> vector<32x256xf32>
    %c26 = arith.constant 26 : index
    %c0_114 = arith.constant 0 : index
    %195 = vector.load %arg2[%c26, %c0_114] : memref<27x256xf32, #tpu.memory_space<vmem>>, vector<1x256xf32>
    %196 = vector.broadcast %195 : vector<1x256xf32> to vector<32x256xf32>
    %197 = arith.mulf %194, %196 : vector<32x256xf32>
    %cst_115 = arith.constant dense<0.000000e+00> : vector<8x256xf32>
    %198 = tpu.matmul %193, %197, %cst_115 {dimension_numbers = #tpu.dot_dimension_numbers<[1], [0], [0], [1], [0, 0, 1, 1], [], []>} : vector<8x32xf32>, vector<32x256xf32>, vector<8x256xf32> -> vector<8x256xf32>
    %199 = arith.addf %192, %198 : vector<8x256xf32>
    %c16_116 = arith.constant 16 : index
    %c0_117 = arith.constant 0 : index
    %200 = vector.load %arg4[%c16_116, %c0_117] : memref<24x1xf32, #tpu.memory_space<vmem>>, vector<8x1xf32>
    %201 = vector.broadcast %200 : vector<8x1xf32> to vector<8x256xf32>
    %202 = arith.addf %199, %201 : vector<8x256xf32>
    %cst_118 = arith.constant 0.000000e+00 : f32
    %203 = vector.broadcast %cst_118 : f32 to vector<8x256xf32>
    %204 = arith.maximumf %202, %203 : vector<8x256xf32>
    %c16_119 = arith.constant 16 : index
    %c0_120 = arith.constant 0 : index
    %205 = vector.load %arg8[%c16_119, %c0_120] : memref<32x256xf32, #tpu.memory_space<vmem>>, vector<8x256xf32>
    tpu.vector_store %arg8[%c16_119, %c0_120], %204 {strides = array<i32>} : memref<32x256xf32, #tpu.memory_space<vmem>>, vector<8x256xf32>,
    %c0_121 = arith.constant 0 : index
    %c0_122 = arith.constant 0 : index
    %206 = vector.load %arg5[%c0_121, %c0_122] : memref<4x32xf32, #tpu.memory_space<vmem>>, vector<4x32xf32>
    %c0_123 = arith.constant 0 : index
    %c0_124 = arith.constant 0 : index
    %207 = vector.load %arg8[%c0_123, %c0_124] : memref<32x256xf32, #tpu.memory_space<vmem>>, vector<32x256xf32>
    %cst_125 = arith.constant dense<0.000000e+00> : vector<4x256xf32>
    %208 = tpu.matmul %206, %207, %cst_125 {dimension_numbers = #tpu.dot_dimension_numbers<[1], [0], [0], [1], [0, 0, 1, 1], [], []>} : vector<4x32xf32>, vector<32x256xf32>, vector<4x256xf32> -> vector<4x256xf32>
    %c0_126 = arith.constant 0 : index
    %c0_127 = arith.constant 0 : index
    %209 = vector.load %arg6[%c0_126, %c0_127] : memref<4x1xf32, #tpu.memory_space<vmem>>, vector<4x1xf32>
    %210 = vector.broadcast %209 : vector<4x1xf32> to vector<4x256xf32>
    %211 = arith.addf %208, %210 : vector<4x256xf32>
    %212 = arith.addf %211, %1 : vector<4x256xf32>
    %c0_128 = arith.constant 0 : index
    %c0_129 = arith.constant 0 : index
    %c0_130 = arith.constant 0 : index
    %213 = vector.load %arg7[%c0_128, %c0_129, %c0_130] : memref<1x4x256xf32, #tpu.memory_space<vmem>>, vector<1x4x256xf32>
    %214 = vector.shape_cast %213 : vector<1x4x256xf32> to vector<4x256xf32>
    %215 = vector.shape_cast %212 : vector<4x256xf32> to vector<1x4x256xf32>
    tpu.vector_store %arg7[%c0_128, %c0_129, %c0_130], %215 {strides = array<i32>} : memref<1x4x256xf32, #tpu.memory_space<vmem>>, vector<1x4x256xf32>,
    return
  }
  func.func @transform_0(%arg0: i32) -> (i32, i32, i32) {
    %c0_i32 = arith.constant 0 : i32
    %c0_i32_0 = arith.constant 0 : i32
    %c0_i32_1 = arith.constant 0 : i32
    return %arg0, %c0_i32, %c0_i32_0 : i32, i32, i32
  }
  func.func @transform_1(%arg0: i32) -> (i32, i32) {
    %c0_i32 = arith.constant 0 : i32
    %c0_i32_0 = arith.constant 0 : i32
    %c0_i32_1 = arith.constant 0 : i32
    return %c0_i32, %c0_i32_0 : i32, i32
  }
  func.func @transform_2(%arg0: i32) -> (i32, i32) {
    %c0_i32 = arith.constant 0 : i32
    %c0_i32_0 = arith.constant 0 : i32
    %c0_i32_1 = arith.constant 0 : i32
    return %c0_i32, %c0_i32_0 : i32, i32
  }
  func.func @transform_3(%arg0: i32) -> (i32, i32) {
    %c0_i32 = arith.constant 0 : i32
    %c0_i32_0 = arith.constant 0 : i32
    %c0_i32_1 = arith.constant 0 : i32
    return %c0_i32, %c0_i32_0 : i32, i32
  }
  func.func @transform_4(%arg0: i32) -> (i32, i32) {
    %c0_i32 = arith.constant 0 : i32
    %c0_i32_0 = arith.constant 0 : i32
    %c0_i32_1 = arith.constant 0 : i32
    return %c0_i32, %c0_i32_0 : i32, i32
  }
  func.func @transform_5(%arg0: i32) -> (i32, i32) {
    %c0_i32 = arith.constant 0 : i32
    %c0_i32_0 = arith.constant 0 : i32
    %c0_i32_1 = arith.constant 0 : i32
    return %c0_i32, %c0_i32_0 : i32, i32
  }
  func.func @transform_6(%arg0: i32) -> (i32, i32, i32) {
    %c0_i32 = arith.constant 0 : i32
    %c0_i32_0 = arith.constant 0 : i32
    %c0_i32_1 = arith.constant 0 : i32
    return %arg0, %c0_i32, %c0_i32_0 : i32, i32, i32
  }
}

</mosaic_0001>

<llo_original>
// kernel: rdb_fwd.1
$region0: #{rdb_fwd.1}
  #allocation0 [shape = 'u32[]', space=smem, size = 0x4, offset = 0x4, fixed_abs, tag = 'smem constant byte address 0x4 - core index']
  #allocation1 [shape = 'u32[144,128]{1,0:T(1,128)}', space=vmem, size = 0x12000, scoped, tag = 'internal scratch']
  #allocation2 [shape = 'f32[32,256]{1,0:T(8,128)}', space=vmem, size = 0x8000, scoped, tag = 'scratch operand']
  %s0 = inlined_call_operand.vmem [shape: f32[2,4,256], index: 0, kind: input, shape index: {}]
  %s1 = inlined_call_operand.vmem [shape: f32[27,256], index: 1, kind: input, shape index: {}]
  %s2 = inlined_call_operand.hbm [shape: f32[216,32], index: 2, kind: input, shape index: {}]
  %s3 = inlined_call_operand.vmem [shape: f32[24,1], index: 3, kind: input, shape index: {}]
  %s4 = inlined_call_operand.vmem [shape: f32[4,32], index: 4, kind: input, shape index: {}]
  %s5 = inlined_call_operand.vmem [shape: f32[4,1], index: 5, kind: input, shape index: {}]
  %s6 = inlined_call_operand.vmem [shape: f32[2,4,256], index: 6, kind: output, shape index: {}]
  %s7 = sld [smem:[#allocation0]]
  $region61: #{rdb_fwd.1} parent=0
    _
  %s9 = ssub.s32 1, %s7
  %s10 = scalar_select 0, %s9, %s7
  $region1: #{rdb_fwd.1} parent=0
    #allocation3 [shape = 'u8[110592]{0}', space=vmem, size = 0x1b000, scoped, tag = 'input window, operand 2, single buffered']
    #allocation4 [shape = 's32[2]{0}', space=sflag, size = 0x8, scoped, tag = 'scoped memory for rdb_fwd.1']
    %11 = vsyncpa [#allocation4], 0
    loop: start=0, step=1, limit=4
    $region2: #{rdb_fwd.1} parent=1 // loop_pre_header
      _
    $region3: #{rdb_fwd.1} parent=1 // loop_header
      %s13 = sphi 0, %s17
      %p14 = scmp.ge.s32.totalorder %s13, 4
      %s23 = sphi 0, %s25
      %s26 = sphi 0, %s23
      %s27 = sphi 0, %s26
      %s43 = sphi 0, %s27
      %s47 = sphi 0, %s47
      %s49 = sphi 0, %s47
      %s50 = sphi 0, %s49
      %s64 = sphi 0, %s50
      %s68 = sphi 0, %s68
      %s70 = sphi 0, %s68
      %s71 = sphi 0, %s70
      %s85 = sphi 0, %s71
      %s89 = sphi 0, %s89
      %s91 = sphi 0, %s89
      %s92 = sphi 0, %s91
      %s106 = sphi 0, %s92
      %s110 = sphi 0, %s110
      %s112 = sphi 0, %s110
      %s113 = sphi 0, %s112
      %s127 = sphi 0, %s113
      %s131 = sphi 0, %s131
      %s133 = sphi 0, %s131
      %s134 = sphi 0, %s133
      %s148 = sphi 0, %s134
      %s154 = sphi 0, %s156
      %s157 = sphi 0, %s154
      %s158 = sphi 0, %s157
      %s174 = sphi 0, %s158
    $region4: #{rdb_fwd.1} parent=1 // loop_header_branch
      %16 = sbr.rel (%p14) target = $region8
    $region5: #{rdb_fwd.1} parent=1 // loop_body
      %s18 = ssub.s32 %s13, 1
      %s19 = ssub.s32 %s13, 2
      %s20 = sadd.s32 %s13, 1
      %s21 = ssub.s32 %s13, %s20
      %p22 = scmp.eq.s32.totalorder %s21, 0
      %s24 = sadd.s32 %s23, 1
      %s25 = scalar_select %p22, %s23, %s24
      %p28 = pneg %p22
      %p29 = scmp.eq.s32.totalorder %s13, 1
      %p30 = por %p28, %p29
      %p31 = scmp.ne.s32.totalorder %s23, %s26
      %p32 = scmp.eq.s32.totalorder %s13, 0
      %p33 = por %p31, %p32
      %p34 = scmp.ne.s32.totalorder %s23, %s26
      %p35 = scmp.eq.s32.totalorder %s18, 1
      %p36 = por %p34, %p35
      %p37 = scmp.ne.s32.totalorder %s26, %s27
      %p38 = scmp.eq.s32.totalorder %s18, 0
      %p39 = por %p37, %p38
      %p40 = scmp.ne.s32.totalorder %s26, %s27
      %p41 = scmp.eq.s32.totalorder %s19, 1
      %p42 = por %p40, %p41
      %p44 = scmp.ne.s32.totalorder %s27, %s43
      %p45 = scmp.eq.s32.totalorder %s19, 0
      %p46 = por %p44, %p45
      %s48 = sadd.s32 %s47, 1
      %p51 = scmp.eq.s32.totalorder %s13, 1
      %p52 = scmp.ne.s32.totalorder %s47, %s49
      %p53 = scmp.eq.s32.totalorder %s13, 0
      %p54 = por %p52, %p53
      %p55 = scmp.ne.s32.totalorder %s47, %s49
      %p56 = scmp.eq.s32.totalorder %s18, 1
      %p57 = por %p55, %p56
      %p58 = scmp.ne.s32.totalorder %s49, %s50
      %p59 = scmp.eq.s32.totalorder %s18, 0
      %p60 = por %p58, %p59
      %p61 = scmp.ne.s32.totalorder %s49, %s50
      %p62 = scmp.eq.s32.totalorder %s19, 1
      %p63 = por %p61, %p62
      %p65 = scmp.ne.s32.totalorder %s50, %s64
      %p66 = scmp.eq.s32.totalorder %s19, 0
      %p67 = por %p65, %p66
      %s69 = sadd.s32 %s68, 1
      %p72 = scmp.eq.s32.totalorder %s13, 1
      %p73 = scmp.ne.s32.totalorder %s68, %s70
      %p74 = scmp.eq.s32.totalorder %s13, 0
      %p75 = por %p73, %p74
      %p76 = scmp.ne.s32.totalorder %s68, %s70
      %p77 = scmp.eq.s32.totalorder %s18, 1
      %p78 = por %p76, %p77
      %p79 = scmp.ne.s32.totalorder %s70, %s71
      %p80 = scmp.eq.s32.totalorder %s18, 0
      %p81 = por %p79, %p80
      %p82 = scmp.ne.s32.totalorder %s70, %s71
      %p83 = scmp.eq.s32.totalorder %s19, 1
      %p84 = por %p82, %p83
      %p86 = scmp.ne.s32.totalorder %s71, %s85
      %p87 = scmp.eq.s32.totalorder %s19, 0
      %p88 = por %p86, %p87
      %s90 = sadd.s32 %s89, 1
      %p93 = scmp.eq.s32.totalorder %s13, 1
      %p94 = scmp.ne.s32.totalorder %s89, %s91
      %p95 = scmp.eq.s32.totalorder %s13, 0
      %p96 = por %p94, %p95
      %p97 = scmp.ne.s32.totalorder %s89, %s91
      %p98 = scmp.eq.s32.totalorder %s18, 1
      %p99 = por %p97, %p98
      %p100 = scmp.ne.s32.totalorder %s91, %s92
      %p101 = scmp.eq.s32.totalorder %s18, 0
      %p102 = por %p100, %p101
      %p103 = scmp.ne.s32.totalorder %s91, %s92
      %p104 = scmp.eq.s32.totalorder %s19, 1
      %p105 = por %p103, %p104
      %p107 = scmp.ne.s32.totalorder %s92, %s106
      %p108 = scmp.eq.s32.totalorder %s19, 0
      %p109 = por %p107, %p108
      %s111 = sadd.s32 %s110, 1
      %p114 = scmp.eq.s32.totalorder %s13, 1
      %p115 = scmp.ne.s32.totalorder %s110, %s112
      %p116 = scmp.eq.s32.totalorder %s13, 0
      %p117 = por %p115, %p116
      %p118 = scmp.ne.s32.totalorder %s110, %s112
      %p119 = scmp.eq.s32.totalorder %s18, 1
      %p120 = por %p118, %p119
      %p121 = scmp.ne.s32.totalorder %s112, %s113
      %p122 = scmp.eq.s32.totalorder %s18, 0
      %p123 = por %p121, %p122
      %p124 = scmp.ne.s32.totalorder %s112, %s113
      %p125 = scmp.eq.s32.totalorder %s19, 1
      %p126 = por %p124, %p125
      %p128 = scmp.ne.s32.totalorder %s113, %s127
      %p129 = scmp.eq.s32.totalorder %s19, 0
      %p130 = por %p128, %p129
      %s132 = sadd.s32 %s131, 1
      %p135 = scmp.eq.s32.totalorder %s13, 1
      %p136 = scmp.ne.s32.totalorder %s131, %s133
      %p137 = scmp.eq.s32.totalorder %s13, 0
      %p138 = por %p136, %p137
      %p139 = scmp.ne.s32.totalorder %s131, %s133
      %p140 = scmp.eq.s32.totalorder %s18, 1
      %p141 = por %p139, %p140
      %p142 = scmp.ne.s32.totalorder %s133, %s134
      %p143 = scmp.eq.s32.totalorder %s18, 0
      %p144 = por %p142, %p143
      %p145 = scmp.ne.s32.totalorder %s133, %s134
      %p146 = scmp.eq.s32.totalorder %s19, 1
      %p147 = por %p145, %p146
      %p149 = scmp.ne.s32.totalorder %s134, %s148
      %p150 = scmp.eq.s32.totalorder %s19, 0
      %p151 = por %p149, %p150
      %s152 = ssub.s32 %s13, %s20
      %p153 = scmp.eq.s32.totalorder %s152, 0
      %s155 = sadd.s32 %s154, 1
      %s156 = scalar_select %p153, %s154, %s155
      %p159 = pneg %p153
      %p160 = scmp.eq.s32.totalorder %s13, 1
      %p161 = por %p159, %p160
      %p162 = scmp.ne.s32.totalorder %s154, %s157
      %p163 = scmp.eq.s32.totalorder %s13, 0
      %p164 = por %p162, %p163
      %p165 = scmp.ne.s32.totalorder %s154, %s157
      %p166 = scmp.eq.s32.totalorder %s18, 1
      %p167 = por %p165, %p166
      %p168 = scmp.ne.s32.totalorder %s157, %s158
      %p169 = scmp.eq.s32.totalorder %s18, 0
      %p170 = por %p168, %p169
      %p171 = scmp.ne.s32.totalorder %s157, %s158
      %p172 = scmp.eq.s32.totalorder %s19, 1
      %p173 = por %p171, %p172
      %p175 = scmp.ne.s32.totalorder %s158, %s174
      %p176 = scmp.eq.s32.totalorder %s19, 0
      %p177 = por %p175, %p176
      %p178 = scmp.le.s32.totalorder 1, %s13
      %p179 = scmp.lt.s32.totalorder %s13, 3
      %p180 = pnand %p178, %p179
      %p181 = pneg %p180
      // Predicated region
      $region9: #{rdb_fwd.1} parent=5 // pred_check
        _
      $region10: #{rdb_fwd.1} parent=5 // pred_check_branch
        %183 = sbr.rel (%p180) target = $region12
      $region11: #{rdb_fwd.1} parent=5 // pred_region
        %s184 = ssub.s32 %s13, 1
        // Predicated region
        $region13: #{rdb_fwd.1} parent=11 // pred_check
          %p185 = pneg %p60
        $region14: #{rdb_fwd.1} parent=11 // pred_check_branch
          %187 = sbr.rel (%p185) target = $region16
        $region15: #{rdb_fwd.1} parent=11 // pred_region
          _
        $region16: #{rdb_fwd.1} parent=11 // pred_fallthru
          _
        // Predicated region
        $region17: #{rdb_fwd.1} parent=11 // pred_check
          %p188 = pneg %p81
        $region18: #{rdb_fwd.1} parent=11 // pred_check_branch
          %190 = sbr.rel (%p188) target = $region20
        $region19: #{rdb_fwd.1} parent=11 // pred_region
          %s192 = ssub.s32 3456, 3456
          %193 = vsyncadd [#allocation4], %s192
          %s194 = sshll.u32 [#allocation3], 4
          %s195 = int_to_ptr.vmem [resolvable:$true] %s194
          %200 = dma.hbm_to_vmem [thread:$0]  %s2, 3456, %s195, [#allocation4], 128, 128, 8
        $region20: #{rdb_fwd.1} parent=11 // pred_fallthru
          _
        // Predicated region
        $region21: #{rdb_fwd.1} parent=11 // pred_check
          %p201 = pneg %p102
        $region22: #{rdb_fwd.1} parent=11 // pred_check_branch
          %203 = sbr.rel (%p201) target = $region24
        $region23: #{rdb_fwd.1} parent=11 // pred_region
          _
        $region24: #{rdb_fwd.1} parent=11 // pred_fallthru
          _
        // Predicated region
        $region25: #{rdb_fwd.1} parent=11 // pred_check
          %p204 = pneg %p123
        $region26: #{rdb_fwd.1} parent=11 // pred_check_branch
          %206 = sbr.rel (%p204) target = $region28
        $region27: #{rdb_fwd.1} parent=11 // pred_region
          _
        $region28: #{rdb_fwd.1} parent=11 // pred_fallthru
          _
        // Predicated region
        $region29: #{rdb_fwd.1} parent=11 // pred_check
          %p207 = pneg %p144
        $region30: #{rdb_fwd.1} parent=11 // pred_check_branch
          %209 = sbr.rel (%p207) target = $region32
        $region31: #{rdb_fwd.1} parent=11 // pred_region
          _
        $region32: #{rdb_fwd.1} parent=11 // pred_fallthru
          _
      $region12: #{rdb_fwd.1} parent=5 // pred_fallthru
        _
      %p210 = scmp.lt.s32.totalorder %s13, 2
      // Predicated region
      $region33: #{rdb_fwd.1} parent=5 // pred_check
        %p211 = pneg %p210
      $region34: #{rdb_fwd.1} parent=5 // pred_check_branch
        %213 = sbr.rel (%p211) target = $region36
      $region35: #{rdb_fwd.1} parent=5 // pred_region
        // Predicated region
        $region37: #{rdb_fwd.1} parent=35 // pred_check
          %p214 = pneg %p33
        $region38: #{rdb_fwd.1} parent=35 // pred_check_branch
          %216 = sbr.rel (%p214) target = $region40
        $region39: #{rdb_fwd.1} parent=35 // pred_region
          %p217 = scmp.lt.s32.totalorder %s13, 1
          %s218 = scalar_select %p217, %s13, 1
          %s219 = smul.addr %s218, 2
          %s220 = smul.addr %s219, 4
          %s221 = scalar_lea.vmem %s0, %s220
        $region40: #{rdb_fwd.1} parent=35 // pred_fallthru
          _
      $region36: #{rdb_fwd.1} parent=5 // pred_fallthru
        _
      %p222 = scmp.le.s32.totalorder 1, %s13
      %p223 = scmp.lt.s32.totalorder %s13, 3
      %p224 = pnand %p222, %p223
      %p225 = pneg %p224
      // Predicated region
      $region41: #{rdb_fwd.1} parent=5 // pred_check
        _
      $region42: #{rdb_fwd.1} parent=5 // pred_check_branch
        %227 = sbr.rel (%p224) target = $region44
      $region43: #{rdb_fwd.1} parent=5 // pred_region
        %s228 = ssub.s32 %s13, 1
        // Predicated region
        $region45: #{rdb_fwd.1} parent=43 // pred_check
          %p229 = pneg %p81
        $region46: #{rdb_fwd.1} parent=43 // pred_check_branch
          %231 = sbr.rel (%p229) target = $region48
        $region47: #{rdb_fwd.1} parent=43 // pred_region
          %232 = dma.done [#allocation4], 3456
        $region48: #{rdb_fwd.1} parent=43 // pred_fallthru
          _
        %p233 = scmp.lt.s32.totalorder %s18, 1
        %s234 = scalar_select %p233, %s18, 1
        %s235 = smul.addr %s234, 2
        %s236 = smul.addr %s235, 4
        %s237 = scalar_lea.vmem %s0, %s236
        %p238 = pneg %p39
        %p239 = pneg %p36
        %p240 = pneg %p60
        %p241 = pneg %p57
        %p242 = pneg %p81
        %p243 = pneg %p78
        %p244 = pneg %p102
        %p245 = pneg %p99
        %p246 = pneg %p123
        %p247 = pneg %p120
        %p248 = pneg %p144
        %p249 = pneg %p141
        %p250 = pneg %p170
        %p251 = pneg %p167
        %p252 = scmp.lt.s32.totalorder %s18, 1
        %s253 = scalar_select %p252, %s18, 1
        %s254 = smul.addr %s253, 2
        %s255 = smul.addr %s254, 4
        %s256 = scalar_lea.vmem %s6, %s255
        %p257 = scmp.lt.s32.totalorder %s18, 1
        %s258 = scalar_select %p257, %s18, 1
        %s259 = smul.addr %s258, 2
        %s260 = smul.addr %s259, 4
        %s261 = scalar_lea.vmem %s0, %s260
        %p262 = scmp.lt.s32.totalorder %s18, 1
        %s263 = scalar_select %p262, %s18, 1
        %s264 = smul.addr %s263, 2
        %s265 = smul.addr %s264, 4
        %s266 = scalar_lea.vmem %s6, %s265
        %v267 = vld [vmem:[%s261] sm:$0xff]
        %268 = vst [vmem:[#allocation2] sm:$0xff] 0.0
        %269 = vst [vmem:[#allocation2 + $0x8] sm:$0xff] 0.0
        %270 = vst [vmem:[#allocation2 + $0x10] sm:$0xff] 0.0
        %271 = vst [vmem:[#allocation2 + $0x18] sm:$0xff] 0.0
        %272 = vst [vmem:[#allocation2 + $0x20] sm:$0xff] 0.0
        %273 = vst [vmem:[#allocation2 + $0x28] sm:$0xff] 0.0
        %274 = vst [vmem:[#allocation2 + $0x30] sm:$0xff] 0.0
        %275 = vst [vmem:[#allocation2 + $0x38] sm:$0xff] 0.0
        %v277 = vcombine.high %v267, %v267
        %279 = vst [vmem:[#allocation2 + $0x30] sm:$0xf] %v267
        %280 = vst [vmem:[#allocation2 + $0x38] sm:$0xf] %v277
        %v281 = vld [vmem:[#allocation2] sm:$0xff]
        %v282 = vld [vmem:[#allocation2 + $0x8] sm:$0xff]
        %v283 = vld [vmem:[#allocation2 + $0x10] sm:$0xff]
        %v284 = vld [vmem:[#allocation2 + $0x18] sm:$0xff]
        %v285 = vld [vmem:[#allocation2 + $0x20] sm:$0xff]
        %v286 = vld [vmem:[#allocation2 + $0x28] sm:$0xff]
        %v287 = vld [vmem:[#allocation2 + $0x30] sm:$0xff]
        %v288 = vld [vmem:[#allocation2 + $0x38] sm:$0xff]
        %v289 = vld [vmem:[#allocation3] sm:$0xff]
        %290 = vrot.lane.b32.xlu0 %v281, 17
        %v291 = vpop.permute.xlu0 %290
        %292 = vrot.lane.b32.xlu0 %v283, 17
        %v293 = vpop.permute.xlu0 %292
        %294 = vrot.lane.b32.xlu0 %v285, 17
        %v295 = vpop.permute.xlu0 %294
        %296 = vrot.lane.b32.xlu0 %v287, 17
        %v297 = vpop.permute.xlu0 %296
        %298 = vrot.lane.b32.xlu0 %v282, 17
        %v299 = vpop.permute.xlu0 %298
        %300 = vrot.lane.b32.xlu0 %v284, 17
        %v301 = vpop.permute.xlu0 %300
        %302 = vrot.lane.b32.xlu0 %v286, 17
        %v303 = vpop.permute.xlu0 %302
        %304 = vrot.lane.b32.xlu0 %v288, 17
        %v305 = vpop.permute.xlu0 %304
        %v306 = vlaneseq
        %v307 = vand.u32 %v306, 127
        %vm308 = vcmp.lt.s32.totalorder %v307, 17
        %v309 = vsel %vm308, %v291, %v299
        %v310 = vsel %vm308, %v293, %v301
        %v311 = vsel %vm308, %v295, %v303
        %v312 = vsel %vm308, %v297, %v305
        %v313 = vsel %vm308, %v299, %v291
        %v314 = vsel %vm308, %v301, %v293
        %v315 = vsel %vm308, %v303, %v295
        %v316 = vsel %vm308, %v305, %v297
        %v317 = vld [vmem:[%s1] ss:$8 sm:$0x3]
        %v319 = vlaneseq
        %v320 = vshrl.u32 %v319, 7
        %v321 = vsub.s32 0, %v320
        %v322 = vrot.slane %v317, %v321
        %v323 = vlaneseq
        %v324 = vshrl.u32 %v323, 7
        %v325 = vsub.s32 1, %v324
        %v326 = vrot.slane %v317, %v325
        %v329 = vmul.f32 %v313, %v322
        %v330 = vmul.f32 %v309, %v326
        %v331 = vmul.f32 %v314, %v322
        %v332 = vmul.f32 %v310, %v326
        %v333 = vmul.f32 %v315, %v322
        %v334 = vmul.f32 %v311, %v326
        %v335 = vmul.f32 %v316, %v322
        %v336 = vmul.f32 %v312, %v326
        %v337 = vld [vmem:[#allocation3 + $0x8] sm:$0xff]
        %338 = vrot.lane.b32.xlu0 %v281, 16
        %v339 = vpop.permute.xlu0 %338
        %340 = vrot.lane.b32.xlu0 %v283, 16
        %v341 = vpop.permute.xlu0 %340
        %342 = vrot.lane.b32.xlu0 %v285, 16
        %v343 = vpop.permute.xlu0 %342
        %344 = vrot.lane.b32.xlu0 %v287, 16
        %v345 = vpop.permute.xlu0 %344
        %346 = vrot.lane.b32.xlu0 %v282, 16
        %v347 = vpop.permute.xlu0 %346
        %348 = vrot.lane.b32.xlu0 %v284, 16
        %v349 = vpop.permute.xlu0 %348
        %350 = vrot.lane.b32.xlu0 %v286, 16
        %v351 = vpop.permute.xlu0 %350
        %352 = vrot.lane.b32.xlu0 %v288, 16
        %v353 = vpop.permute.xlu0 %352
        %vm354 = vcmp.lt.s32.totalorder %v307, 16
        %v355 = vsel %vm354, %v339, %v347
        %v356 = vsel %vm354, %v341, %v349
        %v357 = vsel %vm354, %v343, %v351
        %v358 = vsel %vm354, %v345, %v353
        %v359 = vsel %vm354, %v347, %v339
        %v360 = vsel %vm354, %v349, %v341
        %v361 = vsel %vm354, %v351, %v343
        %v362 = vsel %vm354, %v353, %v345
        %s363 = scalar_lea.vmem %s1, 1
        %v364 = vld [vmem:[%s363] ss:$8 sm:$0x3]
        %v366 = vlaneseq
        %v367 = vshrl.u32 %v366, 7
        %v368 = vsub.s32 0, %v367
        %v369 = vrot.slane %v364, %v368
        %v370 = vlaneseq
        %v371 = vshrl.u32 %v370, 7
        %v372 = vsub.s32 1, %v371
        %v373 = vrot.slane %v364, %v372
        %v376 = vmul.f32 %v359, %v369
        %v377 = vmul.f32 %v355, %v373
        %v378 = vmul.f32 %v360, %v369
        %v379 = vmul.f32 %v356, %v373
        %v380 = vmul.f32 %v361, %v369
        %v381 = vmul.f32 %v357, %v373
        %v382 = vmul.f32 %v362, %v369
        %v383 = vmul.f32 %v358, %v373
        %vm384 = vcmask 261120
        %v386 = vsel %vm384, %v337, 0
        %388 = vmatprep.subr.mxu0 0.0
        %389 = vmatpush1.msra.mxu0 0.0
        %390 = vmatprep.subr.mxu0 0.0
        %391 = vmatpush1.msra.mxu0 0.0
        %392 = vmatprep.subr.mxu0 0.0
        %393 = vmatpush1.msra.mxu0 0.0
        %394 = vmatprep.subr.mxu0 0.0
        %395 = vmatpush1.msra.mxu0 0.0
        %396 = vmatprep.subr.mxu0 0.0
        %397 = vmatpush1.msra.mxu0 0.0
        %398 = vmatprep.subr.mxu0 0.0
        %399 = vmatpush1.msra.mxu0 0.0
        %400 = vmatprep.subr.mxu0 0.0
        %401 = vmatpush1.msra.mxu0 0.0
        %402 = vmatprep.subr.mxu0 0.0
        %403 = vmatpush1.msra.mxu0 0.0
        %404 = vmatprep.subr.mxu0 0.0
        %405 = vmatpush1.msra.mxu0 0.0
        %406 = vmatprep.subr.mxu0 0.0
        %407 = vmatpush1.msra.mxu0 0.0
        %408 = vmatprep.subr.mxu0 0.0
        %409 = vmatpush1.msra.mxu0 0.0
        %410 = vmatprep.subr.mxu0 0.0
        %411 = vmatpush1.msra.mxu0 0.0
        %412 = vmatprep.subr.mxu0 %v383
        %413 = vmatpush1.msra.mxu0 %v382
        %414 = vmatprep.subr.mxu0 %v381
        %415 = vmatpush1.msra.mxu0 %v380
        %416 = vmatprep.subr.mxu0 %v379
        %417 = vmatpush1.msra.mxu0 %v378
        %418 = vmatprep.subr.mxu0 %v377
        %419 = vmatpush1.msra.mxu0 %v376
        %420 = vmatprep.subr.mxu0 0.0
        %421 = vmatpush2.msra.mxu0 0.0
        %422 = vmatprep.subr.mxu0 0.0
        %423 = vmatpush2.msra.mxu0 0.0
        %424 = vmatprep.subr.mxu0 0.0
        %425 = vmatpush2.msra.mxu0 0.0
        %426 = vmatprep.subr.mxu0 0.0
        %427 = vmatpush2.msra.mxu0 0.0
        %428 = vmatprep.subr.mxu0 0.0
        %429 = vmatpush2.msra.mxu0 0.0
        %430 = vmatprep.subr.mxu0 0.0
        %431 = vmatpush2.msra.mxu0 0.0
        %432 = vmatprep.subr.mxu0 0.0
        %433 = vmatpush2.msra.mxu0 0.0
        %434 = vmatprep.subr.mxu0 0.0
        %435 = vmatpush2.msra.mxu0 0.0
        %436 = vmatprep.subr.mxu0 0.0
        %437 = vmatpush2.msra.mxu0 0.0
        %438 = vmatprep.subr.mxu0 0.0
        %439 = vmatpush2.msra.mxu0 0.0
        %440 = vmatprep.subr.mxu0 0.0
        %441 = vmatpush2.msra.mxu0 0.0
        %442 = vmatprep.subr.mxu0 0.0
        %443 = vmatpush2.msra.mxu0 0.0
        %444 = vmatprep.subr.mxu0 0.0
        %445 = vmatpush2.msra.mxu0 0.0
        %446 = vmatprep.subr.mxu0 0.0
        %447 = vmatpush2.msra.mxu0 0.0
        %448 = vmatprep.subr.mxu0 0.0
        %449 = vmatpush2.msra.mxu0 0.0
        %450 = vmatprep.subr.mxu0 0.0
        %451 = vmatpush2.msra.mxu0 0.0
        %452 = vmatprep.mubr.f32.mxu0 0.0
        %453 = vmatmul.mubr.f32.gmra.mxu0 %v386
        %v454 = vpop.f32.mrf.mxu0
        %v455 = vadd.f32 0.0, %v454
        %v456 = vpop.f32.mrf.mxu0
        %v457 = vadd.f32 0.0, %v456
        %458 = vdwg.mxu0
        %v460 = vsel %vm384, %v289, 0
        %462 = vmatprep.subr.mxu0 0.0
        %463 = vmatpush1.msra.mxu0 0.0
        %464 = vmatprep.subr.mxu0 0.0
        %465 = vmatpush1.msra.mxu0 0.0
        %466 = vmatprep.subr.mxu0 0.0
        %467 = vmatpush1.msra.mxu0 0.0
        %468 = vmatprep.subr.mxu0 0.0
        %469 = vmatpush1.msra.mxu0 0.0
        %470 = vmatprep.subr.mxu0 0.0
        %471 = vmatpush1.msra.mxu0 0.0
        %472 = vmatprep.subr.mxu0 0.0
        %473 = vmatpush1.msra.mxu0 0.0
        %474 = vmatprep.subr.mxu0 0.0
        %475 = vmatpush1.msra.mxu0 0.0
        %476 = vmatprep.subr.mxu0 0.0
        %477 = vmatpush1.msra.mxu0 0.0
        %478 = vmatprep.subr.mxu0 0.0
        %479 = vmatpush1.msra.mxu0 0.0
        %480 = vmatprep.subr.mxu0 0.0
        %481 = vmatpush1.msra.mxu0 0.0
        %482 = vmatprep.subr.mxu0 0.0
        %483 = vmatpush1.msra.mxu0 0.0
        %484 = vmatprep.subr.mxu0 0.0
        %485 = vmatpush1.msra.mxu0 0.0
        %486 = vmatprep.subr.mxu0 %v336
        %487 = vmatpush1.msra.mxu0 %v335
        %488 = vmatprep.subr.mxu0 %v334
        %489 = vmatpush1.msra.mxu0 %v333
        %490 = vmatprep.subr.mxu0 %v332
        %491 = vmatpush1.msra.mxu0 %v331
        %492 = vmatprep.subr.mxu0 %v330
        %493 = vmatpush1.msra.mxu0 %v329
        %494 = vmatprep.subr.mxu0 0.0
        %495 = vmatpush2.msra.mxu0 0.0
        %496 = vmatprep.subr.mxu0 0.0
        %497 = vmatpush2.msra.mxu0 0.0
        %498 = vmatprep.subr.mxu0 0.0
        %499 = vmatpush2.msra.mxu0 0.0
        %500 = vmatprep.subr.mxu0 0.0
        %501 = vmatpush2.msra.mxu0 0.0
        %502 = vmatprep.subr.mxu0 0.0
        %503 = vmatpush2.msra.mxu0 0.0
        %504 = vmatprep.subr.mxu0 0.0
        %505 = vmatpush2.msra.mxu0 0.0
        %506 = vmatprep.subr.mxu0 0.0
        %507 = vmatpush2.msra.mxu0 0.0
        %508 = vmatprep.subr.mxu0 0.0
        %509 = vmatpush2.msra.mxu0 0.0
        %510 = vmatprep.subr.mxu0 0.0
        %511 = vmatpush2.msra.mxu0 0.0
        %512 = vmatprep.subr.mxu0 0.0
        %513 = vmatpush2.msra.mxu0 0.0
        %514 = vmatprep.subr.mxu0 0.0
        %515 = vmatpush2.msra.mxu0 0.0
        %516 = vmatprep.subr.mxu0 0.0
        %517 = vmatpush2.msra.mxu0 0.0
        %518 = vmatprep.subr.mxu0 0.0
        %519 = vmatpush2.msra.mxu0 0.0
        %520 = vmatprep.subr.mxu0 0.0
        %521 = vmatpush2.msra.mxu0 0.0
        %522 = vmatprep.subr.mxu0 0.0
        %523 = vmatpush2.msra.mxu0 0.0
        %524 = vmatprep.subr.mxu0 0.0
        %525 = vmatpush2.msra.mxu0 0.0
        %526 = vmatprep.mubr.f32.mxu0 0.0
        %527 = vmatmul.mubr.f32.gmra.mxu0 %v460
        %v528 = vpop.f32.mrf.mxu0
        %v529 = vadd.f32 %v455, %v528
        %v530 = vpop.f32.mrf.mxu0
        %v531 = vadd.f32 %v457, %v530
        %532 = vdwg.mxu0
        %v533 = vld [vmem:[#allocation3 + $0x10] sm:$0xff]
        %534 = vrot.lane.b32.xlu0 %v281, 15
        %v535 = vpop.permute.xlu0 %534
        %536 = vrot.lane.b32.xlu0 %v283, 15
        %v537 = vpop.permute.xlu0 %536
        %538 = vrot.lane.b32.xlu0 %v285, 15
        %v539 = vpop.permute.xlu0 %538
        %540 = vrot.lane.b32.xlu0 %v287, 15
        %v541 = vpop.permute.xlu0 %540
        %542 = vrot.lane.b32.xlu0 %v282, 15
        %v543 = vpop.permute.xlu0 %542
        %544 = vrot.lane.b32.xlu0 %v284, 15
        %v545 = vpop.permute.xlu0 %544
        %546 = vrot.lane.b32.xlu0 %v286, 15
        %v547 = vpop.permute.xlu0 %546
        %548 = vrot.lane.b32.xlu0 %v288, 15
        %v549 = vpop.permute.xlu0 %548
        %vm550 = vcmp.lt.s32.totalorder %v307, 15
        %v551 = vsel %vm550, %v535, %v543
        %v552 = vsel %vm550, %v537, %v545
        %v553 = vsel %vm550, %v539, %v547
        %v554 = vsel %vm550, %v541, %v549
        %v555 = vsel %vm550, %v543, %v535
        %v556 = vsel %vm550, %v545, %v537
        %v557 = vsel %vm550, %v547, %v539
        %v558 = vsel %vm550, %v549, %v541
        %s559 = scalar_lea.vmem %s1, 2
        %v560 = vld [vmem:[%s559] ss:$8 sm:$0x3]
        %v562 = vlaneseq
        %v563 = vshrl.u32 %v562, 7
        %v564 = vsub.s32 0, %v563
        %v565 = vrot.slane %v560, %v564
        %v566 = vlaneseq
        %v567 = vshrl.u32 %v566, 7
        %v568 = vsub.s32 1, %v567
        %v569 = vrot.slane %v560, %v568
        %v572 = vmul.f32 %v555, %v565
        %v573 = vmul.f32 %v551, %v569
        %v574 = vmul.f32 %v556, %v565
        %v575 = vmul.f32 %v552, %v569
        %v576 = vmul.f32 %v557, %v565
        %v577 = vmul.f32 %v553, %v569
        %v578 = vmul.f32 %v558, %v565
        %v579 = vmul.f32 %v554, %v569
        %v581 = vsel %vm384, %v533, 0
        %583 = vmatprep.subr.mxu0 0.0
        %584 = vmatpush1.msra.mxu0 0.0
        %585 = vmatprep.subr.mxu0 0.0
        %586 = vmatpush1.msra.mxu0 0.0
        %587 = vmatprep.subr.mxu0 0.0
        %588 = vmatpush1.msra.mxu0 0.0
        %589 = vmatprep.subr.mxu0 0.0
        %590 = vmatpush1.msra.mxu0 0.0
        %591 = vmatprep.subr.mxu0 0.0
        %592 = vmatpush1.msra.mxu0 0.0
        %593 = vmatprep.subr.mxu0 0.0
        %594 = vmatpush1.msra.mxu0 0.0
        %595 = vmatprep.subr.mxu0 0.0
        %596 = vmatpush1.msra.mxu0 0.0
        %597 = vmatprep.subr.mxu0 0.0
        %598 = vmatpush1.msra.mxu0 0.0
        %599 = vmatprep.subr.mxu0 0.0
        %600 = vmatpush1.msra.mxu0 0.0
        %601 = vmatprep.subr.mxu0 0.0
        %602 = vmatpush1.msra.mxu0 0.0
        %603 = vmatprep.subr.mxu0 0.0
        %604 = vmatpush1.msra.mxu0 0.0
        %605 = vmatprep.subr.mxu0 0.0
        %606 = vmatpush1.msra.mxu0 0.0
        %607 = vmatprep.subr.mxu0 %v579
        %608 = vmatpush1.msra.mxu0 %v578
        %609 = vmatprep.subr.mxu0 %v577
        %610 = vmatpush1.msra.mxu0 %v576
        %611 = vmatprep.subr.mxu0 %v575
        %612 = vmatpush1.msra.mxu0 %v574
        %613 = vmatprep.subr.mxu0 %v573
        %614 = vmatpush1.msra.mxu0 %v572
        %615 = vmatprep.subr.mxu0 0.0
        %616 = vmatpush2.msra.mxu0 0.0
        %617 = vmatprep.subr.mxu0 0.0
        %618 = vmatpush2.msra.mxu0 0.0
        %619 = vmatprep.subr.mxu0 0.0
        %620 = vmatpush2.msra.mxu0 0.0
        %621 = vmatprep.subr.mxu0 0.0
        %622 = vmatpush2.msra.mxu0 0.0
        %623 = vmatprep.subr.mxu0 0.0
        %624 = vmatpush2.msra.mxu0 0.0
        %625 = vmatprep.subr.mxu0 0.0
        %626 = vmatpush2.msra.mxu0 0.0
        %627 = vmatprep.subr.mxu0 0.0
        %628 = vmatpush2.msra.mxu0 0.0
        %629 = vmatprep.subr.mxu0 0.0
        %630 = vmatpush2.msra.mxu0 0.0
        %631 = vmatprep.subr.mxu0 0.0
        %632 = vmatpush2.msra.mxu0 0.0
        %633 = vmatprep.subr.mxu0 0.0
        %634 = vmatpush2.msra.mxu0 0.0
        %635 = vmatprep.subr.mxu0 0.0
        %636 = vmatpush2.msra.mxu0 0.0
        %637 = vmatprep.subr.mxu0 0.0
        %638 = vmatpush2.msra.mxu0 0.0
        %639 = vmatprep.subr.mxu0 0.0
        %640 = vmatpush2.msra.mxu0 0.0
        %641 = vmatprep.subr.mxu0 0.0
        %642 = vmatpush2.msra.mxu0 0.0
        %643 = vmatprep.subr.mxu0 0.0
        %644 = vmatpush2.msra.mxu0 0.0
        %645 = vmatprep.subr.mxu0 0.0
        %646 = vmatpush2.msra.mxu0 0.0
        %647 = vmatprep.mubr.f32.mxu0 0.0
        %648 = vmatmul.mubr.f32.gmra.mxu0 %v581
        %v649 = vpop.f32.mrf.mxu0
        %v650 = vadd.f32 0.0, %v649
        %v651 = vpop.f32.mrf.mxu0
        %v652 = vadd.f32 0.0, %v651
        %653 = vdwg.mxu0
        %v654 = vadd.f32 %v529, %v650
        %v655 = vadd.f32 %v531, %v652
        %v656 = vld [vmem:[#allocation3 + $0x18] sm:$0xff]
        %657 = vrot.lane.b32.xlu0 %v281, 1
        %v658 = vpop.permute.xlu0 %657
        %659 = vrot.lane.b32.xlu0 %v283, 1
        %v660 = vpop.permute.xlu0 %659
        %661 = vrot.lane.b32.xlu0 %v285, 1
        %v662 = vpop.permute.xlu0 %661
        %663 = vrot.lane.b32.xlu0 %v287, 1
        %v664 = vpop.permute.xlu0 %663
        %665 = vrot.lane.b32.xlu0 %v282, 1
        %v666 = vpop.permute.xlu0 %665
        %667 = vrot.lane.b32.xlu0 %v284, 1
        %v668 = vpop.permute.xlu0 %667
        %669 = vrot.lane.b32.xlu0 %v286, 1
        %v670 = vpop.permute.xlu0 %669
        %671 = vrot.lane.b32.xlu0 %v288, 1
        %v672 = vpop.permute.xlu0 %671
        %vm673 = vcmp.lt.s32.totalorder %v307, 1
        %v674 = vsel %vm673, %v658, %v666
        %v675 = vsel %vm673, %v660, %v668
        %v676 = vsel %vm673, %v662, %v670
        %v677 = vsel %vm673, %v664, %v672
        %v678 = vsel %vm673, %v666, %v658
        %v679 = vsel %vm673, %v668, %v660
        %v680 = vsel %vm673, %v670, %v662
        %v681 = vsel %vm673, %v672, %v664
        %s682 = scalar_lea.vmem %s1, 3
        %v683 = vld [vmem:[%s682] ss:$8 sm:$0x3]
        %v685 = vlaneseq
        %v686 = vshrl.u32 %v685, 7
        %v687 = vsub.s32 0, %v686
        %v688 = vrot.slane %v683, %v687
        %v689 = vlaneseq
        %v690 = vshrl.u32 %v689, 7
        %v691 = vsub.s32 1, %v690
        %v692 = vrot.slane %v683, %v691
        %v695 = vmul.f32 %v678, %v688
        %v696 = vmul.f32 %v674, %v692
        %v697 = vmul.f32 %v679, %v688
        %v698 = vmul.f32 %v675, %v692
        %v699 = vmul.f32 %v680, %v688
        %v700 = vmul.f32 %v676, %v692
        %v701 = vmul.f32 %v681, %v688
        %v702 = vmul.f32 %v677, %v692
        %v704 = vsel %vm384, %v656, 0
        %706 = vmatprep.subr.mxu0 0.0
        %707 = vmatpush1.msra.mxu0 0.0
        %708 = vmatprep.subr.mxu0 0.0
        %709 = vmatpush1.msra.mxu0 0.0
        %710 = vmatprep.subr.mxu0 0.0
        %711 = vmatpush1.msra.mxu0 0.0
        %712 = vmatprep.subr.mxu0 0.0
        %713 = vmatpush1.msra.mxu0 0.0
        %714 = vmatprep.subr.mxu0 0.0
        %715 = vmatpush1.msra.mxu0 0.0
        %716 = vmatprep.subr.mxu0 0.0
        %717 = vmatpush1.msra.mxu0 0.0
        %718 = vmatprep.subr.mxu0 0.0
        %719 = vmatpush1.msra.mxu0 0.0
        %720 = vmatprep.subr.mxu0 0.0
        %721 = vmatpush1.msra.mxu0 0.0
        %722 = vmatprep.subr.mxu0 0.0
        %723 = vmatpush1.msra.mxu0 0.0
        %724 = vmatprep.subr.mxu0 0.0
        %725 = vmatpush1.msra.mxu0 0.0
        %726 = vmatprep.subr.mxu0 0.0
        %727 = vmatpush1.msra.mxu0 0.0
        %728 = vmatprep.subr.mxu0 0.0
        %729 = vmatpush1.msra.mxu0 0.0
        %730 = vmatprep.subr.mxu0 %v702
        %731 = vmatpush1.msra.mxu0 %v701
        %732 = vmatprep.subr.mxu0 %v700
        %733 = vmatpush1.msra.mxu0 %v699
        %734 = vmatprep.subr.mxu0 %v698
        %735 = vmatpush1.msra.mxu0 %v697
        %736 = vmatprep.subr.mxu0 %v696
        %737 = vmatpush1.msra.mxu0 %v695
        %738 = vmatprep.subr.mxu0 0.0
        %739 = vmatpush2.msra.mxu0 0.0
        %740 = vmatprep.subr.mxu0 0.0
        %741 = vmatpush2.msra.mxu0 0.0
        %742 = vmatprep.subr.mxu0 0.0
        %743 = vmatpush2.msra.mxu0 0.0
        %744 = vmatprep.subr.mxu0 0.0
        %745 = vmatpush2.msra.mxu0 0.0
        %746 = vmatprep.subr.mxu0 0.0
        %747 = vmatpush2.msra.mxu0 0.0
        %748 = vmatprep.subr.mxu0 0.0
        %749 = vmatpush2.msra.mxu0 0.0
        %750 = vmatprep.subr.mxu0 0.0
        %751 = vmatpush2.msra.mxu0 0.0
        %752 = vmatprep.subr.mxu0 0.0
        %753 = vmatpush2.msra.mxu0 0.0
        %754 = vmatprep.subr.mxu0 0.0
        %755 = vmatpush2.msra.mxu0 0.0
        %756 = vmatprep.subr.mxu0 0.0
        %757 = vmatpush2.msra.mxu0 0.0
        %758 = vmatprep.subr.mxu0 0.0
        %759 = vmatpush2.msra.mxu0 0.0
        %760 = vmatprep.subr.mxu0 0.0
        %761 = vmatpush2.msra.mxu0 0.0
        %762 = vmatprep.subr.mxu0 0.0
        %763 = vmatpush2.msra.mxu0 0.0
        %764 = vmatprep.subr.mxu0 0.0
        %765 = vmatpush2.msra.mxu0 0.0
        %766 = vmatprep.subr.mxu0 0.0
        %767 = vmatpush2.msra.mxu0 0.0
        %768 = vmatprep.subr.mxu0 0.0
        %769 = vmatpush2.msra.mxu0 0.0
        %770 = vmatprep.mubr.f32.mxu0 0.0
        %771 = vmatmul.mubr.f32.gmra.mxu0 %v704
        %v772 = vpop.f32.mrf.mxu0
        %v773 = vadd.f32 0.0, %v772
        %v774 = vpop.f32.mrf.mxu0
        %v775 = vadd.f32 0.0, %v774
        %776 = vdwg.mxu0
        %v777 = vadd.f32 %v654, %v773
        %v778 = vadd.f32 %v655, %v775
        %v779 = vld [vmem:[#allocation3 + $0x20] sm:$0xff]
        %v781 = vsel %vm384, %v779, 0
        %783 = vmatprep.subr.mxu0 0.0
        %784 = vmatpush1.msra.mxu0 0.0
        %785 = vmatprep.subr.mxu0 0.0
        %786 = vmatpush1.msra.mxu0 0.0
        %787 = vmatprep.subr.mxu0 0.0
        %788 = vmatpush1.msra.mxu0 0.0
        %789 = vmatprep.subr.mxu0 0.0
        %790 = vmatpush1.msra.mxu0 0.0
        %791 = vmatprep.subr.mxu0 0.0
        %792 = vmatpush1.msra.mxu0 0.0
        %793 = vmatprep.subr.mxu0 0.0
        %794 = vmatpush1.msra.mxu0 0.0
        %795 = vmatprep.subr.mxu0 0.0
        %796 = vmatpush1.msra.mxu0 0.0
        %797 = vmatprep.subr.mxu0 0.0
        %798 = vmatpush1.msra.mxu0 0.0
        %799 = vmatprep.subr.mxu0 0.0
        %800 = vmatpush1.msra.mxu0 0.0
        %801 = vmatprep.subr.mxu0 0.0
        %802 = vmatpush1.msra.mxu0 0.0
        %803 = vmatprep.subr.mxu0 0.0
        %804 = vmatpush1.msra.mxu0 0.0
        %805 = vmatprep.subr.mxu0 0.0
        %806 = vmatpush1.msra.mxu0 0.0
        %807 = vmatprep.subr.mxu0 %v288
        %808 = vmatpush1.msra.mxu0 %v287
        %809 = vmatprep.subr.mxu0 %v286
        %810 = vmatpush1.msra.mxu0 %v285
        %811 = vmatprep.subr.mxu0 %v284
        %812 = vmatpush1.msra.mxu0 %v283
        %813 = vmatprep.subr.mxu0 %v282
        %814 = vmatpush1.msra.mxu0 %v281
        %815 = vmatprep.subr.mxu0 0.0
        %816 = vmatpush2.msra.mxu0 0.0
        %817 = vmatprep.subr.mxu0 0.0
        %818 = vmatpush2.msra.mxu0 0.0
        %819 = vmatprep.subr.mxu0 0.0
        %820 = vmatpush2.msra.mxu0 0.0
        %821 = vmatprep.subr.mxu0 0.0
        %822 = vmatpush2.msra.mxu0 0.0
        %823 = vmatprep.subr.mxu0 0.0
        %824 = vmatpush2.msra.mxu0 0.0
        %825 = vmatprep.subr.mxu0 0.0
        %826 = vmatpush2.msra.mxu0 0.0
        %827 = vmatprep.subr.mxu0 0.0
        %828 = vmatpush2.msra.mxu0 0.0
        %829 = vmatprep.subr.mxu0 0.0
        %830 = vmatpush2.msra.mxu0 0.0
        %831 = vmatprep.subr.mxu0 0.0
        %832 = vmatpush2.msra.mxu0 0.0
        %833 = vmatprep.subr.mxu0 0.0
        %834 = vmatpush2.msra.mxu0 0.0
        %835 = vmatprep.subr.mxu0 0.0
        %836 = vmatpush2.msra.mxu0 0.0
        %837 = vmatprep.subr.mxu0 0.0
        %838 = vmatpush2.msra.mxu0 0.0
        %839 = vmatprep.subr.mxu0 0.0
        %840 = vmatpush2.msra.mxu0 0.0
        %841 = vmatprep.subr.mxu0 0.0
        %842 = vmatpush2.msra.mxu0 0.0
        %843 = vmatprep.subr.mxu0 0.0
        %844 = vmatpush2.msra.mxu0 0.0
        %845 = vmatprep.subr.mxu0 0.0
        %846 = vmatpush2.msra.mxu0 0.0
        %847 = vmatprep.mubr.f32.mxu0 0.0
        %848 = vmatmul.mubr.f32.gmra.mxu0 %v781
        %v849 = vpop.f32.mrf.mxu0
        %v850 = vadd.f32 0.0, %v849
        %v851 = vpop.f32.mrf.mxu0
        %v852 = vadd.f32 0.0, %v851
        %853 = vdwg.mxu0
        %v854 = vadd.f32 %v777, %v850
        %v855 = vadd.f32 %v778, %v852
        %v856 = vld [vmem:[#allocation3 + $0x28] sm:$0xff]
        %857 = vrot.lane.b32.xlu0 %v281, 127
        %v858 = vpop.permute.xlu0 %857
        %859 = vrot.lane.b32.xlu0 %v283, 127
        %v860 = vpop.permute.xlu0 %859
        %861 = vrot.lane.b32.xlu0 %v285, 127
        %v862 = vpop.permute.xlu0 %861
        %863 = vrot.lane.b32.xlu0 %v287, 127
        %v864 = vpop.permute.xlu0 %863
        %865 = vrot.lane.b32.xlu0 %v282, 127
        %v866 = vpop.permute.xlu0 %865
        %867 = vrot.lane.b32.xlu0 %v284, 127
        %v868 = vpop.permute.xlu0 %867
        %869 = vrot.lane.b32.xlu0 %v286, 127
        %v870 = vpop.permute.xlu0 %869
        %871 = vrot.lane.b32.xlu0 %v288, 127
        %v872 = vpop.permute.xlu0 %871
        %vm873 = vcmp.lt.s32.totalorder %v307, 127
        %v874 = vsel %vm873, %v858, %v866
        %v875 = vsel %vm873, %v860, %v868
        %v876 = vsel %vm873, %v862, %v870
        %v877 = vsel %vm873, %v864, %v872
        %v878 = vsel %vm873, %v866, %v858
        %v879 = vsel %vm873, %v868, %v860
        %v880 = vsel %vm873, %v870, %v862
        %v881 = vsel %vm873, %v872, %v864
        %s882 = scalar_lea.vmem %s1, 5
        %v883 = vld [vmem:[%s882] ss:$8 sm:$0x3]
        %v885 = vlaneseq
        %v886 = vshrl.u32 %v885, 7
        %v887 = vsub.s32 0, %v886
        %v888 = vrot.slane %v883, %v887
        %v889 = vlaneseq
        %v890 = vshrl.u32 %v889, 7
        %v891 = vsub.s32 1, %v890
        %v892 = vrot.slane %v883, %v891
        %v895 = vmul.f32 %v874, %v888
        %v896 = vmul.f32 %v878, %v892
        %v897 = vmul.f32 %v875, %v888
        %v898 = vmul.f32 %v879, %v892
        %v899 = vmul.f32 %v876, %v888
        %v900 = vmul.f32 %v880, %v892
        %v901 = vmul.f32 %v877, %v888
        %v902 = vmul.f32 %v881, %v892
        %v904 = vsel %vm384, %v856, 0
        %906 = vmatprep.subr.mxu0 0.0
        %907 = vmatpush1.msra.mxu0 0.0
        %908 = vmatprep.subr.mxu0 0.0
        %909 = vmatpush1.msra.mxu0 0.0
        %910 = vmatprep.subr.mxu0 0.0
        %911 = vmatpush1.msra.mxu0 0.0
        %912 = vmatprep.subr.mxu0 0.0
        %913 = vmatpush1.msra.mxu0 0.0
        %914 = vmatprep.subr.mxu0 0.0
        %915 = vmatpush1.msra.mxu0 0.0
        %916 = vmatprep.subr.mxu0 0.0
        %917 = vmatpush1.msra.mxu0 0.0
        %918 = vmatprep.subr.mxu0 0.0
        %919 = vmatpush1.msra.mxu0 0.0
        %920 = vmatprep.subr.mxu0 0.0
        %921 = vmatpush1.msra.mxu0 0.0
        %922 = vmatprep.subr.mxu0 0.0
        %923 = vmatpush1.msra.mxu0 0.0
        %924 = vmatprep.subr.mxu0 0.0
        %925 = vmatpush1.msra.mxu0 0.0
        %926 = vmatprep.subr.mxu0 0.0
        %927 = vmatpush1.msra.mxu0 0.0
        %928 = vmatprep.subr.mxu0 0.0
        %929 = vmatpush1.msra.mxu0 0.0
        %930 = vmatprep.subr.mxu0 %v902
        %931 = vmatpush1.msra.mxu0 %v901
        %932 = vmatprep.subr.mxu0 %v900
        %933 = vmatpush1.msra.mxu0 %v899
        %934 = vmatprep.subr.mxu0 %v898
        %935 = vmatpush1.msra.mxu0 %v897
        %936 = vmatprep.subr.mxu0 %v896
        %937 = vmatpush1.msra.mxu0 %v895
        %938 = vmatprep.subr.mxu0 0.0
        %939 = vmatpush2.msra.mxu0 0.0
        %940 = vmatprep.subr.mxu0 0.0
        %941 = vmatpush2.msra.mxu0 0.0
        %942 = vmatprep.subr.mxu0 0.0
        %943 = vmatpush2.msra.mxu0 0.0
        %944 = vmatprep.subr.mxu0 0.0
        %945 = vmatpush2.msra.mxu0 0.0
        %946 = vmatprep.subr.mxu0 0.0
        %947 = vmatpush2.msra.mxu0 0.0
        %948 = vmatprep.subr.mxu0 0.0
        %949 = vmatpush2.msra.mxu0 0.0
        %950 = vmatprep.subr.mxu0 0.0
        %951 = vmatpush2.msra.mxu0 0.0
        %952 = vmatprep.subr.mxu0 0.0
        %953 = vmatpush2.msra.mxu0 0.0
        %954 = vmatprep.subr.mxu0 0.0
        %955 = vmatpush2.msra.mxu0 0.0
        %956 = vmatprep.subr.mxu0 0.0
        %957 = vmatpush2.msra.mxu0 0.0
        %958 = vmatprep.subr.mxu0 0.0
        %959 = vmatpush2.msra.mxu0 0.0
        %960 = vmatprep.subr.mxu0 0.0
        %961 = vmatpush2.msra.mxu0 0.0
        %962 = vmatprep.subr.mxu0 0.0
        %963 = vmatpush2.msra.mxu0 0.0
        %964 = vmatprep.subr.mxu0 0.0
        %965 = vmatpush2.msra.mxu0 0.0
        %966 = vmatprep.subr.mxu0 0.0
        %967 = vmatpush2.msra.mxu0 0.0
        %968 = vmatprep.subr.mxu0 0.0
        %969 = vmatpush2.msra.mxu0 0.0
        %970 = vmatprep.mubr.f32.mxu0 0.0
        %971 = vmatmul.mubr.f32.gmra.mxu0 %v904
        %v972 = vpop.f32.mrf.mxu0
        %v973 = vadd.f32 0.0, %v972
        %v974 = vpop.f32.mrf.mxu0
        %v975 = vadd.f32 0.0, %v974
        %976 = vdwg.mxu0
        %v977 = vadd.f32 %v854, %v973
        %v978 = vadd.f32 %v855, %v975
        %v979 = vld [vmem:[#allocation3 + $0x30] sm:$0xff]
        %980 = vrot.lane.b32.xlu0 %v281, 113
        %v981 = vpop.permute.xlu0 %980
        %982 = vrot.lane.b32.xlu0 %v283, 113
        %v983 = vpop.permute.xlu0 %982
        %984 = vrot.lane.b32.xlu0 %v285, 113
        %v985 = vpop.permute.xlu0 %984
        %986 = vrot.lane.b32.xlu0 %v287, 113
        %v987 = vpop.permute.xlu0 %986
        %988 = vrot.lane.b32.xlu0 %v282, 113
        %v989 = vpop.permute.xlu0 %988
        %990 = vrot.lane.b32.xlu0 %v284, 113
        %v991 = vpop.permute.xlu0 %990
        %992 = vrot.lane.b32.xlu0 %v286, 113
        %v993 = vpop.permute.xlu0 %992
        %994 = vrot.lane.b32.xlu0 %v288, 113
        %v995 = vpop.permute.xlu0 %994
        %vm996 = vcmp.lt.s32.totalorder %v307, 113
        %v997 = vsel %vm996, %v981, %v989
        %v998 = vsel %vm996, %v983, %v991
        %v999 = vsel %vm996, %v985, %v993
        %v1000 = vsel %vm996, %v987, %v995
        %v1001 = vsel %vm996, %v989, %v981
        %v1002 = vsel %vm996, %v991, %v983
        %v1003 = vsel %vm996, %v993, %v985
        %v1004 = vsel %vm996, %v995, %v987
        %s1005 = scalar_lea.vmem %s1, 6
        %v1006 = vld [vmem:[%s1005] ss:$8 sm:$0x3]
        %v1008 = vlaneseq
        %v1009 = vshrl.u32 %v1008, 7
        %v1010 = vsub.s32 0, %v1009
        %v1011 = vrot.slane %v1006, %v1010
        %v1012 = vlaneseq
        %v1013 = vshrl.u32 %v1012, 7
        %v1014 = vsub.s32 1, %v1013
        %v1015 = vrot.slane %v1006, %v1014
        %v1018 = vmul.f32 %v997, %v1011
        %v1019 = vmul.f32 %v1001, %v1015
        %v1020 = vmul.f32 %v998, %v1011
        %v1021 = vmul.f32 %v1002, %v1015
        %v1022 = vmul.f32 %v999, %v1011
        %v1023 = vmul.f32 %v1003, %v1015
        %v1024 = vmul.f32 %v1000, %v1011
        %v1025 = vmul.f32 %v1004, %v1015
        %v1027 = vsel %vm384, %v979, 0
        %1029 = vmatprep.subr.mxu0 0.0
        %1030 = vmatpush1.msra.mxu0 0.0
        %1031 = vmatprep.subr.mxu0 0.0
        %1032 = vmatpush1.msra.mxu0 0.0
        %1033 = vmatprep.subr.mxu0 0.0
        %1034 = vmatpush1.msra.mxu0 0.0
        %1035 = vmatprep.subr.mxu0 0.0
        %1036 = vmatpush1.msra.mxu0 0.0
        %1037 = vmatprep.subr.mxu0 0.0
        %1038 = vmatpush1.msra.mxu0 0.0
        %1039 = vmatprep.subr.mxu0 0.0
        %1040 = vmatpush1.msra.mxu0 0.0
        %1041 = vmatprep.subr.mxu0 0.0
        %1042 = vmatpush1.msra.mxu0 0.0
        %1043 = vmatprep.subr.mxu0 0.0
        %1044 = vmatpush1.msra.mxu0 0.0
        %1045 = vmatprep.subr.mxu0 0.0
        %1046 = vmatpush1.msra.mxu0 0.0
        %1047 = vmatprep.subr.mxu0 0.0
        %1048 = vmatpush1.msra.mxu0 0.0
        %1049 = vmatprep.subr.mxu0 0.0
        %1050 = vmatpush1.msra.mxu0 0.0
        %1051 = vmatprep.subr.mxu0 0.0
        %1052 = vmatpush1.msra.mxu0 0.0
        %1053 = vmatprep.subr.mxu0 %v1025
        %1054 = vmatpush1.msra.mxu0 %v1024
        %1055 = vmatprep.subr.mxu0 %v1023
        %1056 = vmatpush1.msra.mxu0 %v1022
        %1057 = vmatprep.subr.mxu0 %v1021
        %1058 = vmatpush1.msra.mxu0 %v1020
        %1059 = vmatprep.subr.mxu0 %v1019
        %1060 = vmatpush1.msra.mxu0 %v1018
        %1061 = vmatprep.subr.mxu0 0.0
        %1062 = vmatpush2.msra.mxu0 0.0
        %1063 = vmatprep.subr.mxu0 0.0
        %1064 = vmatpush2.msra.mxu0 0.0
        %1065 = vmatprep.subr.mxu0 0.0
        %1066 = vmatpush2.msra.mxu0 0.0
        %1067 = vmatprep.subr.mxu0 0.0
        %1068 = vmatpush2.msra.mxu0 0.0
        %1069 = vmatprep.subr.mxu0 0.0
        %1070 = vmatpush2.msra.mxu0 0.0
        %1071 = vmatprep.subr.mxu0 0.0
        %1072 = vmatpush2.msra.mxu0 0.0
        %1073 = vmatprep.subr.mxu0 0.0
        %1074 = vmatpush2.msra.mxu0 0.0
        %1075 = vmatprep.subr.mxu0 0.0
        %1076 = vmatpush2.msra.mxu0 0.0
        %1077 = vmatprep.subr.mxu0 0.0
        %1078 = vmatpush2.msra.mxu0 0.0
        %1079 = vmatprep.subr.mxu0 0.0
        %1080 = vmatpush2.msra.mxu0 0.0
        %1081 = vmatprep.subr.mxu0 0.0
        %1082 = vmatpush2.msra.mxu0 0.0
        %1083 = vmatprep.subr.mxu0 0.0
        %1084 = vmatpush2.msra.mxu0 0.0
        %1085 = vmatprep.subr.mxu0 0.0
        %1086 = vmatpush2.msra.mxu0 0.0
        %1087 = vmatprep.subr.mxu0 0.0
        %1088 = vmatpush2.msra.mxu0 0.0
        %1089 = vmatprep.subr.mxu0 0.0
        %1090 = vmatpush2.msra.mxu0 0.0
        %1091 = vmatprep.subr.mxu0 0.0
        %1092 = vmatpush2.msra.mxu0 0.0
        %1093 = vmatprep.mubr.f32.mxu0 0.0
        %1094 = vmatmul.mubr.f32.gmra.mxu0 %v1027
        %v1095 = vpop.f32.mrf.mxu0
        %v1096 = vadd.f32 0.0, %v1095
        %v1097 = vpop.f32.mrf.mxu0
        %v1098 = vadd.f32 0.0, %v1097
        %1099 = vdwg.mxu0
        %v1100 = vadd.f32 %v977, %v1096
        %v1101 = vadd.f32 %v978, %v1098
        %v1102 = vld [vmem:[#allocation3 + $0x38] sm:$0xff]
        %1103 = vrot.lane.b32.xlu0 %v281, 112
        %v1104 = vpop.permute.xlu0 %1103
        %1105 = vrot.lane.b32.xlu0 %v283, 112
        %v1106 = vpop.permute.xlu0 %1105
        %1107 = vrot.lane.b32.xlu0 %v285, 112
        %v1108 = vpop.permute.xlu0 %1107
        %1109 = vrot.lane.b32.xlu0 %v287, 112
        %v1110 = vpop.permute.xlu0 %1109
        %1111 = vrot.lane.b32.xlu0 %v282, 112
        %v1112 = vpop.permute.xlu0 %1111
        %1113 = vrot.lane.b32.xlu0 %v284, 112
        %v1114 = vpop.permute.xlu0 %1113
        %1115 = vrot.lane.b32.xlu0 %v286, 112
        %v1116 = vpop.permute.xlu0 %1115
        %1117 = vrot.lane.b32.xlu0 %v288, 112
        %v1118 = vpop.permute.xlu0 %1117
        %vm1119 = vcmp.lt.s32.totalorder %v307, 112
        %v1120 = vsel %vm1119, %v1104, %v1112
        %v1121 = vsel %vm1119, %v1106, %v1114
        %v1122 = vsel %vm1119, %v1108, %v1116
        %v1123 = vsel %vm1119, %v1110, %v1118
        %v1124 = vsel %vm1119, %v1112, %v1104
        %v1125 = vsel %vm1119, %v1114, %v1106
        %v1126 = vsel %vm1119, %v1116, %v1108
        %v1127 = vsel %vm1119, %v1118, %v1110
        %s1128 = scalar_lea.vmem %s1, 7
        %v1129 = vld [vmem:[%s1128] ss:$8 sm:$0x3]
        %v1131 = vlaneseq
        %v1132 = vshrl.u32 %v1131, 7
        %v1133 = vsub.s32 0, %v1132
        %v1134 = vrot.slane %v1129, %v1133
        %v1135 = vlaneseq
        %v1136 = vshrl.u32 %v1135, 7
        %v1137 = vsub.s32 1, %v1136
        %v1138 = vrot.slane %v1129, %v1137
        %v1141 = vmul.f32 %v1120, %v1134
        %v1142 = vmul.f32 %v1124, %v1138
        %v1143 = vmul.f32 %v1121, %v1134
        %v1144 = vmul.f32 %v1125, %v1138
        %v1145 = vmul.f32 %v1122, %v1134
        %v1146 = vmul.f32 %v1126, %v1138
        %v1147 = vmul.f32 %v1123, %v1134
        %v1148 = vmul.f32 %v1127, %v1138
        %v1150 = vsel %vm384, %v1102, 0
        %1152 = vmatprep.subr.mxu0 0.0
        %1153 = vmatpush1.msra.mxu0 0.0
        %1154 = vmatprep.subr.mxu0 0.0
        %1155 = vmatpush1.msra.mxu0 0.0
        %1156 = vmatprep.subr.mxu0 0.0
        %1157 = vmatpush1.msra.mxu0 0.0
        %1158 = vmatprep.subr.mxu0 0.0
        %1159 = vmatpush1.msra.mxu0 0.0
        %1160 = vmatprep.subr.mxu0 0.0
        %1161 = vmatpush1.msra.mxu0 0.0
        %1162 = vmatprep.subr.mxu0 0.0
        %1163 = vmatpush1.msra.mxu0 0.0
        %1164 = vmatprep.subr.mxu0 0.0
        %1165 = vmatpush1.msra.mxu0 0.0
        %1166 = vmatprep.subr.mxu0 0.0
        %1167 = vmatpush1.msra.mxu0 0.0
        %1168 = vmatprep.subr.mxu0 0.0
        %1169 = vmatpush1.msra.mxu0 0.0
        %1170 = vmatprep.subr.mxu0 0.0
        %1171 = vmatpush1.msra.mxu0 0.0
        %1172 = vmatprep.subr.mxu0 0.0
        %1173 = vmatpush1.msra.mxu0 0.0
        %1174 = vmatprep.subr.mxu0 0.0
        %1175 = vmatpush1.msra.mxu0 0.0
        %1176 = vmatprep.subr.mxu0 %v1148
        %1177 = vmatpush1.msra.mxu0 %v1147
        %1178 = vmatprep.subr.mxu0 %v1146
        %1179 = vmatpush1.msra.mxu0 %v1145
        %1180 = vmatprep.subr.mxu0 %v1144
        %1181 = vmatpush1.msra.mxu0 %v1143
        %1182 = vmatprep.subr.mxu0 %v1142
        %1183 = vmatpush1.msra.mxu0 %v1141
        %1184 = vmatprep.subr.mxu0 0.0
        %1185 = vmatpush2.msra.mxu0 0.0
        %1186 = vmatprep.subr.mxu0 0.0
        %1187 = vmatpush2.msra.mxu0 0.0
        %1188 = vmatprep.subr.mxu0 0.0
        %1189 = vmatpush2.msra.mxu0 0.0
        %1190 = vmatprep.subr.mxu0 0.0
        %1191 = vmatpush2.msra.mxu0 0.0
        %1192 = vmatprep.subr.mxu0 0.0
        %1193 = vmatpush2.msra.mxu0 0.0
        %1194 = vmatprep.subr.mxu0 0.0
        %1195 = vmatpush2.msra.mxu0 0.0
        %1196 = vmatprep.subr.mxu0 0.0
        %1197 = vmatpush2.msra.mxu0 0.0
        %1198 = vmatprep.subr.mxu0 0.0
        %1199 = vmatpush2.msra.mxu0 0.0
        %1200 = vmatprep.subr.mxu0 0.0
        %1201 = vmatpush2.msra.mxu0 0.0
        %1202 = vmatprep.subr.mxu0 0.0
        %1203 = vmatpush2.msra.mxu0 0.0
        %1204 = vmatprep.subr.mxu0 0.0
        %1205 = vmatpush2.msra.mxu0 0.0
        %1206 = vmatprep.subr.mxu0 0.0
        %1207 = vmatpush2.msra.mxu0 0.0
        %1208 = vmatprep.subr.mxu0 0.0
        %1209 = vmatpush2.msra.mxu0 0.0
        %1210 = vmatprep.subr.mxu0 0.0
        %1211 = vmatpush2.msra.mxu0 0.0
        %1212 = vmatprep.subr.mxu0 0.0
        %1213 = vmatpush2.msra.mxu0 0.0
        %1214 = vmatprep.subr.mxu0 0.0
        %1215 = vmatpush2.msra.mxu0 0.0
        %1216 = vmatprep.mubr.f32.mxu0 0.0
        %1217 = vmatmul.mubr.f32.gmra.mxu0 %v1150
        %v1218 = vpop.f32.mrf.mxu0
        %v1219 = vadd.f32 0.0, %v1218
        %v1220 = vpop.f32.mrf.mxu0
        %v1221 = vadd.f32 0.0, %v1220
        %1222 = vdwg.mxu0
        %v1223 = vadd.f32 %v1100, %v1219
        %v1224 = vadd.f32 %v1101, %v1221
        %v1225 = vld [vmem:[#allocation3 + $0x40] sm:$0xff]
        %1226 = vrot.lane.b32.xlu0 %v281, 111
        %v1227 = vpop.permute.xlu0 %1226
        %1228 = vrot.lane.b32.xlu0 %v283, 111
        %v1229 = vpop.permute.xlu0 %1228
        %1230 = vrot.lane.b32.xlu0 %v285, 111
        %v1231 = vpop.permute.xlu0 %1230
        %1232 = vrot.lane.b32.xlu0 %v287, 111
        %v1233 = vpop.permute.xlu0 %1232
        %1234 = vrot.lane.b32.xlu0 %v282, 111
        %v1235 = vpop.permute.xlu0 %1234
        %1236 = vrot.lane.b32.xlu0 %v284, 111
        %v1237 = vpop.permute.xlu0 %1236
        %1238 = vrot.lane.b32.xlu0 %v286, 111
        %v1239 = vpop.permute.xlu0 %1238
        %1240 = vrot.lane.b32.xlu0 %v288, 111
        %v1241 = vpop.permute.xlu0 %1240
        %vm1242 = vcmp.lt.s32.totalorder %v307, 111
        %v1243 = vsel %vm1242, %v1227, %v1235
        %v1244 = vsel %vm1242, %v1229, %v1237
        %v1245 = vsel %vm1242, %v1231, %v1239
        %v1246 = vsel %vm1242, %v1233, %v1241
        %v1247 = vsel %vm1242, %v1235, %v1227
        %v1248 = vsel %vm1242, %v1237, %v1229
        %v1249 = vsel %vm1242, %v1239, %v1231
        %v1250 = vsel %vm1242, %v1241, %v1233
        %s1251 = scalar_lea.vmem %s1, 16
        %v1252 = vld [vmem:[%s1251] ss:$8 sm:$0x3]
        %v1254 = vlaneseq
        %v1255 = vshrl.u32 %v1254, 7
        %v1256 = vsub.s32 0, %v1255
        %v1257 = vrot.slane %v1252, %v1256
        %v1258 = vlaneseq
        %v1259 = vshrl.u32 %v1258, 7
        %v1260 = vsub.s32 1, %v1259
        %v1261 = vrot.slane %v1252, %v1260
        %v1264 = vmul.f32 %v1243, %v1257
        %v1265 = vmul.f32 %v1247, %v1261
        %v1266 = vmul.f32 %v1244, %v1257
        %v1267 = vmul.f32 %v1248, %v1261
        %v1268 = vmul.f32 %v1245, %v1257
        %v1269 = vmul.f32 %v1249, %v1261
        %v1270 = vmul.f32 %v1246, %v1257
        %v1271 = vmul.f32 %v1250, %v1261
        %v1273 = vsel %vm384, %v1225, 0
        %1275 = vmatprep.subr.mxu0 0.0
        %1276 = vmatpush1.msra.mxu0 0.0
        %1277 = vmatprep.subr.mxu0 0.0
        %1278 = vmatpush1.msra.mxu0 0.0
        %1279 = vmatprep.subr.mxu0 0.0
        %1280 = vmatpush1.msra.mxu0 0.0
        %1281 = vmatprep.subr.mxu0 0.0
        %1282 = vmatpush1.msra.mxu0 0.0
        %1283 = vmatprep.subr.mxu0 0.0
        %1284 = vmatpush1.msra.mxu0 0.0
        %1285 = vmatprep.subr.mxu0 0.0
        %1286 = vmatpush1.msra.mxu0 0.0
        %1287 = vmatprep.subr.mxu0 0.0
        %1288 = vmatpush1.msra.mxu0 0.0
        %1289 = vmatprep.subr.mxu0 0.0
        %1290 = vmatpush1.msra.mxu0 0.0
        %1291 = vmatprep.subr.mxu0 0.0
        %1292 = vmatpush1.msra.mxu0 0.0
        %1293 = vmatprep.subr.mxu0 0.0
        %1294 = vmatpush1.msra.mxu0 0.0
        %1295 = vmatprep.subr.mxu0 0.0
        %1296 = vmatpush1.msra.mxu0 0.0
        %1297 = vmatprep.subr.mxu0 0.0
        %1298 = vmatpush1.msra.mxu0 0.0
        %1299 = vmatprep.subr.mxu0 %v1271
        %1300 = vmatpush1.msra.mxu0 %v1270
        %1301 = vmatprep.subr.mxu0 %v1269
        %1302 = vmatpush1.msra.mxu0 %v1268
        %1303 = vmatprep.subr.mxu0 %v1267
        %1304 = vmatpush1.msra.mxu0 %v1266
        %1305 = vmatprep.subr.mxu0 %v1265
        %1306 = vmatpush1.msra.mxu0 %v1264
        %1307 = vmatprep.subr.mxu0 0.0
        %1308 = vmatpush2.msra.mxu0 0.0
        %1309 = vmatprep.subr.mxu0 0.0
        %1310 = vmatpush2.msra.mxu0 0.0
        %1311 = vmatprep.subr.mxu0 0.0
        %1312 = vmatpush2.msra.mxu0 0.0
        %1313 = vmatprep.subr.mxu0 0.0
        %1314 = vmatpush2.msra.mxu0 0.0
        %1315 = vmatprep.subr.mxu0 0.0
        %1316 = vmatpush2.msra.mxu0 0.0
        %1317 = vmatprep.subr.mxu0 0.0
        %1318 = vmatpush2.msra.mxu0 0.0
        %1319 = vmatprep.subr.mxu0 0.0
        %1320 = vmatpush2.msra.mxu0 0.0
        %1321 = vmatprep.subr.mxu0 0.0
        %1322 = vmatpush2.msra.mxu0 0.0
        %1323 = vmatprep.subr.mxu0 0.0
        %1324 = vmatpush2.msra.mxu0 0.0
        %1325 = vmatprep.subr.mxu0 0.0
        %1326 = vmatpush2.msra.mxu0 0.0
        %1327 = vmatprep.subr.mxu0 0.0
        %1328 = vmatpush2.msra.mxu0 0.0
        %1329 = vmatprep.subr.mxu0 0.0
        %1330 = vmatpush2.msra.mxu0 0.0
        %1331 = vmatprep.subr.mxu0 0.0
        %1332 = vmatpush2.msra.mxu0 0.0
        %1333 = vmatprep.subr.mxu0 0.0
        %1334 = vmatpush2.msra.mxu0 0.0
        %1335 = vmatprep.subr.mxu0 0.0
        %1336 = vmatpush2.msra.mxu0 0.0
        %1337 = vmatprep.subr.mxu0 0.0
        %1338 = vmatpush2.msra.mxu0 0.0
        %1339 = vmatprep.mubr.f32.mxu0 0.0
        %1340 = vmatmul.mubr.f32.gmra.mxu0 %v1273
        %v1341 = vpop.f32.mrf.mxu0
        %v1342 = vadd.f32 0.0, %v1341
        %v1343 = vpop.f32.mrf.mxu0
        %v1344 = vadd.f32 0.0, %v1343
        %1345 = vdwg.mxu0
        %v1346 = vadd.f32 %v1223, %v1342
        %v1347 = vadd.f32 %v1224, %v1344
        %v1348 = vld [vmem:[%s3] sm:$0xff]
        %1350 = vset.pattern.permute.xlu0 0
        %1351 = vperm.xlu0 %1350, %v1348
        %v1352 = vpop.permute.xlu0 %1351
        %v1354 = vadd.f32 %v1346, %v1352
        %v1355 = vadd.f32 %v1347, %v1352
        %v1356 = vmax.f32 %v1354, 0.0
        %v1357 = vmax.f32 %v1355, 0.0
        %1358 = vst [vmem:[#allocation2] sm:$0xff] %v1356
        %1359 = vst [vmem:[#allocation2 + $0x8] sm:$0xff] %v1357
        %v1360 = vld [vmem:[#allocation2] sm:$0xff]
        %v1361 = vld [vmem:[#allocation2 + $0x8] sm:$0xff]
        %v1362 = vld [vmem:[#allocation2 + $0x10] sm:$0xff]
        %v1363 = vld [vmem:[#allocation2 + $0x18] sm:$0xff]
        %v1364 = vld [vmem:[#allocation2 + $0x20] sm:$0xff]
        %v1365 = vld [vmem:[#allocation2 + $0x28] sm:$0xff]
        %v1366 = vld [vmem:[#allocation2 + $0x30] sm:$0xff]
        %v1367 = vld [vmem:[#allocation2 + $0x38] sm:$0xff]
        %v1368 = vld [vmem:[#allocation3 + $0x48] sm:$0xff]
        %1369 = vrot.lane.b32.xlu0 %v1360, 34
        %v1370 = vpop.permute.xlu0 %1369
        %1371 = vrot.lane.b32.xlu0 %v1362, 34
        %v1372 = vpop.permute.xlu0 %1371
        %1373 = vrot.lane.b32.xlu0 %v1364, 34
        %v1374 = vpop.permute.xlu0 %1373
        %1375 = vrot.lane.b32.xlu0 %v1366, 34
        %v1376 = vpop.permute.xlu0 %1375
        %1377 = vrot.lane.b32.xlu0 %v1361, 34
        %v1378 = vpop.permute.xlu0 %1377
        %1379 = vrot.lane.b32.xlu0 %v1363, 34
        %v1380 = vpop.permute.xlu0 %1379
        %1381 = vrot.lane.b32.xlu0 %v1365, 34
        %v1382 = vpop.permute.xlu0 %1381
        %1383 = vrot.lane.b32.xlu0 %v1367, 34
        %v1384 = vpop.permute.xlu0 %1383
        %vm1385 = vcmp.lt.s32.totalorder %v307, 34
        %v1386 = vsel %vm1385, %v1370, %v1378
        %v1387 = vsel %vm1385, %v1372, %v1380
        %v1388 = vsel %vm1385, %v1374, %v1382
        %v1389 = vsel %vm1385, %v1376, %v1384
        %v1390 = vsel %vm1385, %v1378, %v1370
        %v1391 = vsel %vm1385, %v1380, %v1372
        %v1392 = vsel %vm1385, %v1382, %v1374
        %v1393 = vsel %vm1385, %v1384, %v1376
        %s1394 = scalar_lea.vmem %s1, 17
        %v1395 = vld [vmem:[%s1394] ss:$8 sm:$0x3]
        %v1397 = vlaneseq
        %v1398 = vshrl.u32 %v1397, 7
        %v1399 = vsub.s32 0, %v1398
        %v1400 = vrot.slane %v1395, %v1399
        %v1401 = vlaneseq
        %v1402 = vshrl.u32 %v1401, 7
        %v1403 = vsub.s32 1, %v1402
        %v1404 = vrot.slane %v1395, %v1403
        %v1407 = vmul.f32 %v1390, %v1400
        %v1408 = vmul.f32 %v1386, %v1404
        %v1409 = vmul.f32 %v1391, %v1400
        %v1410 = vmul.f32 %v1387, %v1404
        %v1411 = vmul.f32 %v1392, %v1400
        %v1412 = vmul.f32 %v1388, %v1404
        %v1413 = vmul.f32 %v1393, %v1400
        %v1414 = vmul.f32 %v1389, %v1404
        %v1415 = vld [vmem:[#allocation3 + $0x50] sm:$0xff]
        %1416 = vrot.lane.b32.xlu0 %v1360, 32
        %v1417 = vpop.permute.xlu0 %1416
        %1418 = vrot.lane.b32.xlu0 %v1362, 32
        %v1419 = vpop.permute.xlu0 %1418
        %1420 = vrot.lane.b32.xlu0 %v1364, 32
        %v1421 = vpop.permute.xlu0 %1420
        %1422 = vrot.lane.b32.xlu0 %v1366, 32
        %v1423 = vpop.permute.xlu0 %1422
        %1424 = vrot.lane.b32.xlu0 %v1361, 32
        %v1425 = vpop.permute.xlu0 %1424
        %1426 = vrot.lane.b32.xlu0 %v1363, 32
        %v1427 = vpop.permute.xlu0 %1426
        %1428 = vrot.lane.b32.xlu0 %v1365, 32
        %v1429 = vpop.permute.xlu0 %1428
        %1430 = vrot.lane.b32.xlu0 %v1367, 32
        %v1431 = vpop.permute.xlu0 %1430
        %vm1432 = vcmp.lt.s32.totalorder %v307, 32
        %v1433 = vsel %vm1432, %v1417, %v1425
        %v1434 = vsel %vm1432, %v1419, %v1427
        %v1435 = vsel %vm1432, %v1421, %v1429
        %v1436 = vsel %vm1432, %v1423, %v1431
        %v1437 = vsel %vm1432, %v1425, %v1417
        %v1438 = vsel %vm1432, %v1427, %v1419
        %v1439 = vsel %vm1432, %v1429, %v1421
        %v1440 = vsel %vm1432, %v1431, %v1423
        %s1441 = scalar_lea.vmem %s1, 18
        %v1442 = vld [vmem:[%s1441] ss:$8 sm:$0x3]
        %v1444 = vlaneseq
        %v1445 = vshrl.u32 %v1444, 7
        %v1446 = vsub.s32 0, %v1445
        %v1447 = vrot.slane %v1442, %v1446
        %v1448 = vlaneseq
        %v1449 = vshrl.u32 %v1448, 7
        %v1450 = vsub.s32 1, %v1449
        %v1451 = vrot.slane %v1442, %v1450
        %v1454 = vmul.f32 %v1437, %v1447
        %v1455 = vmul.f32 %v1433, %v1451
        %v1456 = vmul.f32 %v1438, %v1447
        %v1457 = vmul.f32 %v1434, %v1451
        %v1458 = vmul.f32 %v1439, %v1447
        %v1459 = vmul.f32 %v1435, %v1451
        %v1460 = vmul.f32 %v1440, %v1447
        %v1461 = vmul.f32 %v1436, %v1451
        %v1463 = vsel %vm384, %v1415, 0
        %1465 = vmatprep.subr.mxu0 0.0
        %1466 = vmatpush1.msra.mxu0 0.0
        %1467 = vmatprep.subr.mxu0 0.0
        %1468 = vmatpush1.msra.mxu0 0.0
        %1469 = vmatprep.subr.mxu0 0.0
        %1470 = vmatpush1.msra.mxu0 0.0
        %1471 = vmatprep.subr.mxu0 0.0
        %1472 = vmatpush1.msra.mxu0 0.0
        %1473 = vmatprep.subr.mxu0 0.0
        %1474 = vmatpush1.msra.mxu0 0.0
        %1475 = vmatprep.subr.mxu0 0.0
        %1476 = vmatpush1.msra.mxu0 0.0
        %1477 = vmatprep.subr.mxu0 0.0
        %1478 = vmatpush1.msra.mxu0 0.0
        %1479 = vmatprep.subr.mxu0 0.0
        %1480 = vmatpush1.msra.mxu0 0.0
        %1481 = vmatprep.subr.mxu0 0.0
        %1482 = vmatpush1.msra.mxu0 0.0
        %1483 = vmatprep.subr.mxu0 0.0
        %1484 = vmatpush1.msra.mxu0 0.0
        %1485 = vmatprep.subr.mxu0 0.0
        %1486 = vmatpush1.msra.mxu0 0.0
        %1487 = vmatprep.subr.mxu0 0.0
        %1488 = vmatpush1.msra.mxu0 0.0
        %1489 = vmatprep.subr.mxu0 %v1461
        %1490 = vmatpush1.msra.mxu0 %v1460
        %1491 = vmatprep.subr.mxu0 %v1459
        %1492 = vmatpush1.msra.mxu0 %v1458
        %1493 = vmatprep.subr.mxu0 %v1457
        %1494 = vmatpush1.msra.mxu0 %v1456
        %1495 = vmatprep.subr.mxu0 %v1455
        %1496 = vmatpush1.msra.mxu0 %v1454
        %1497 = vmatprep.subr.mxu0 0.0
        %1498 = vmatpush2.msra.mxu0 0.0
        %1499 = vmatprep.subr.mxu0 0.0
        %1500 = vmatpush2.msra.mxu0 0.0
        %1501 = vmatprep.subr.mxu0 0.0
        %1502 = vmatpush2.msra.mxu0 0.0
        %1503 = vmatprep.subr.mxu0 0.0
        %1504 = vmatpush2.msra.mxu0 0.0
        %1505 = vmatprep.subr.mxu0 0.0
        %1506 = vmatpush2.msra.mxu0 0.0
        %1507 = vmatprep.subr.mxu0 0.0
        %1508 = vmatpush2.msra.mxu0 0.0
        %1509 = vmatprep.subr.mxu0 0.0
        %1510 = vmatpush2.msra.mxu0 0.0
        %1511 = vmatprep.subr.mxu0 0.0
        %1512 = vmatpush2.msra.mxu0 0.0
        %1513 = vmatprep.subr.mxu0 0.0
        %1514 = vmatpush2.msra.mxu0 0.0
        %1515 = vmatprep.subr.mxu0 0.0
        %1516 = vmatpush2.msra.mxu0 0.0
        %1517 = vmatprep.subr.mxu0 0.0
        %1518 = vmatpush2.msra.mxu0 0.0
        %1519 = vmatprep.subr.mxu0 0.0
        %1520 = vmatpush2.msra.mxu0 0.0
        %1521 = vmatprep.subr.mxu0 0.0
        %1522 = vmatpush2.msra.mxu0 0.0
        %1523 = vmatprep.subr.mxu0 0.0
        %1524 = vmatpush2.msra.mxu0 0.0
        %1525 = vmatprep.subr.mxu0 0.0
        %1526 = vmatpush2.msra.mxu0 0.0
        %1527 = vmatprep.subr.mxu0 0.0
        %1528 = vmatpush2.msra.mxu0 0.0
        %1529 = vmatprep.mubr.f32.mxu0 0.0
        %1530 = vmatmul.mubr.f32.gmra.mxu0 %v1463
        %v1531 = vpop.f32.mrf.mxu0
        %v1532 = vadd.f32 0.0, %v1531
        %v1533 = vpop.f32.mrf.mxu0
        %v1534 = vadd.f32 0.0, %v1533
        %1535 = vdwg.mxu0
        %v1537 = vsel %vm384, %v1368, 0
        %1539 = vmatprep.subr.mxu0 0.0
        %1540 = vmatpush1.msra.mxu0 0.0
        %1541 = vmatprep.subr.mxu0 0.0
        %1542 = vmatpush1.msra.mxu0 0.0
        %1543 = vmatprep.subr.mxu0 0.0
        %1544 = vmatpush1.msra.mxu0 0.0
        %1545 = vmatprep.subr.mxu0 0.0
        %1546 = vmatpush1.msra.mxu0 0.0
        %1547 = vmatprep.subr.mxu0 0.0
        %1548 = vmatpush1.msra.mxu0 0.0
        %1549 = vmatprep.subr.mxu0 0.0
        %1550 = vmatpush1.msra.mxu0 0.0
        %1551 = vmatprep.subr.mxu0 0.0
        %1552 = vmatpush1.msra.mxu0 0.0
        %1553 = vmatprep.subr.mxu0 0.0
        %1554 = vmatpush1.msra.mxu0 0.0
        %1555 = vmatprep.subr.mxu0 0.0
        %1556 = vmatpush1.msra.mxu0 0.0
        %1557 = vmatprep.subr.mxu0 0.0
        %1558 = vmatpush1.msra.mxu0 0.0
        %1559 = vmatprep.subr.mxu0 0.0
        %1560 = vmatpush1.msra.mxu0 0.0
        %1561 = vmatprep.subr.mxu0 0.0
        %1562 = vmatpush1.msra.mxu0 0.0
        %1563 = vmatprep.subr.mxu0 %v1414
        %1564 = vmatpush1.msra.mxu0 %v1413
        %1565 = vmatprep.subr.mxu0 %v1412
        %1566 = vmatpush1.msra.mxu0 %v1411
        %1567 = vmatprep.subr.mxu0 %v1410
        %1568 = vmatpush1.msra.mxu0 %v1409
        %1569 = vmatprep.subr.mxu0 %v1408
        %1570 = vmatpush1.msra.mxu0 %v1407
        %1571 = vmatprep.subr.mxu0 0.0
        %1572 = vmatpush2.msra.mxu0 0.0
        %1573 = vmatprep.subr.mxu0 0.0
        %1574 = vmatpush2.msra.mxu0 0.0
        %1575 = vmatprep.subr.mxu0 0.0
        %1576 = vmatpush2.msra.mxu0 0.0
        %1577 = vmatprep.subr.mxu0 0.0
        %1578 = vmatpush2.msra.mxu0 0.0
        %1579 = vmatprep.subr.mxu0 0.0
        %1580 = vmatpush2.msra.mxu0 0.0
        %1581 = vmatprep.subr.mxu0 0.0
        %1582 = vmatpush2.msra.mxu0 0.0
        %1583 = vmatprep.subr.mxu0 0.0
        %1584 = vmatpush2.msra.mxu0 0.0
        %1585 = vmatprep.subr.mxu0 0.0
        %1586 = vmatpush2.msra.mxu0 0.0
        %1587 = vmatprep.subr.mxu0 0.0
        %1588 = vmatpush2.msra.mxu0 0.0
        %1589 = vmatprep.subr.mxu0 0.0
        %1590 = vmatpush2.msra.mxu0 0.0
        %1591 = vmatprep.subr.mxu0 0.0
        %1592 = vmatpush2.msra.mxu0 0.0
        %1593 = vmatprep.subr.mxu0 0.0
        %1594 = vmatpush2.msra.mxu0 0.0
        %1595 = vmatprep.subr.mxu0 0.0
        %1596 = vmatpush2.msra.mxu0 0.0
        %1597 = vmatprep.subr.mxu0 0.0
        %1598 = vmatpush2.msra.mxu0 0.0
        %1599 = vmatprep.subr.mxu0 0.0
        %1600 = vmatpush2.msra.mxu0 0.0
        %1601 = vmatprep.subr.mxu0 0.0
        %1602 = vmatpush2.msra.mxu0 0.0
        %1603 = vmatprep.mubr.f32.mxu0 0.0
        %1604 = vmatmul.mubr.f32.gmra.mxu0 %v1537
        %v1605 = vpop.f32.mrf.mxu0
        %v1606 = vadd.f32 %v1532, %v1605
        %v1607 = vpop.f32.mrf.mxu0
        %v1608 = vadd.f32 %v1534, %v1607
        %1609 = vdwg.mxu0
        %v1610 = vld [vmem:[#allocation3 + $0x58] sm:$0xff]
        %1611 = vrot.lane.b32.xlu0 %v1360, 30
        %v1612 = vpop.permute.xlu0 %1611
        %1613 = vrot.lane.b32.xlu0 %v1362, 30
        %v1614 = vpop.permute.xlu0 %1613
        %1615 = vrot.lane.b32.xlu0 %v1364, 30
        %v1616 = vpop.permute.xlu0 %1615
        %1617 = vrot.lane.b32.xlu0 %v1366, 30
        %v1618 = vpop.permute.xlu0 %1617
        %1619 = vrot.lane.b32.xlu0 %v1361, 30
        %v1620 = vpop.permute.xlu0 %1619
        %1621 = vrot.lane.b32.xlu0 %v1363, 30
        %v1622 = vpop.permute.xlu0 %1621
        %1623 = vrot.lane.b32.xlu0 %v1365, 30
        %v1624 = vpop.permute.xlu0 %1623
        %1625 = vrot.lane.b32.xlu0 %v1367, 30
        %v1626 = vpop.permute.xlu0 %1625
        %vm1627 = vcmp.lt.s32.totalorder %v307, 30
        %v1628 = vsel %vm1627, %v1612, %v1620
        %v1629 = vsel %vm1627, %v1614, %v1622
        %v1630 = vsel %vm1627, %v1616, %v1624
        %v1631 = vsel %vm1627, %v1618, %v1626
        %v1632 = vsel %vm1627, %v1620, %v1612
        %v1633 = vsel %vm1627, %v1622, %v1614
        %v1634 = vsel %vm1627, %v1624, %v1616
        %v1635 = vsel %vm1627, %v1626, %v1618
        %s1636 = scalar_lea.vmem %s1, 19
        %v1637 = vld [vmem:[%s1636] ss:$8 sm:$0x3]
        %v1639 = vlaneseq
        %v1640 = vshrl.u32 %v1639, 7
        %v1641 = vsub.s32 0, %v1640
        %v1642 = vrot.slane %v1637, %v1641
        %v1643 = vlaneseq
        %v1644 = vshrl.u32 %v1643, 7
        %v1645 = vsub.s32 1, %v1644
        %v1646 = vrot.slane %v1637, %v1645
        %v1649 = vmul.f32 %v1632, %v1642
        %v1650 = vmul.f32 %v1628, %v1646
        %v1651 = vmul.f32 %v1633, %v1642
        %v1652 = vmul.f32 %v1629, %v1646
        %v1653 = vmul.f32 %v1634, %v1642
        %v1654 = vmul.f32 %v1630, %v1646
        %v1655 = vmul.f32 %v1635, %v1642
        %v1656 = vmul.f32 %v1631, %v1646
        %v1658 = vsel %vm384, %v1610, 0
        %1660 = vmatprep.subr.mxu0 0.0
        %1661 = vmatpush1.msra.mxu0 0.0
        %1662 = vmatprep.subr.mxu0 0.0
        %1663 = vmatpush1.msra.mxu0 0.0
        %1664 = vmatprep.subr.mxu0 0.0
        %1665 = vmatpush1.msra.mxu0 0.0
        %1666 = vmatprep.subr.mxu0 0.0
        %1667 = vmatpush1.msra.mxu0 0.0
        %1668 = vmatprep.subr.mxu0 0.0
        %1669 = vmatpush1.msra.mxu0 0.0
        %1670 = vmatprep.subr.mxu0 0.0
        %1671 = vmatpush1.msra.mxu0 0.0
        %1672 = vmatprep.subr.mxu0 0.0
        %1673 = vmatpush1.msra.mxu0 0.0
        %1674 = vmatprep.subr.mxu0 0.0
        %1675 = vmatpush1.msra.mxu0 0.0
        %1676 = vmatprep.subr.mxu0 0.0
        %1677 = vmatpush1.msra.mxu0 0.0
        %1678 = vmatprep.subr.mxu0 0.0
        %1679 = vmatpush1.msra.mxu0 0.0
        %1680 = vmatprep.subr.mxu0 0.0
        %1681 = vmatpush1.msra.mxu0 0.0
        %1682 = vmatprep.subr.mxu0 0.0
        %1683 = vmatpush1.msra.mxu0 0.0
        %1684 = vmatprep.subr.mxu0 %v1656
        %1685 = vmatpush1.msra.mxu0 %v1655
        %1686 = vmatprep.subr.mxu0 %v1654
        %1687 = vmatpush1.msra.mxu0 %v1653
        %1688 = vmatprep.subr.mxu0 %v1652
        %1689 = vmatpush1.msra.mxu0 %v1651
        %1690 = vmatprep.subr.mxu0 %v1650
        %1691 = vmatpush1.msra.mxu0 %v1649
        %1692 = vmatprep.subr.mxu0 0.0
        %1693 = vmatpush2.msra.mxu0 0.0
        %1694 = vmatprep.subr.mxu0 0.0
        %1695 = vmatpush2.msra.mxu0 0.0
        %1696 = vmatprep.subr.mxu0 0.0
        %1697 = vmatpush2.msra.mxu0 0.0
        %1698 = vmatprep.subr.mxu0 0.0
        %1699 = vmatpush2.msra.mxu0 0.0
        %1700 = vmatprep.subr.mxu0 0.0
        %1701 = vmatpush2.msra.mxu0 0.0
        %1702 = vmatprep.subr.mxu0 0.0
        %1703 = vmatpush2.msra.mxu0 0.0
        %1704 = vmatprep.subr.mxu0 0.0
        %1705 = vmatpush2.msra.mxu0 0.0
        %1706 = vmatprep.subr.mxu0 0.0
        %1707 = vmatpush2.msra.mxu0 0.0
        %1708 = vmatprep.subr.mxu0 0.0
        %1709 = vmatpush2.msra.mxu0 0.0
        %1710 = vmatprep.subr.mxu0 0.0
        %1711 = vmatpush2.msra.mxu0 0.0
        %1712 = vmatprep.subr.mxu0 0.0
        %1713 = vmatpush2.msra.mxu0 0.0
        %1714 = vmatprep.subr.mxu0 0.0
        %1715 = vmatpush2.msra.mxu0 0.0
        %1716 = vmatprep.subr.mxu0 0.0
        %1717 = vmatpush2.msra.mxu0 0.0
        %1718 = vmatprep.subr.mxu0 0.0
        %1719 = vmatpush2.msra.mxu0 0.0
        %1720 = vmatprep.subr.mxu0 0.0
        %1721 = vmatpush2.msra.mxu0 0.0
        %1722 = vmatprep.subr.mxu0 0.0
        %1723 = vmatpush2.msra.mxu0 0.0
        %1724 = vmatprep.mubr.f32.mxu0 0.0
        %1725 = vmatmul.mubr.f32.gmra.mxu0 %v1658
        %v1726 = vpop.f32.mrf.mxu0
        %v1727 = vadd.f32 0.0, %v1726
        %v1728 = vpop.f32.mrf.mxu0
        %v1729 = vadd.f32 0.0, %v1728
        %1730 = vdwg.mxu0
        %v1731 = vadd.f32 %v1606, %v1727
        %v1732 = vadd.f32 %v1608, %v1729
        %v1733 = vld [vmem:[#allocation3 + $0x60] sm:$0xff]
        %1734 = vrot.lane.b32.xlu0 %v1360, 2
        %v1735 = vpop.permute.xlu0 %1734
        %1736 = vrot.lane.b32.xlu0 %v1362, 2
        %v1737 = vpop.permute.xlu0 %1736
        %1738 = vrot.lane.b32.xlu0 %v1364, 2
        %v1739 = vpop.permute.xlu0 %1738
        %1740 = vrot.lane.b32.xlu0 %v1366, 2
        %v1741 = vpop.permute.xlu0 %1740
        %1742 = vrot.lane.b32.xlu0 %v1361, 2
        %v1743 = vpop.permute.xlu0 %1742
        %1744 = vrot.lane.b32.xlu0 %v1363, 2
        %v1745 = vpop.permute.xlu0 %1744
        %1746 = vrot.lane.b32.xlu0 %v1365, 2
        %v1747 = vpop.permute.xlu0 %1746
        %1748 = vrot.lane.b32.xlu0 %v1367, 2
        %v1749 = vpop.permute.xlu0 %1748
        %vm1750 = vcmp.lt.s32.totalorder %v307, 2
        %v1751 = vsel %vm1750, %v1735, %v1743
        %v1752 = vsel %vm1750, %v1737, %v1745
        %v1753 = vsel %vm1750, %v1739, %v1747
        %v1754 = vsel %vm1750, %v1741, %v1749
        %v1755 = vsel %vm1750, %v1743, %v1735
        %v1756 = vsel %vm1750, %v1745, %v1737
        %v1757 = vsel %vm1750, %v1747, %v1739
        %v1758 = vsel %vm1750, %v1749, %v1741
        %s1759 = scalar_lea.vmem %s1, 20
        %v1760 = vld [vmem:[%s1759] ss:$8 sm:$0x3]
        %v1762 = vlaneseq
        %v1763 = vshrl.u32 %v1762, 7
        %v1764 = vsub.s32 0, %v1763
        %v1765 = vrot.slane %v1760, %v1764
        %v1766 = vlaneseq
        %v1767 = vshrl.u32 %v1766, 7
        %v1768 = vsub.s32 1, %v1767
        %v1769 = vrot.slane %v1760, %v1768
        %v1772 = vmul.f32 %v1755, %v1765
        %v1773 = vmul.f32 %v1751, %v1769
        %v1774 = vmul.f32 %v1756, %v1765
        %v1775 = vmul.f32 %v1752, %v1769
        %v1776 = vmul.f32 %v1757, %v1765
        %v1777 = vmul.f32 %v1753, %v1769
        %v1778 = vmul.f32 %v1758, %v1765
        %v1779 = vmul.f32 %v1754, %v1769
        %v1781 = vsel %vm384, %v1733, 0
        %1783 = vmatprep.subr.mxu0 0.0
        %1784 = vmatpush1.msra.mxu0 0.0
        %1785 = vmatprep.subr.mxu0 0.0
        %1786 = vmatpush1.msra.mxu0 0.0
        %1787 = vmatprep.subr.mxu0 0.0
        %1788 = vmatpush1.msra.mxu0 0.0
        %1789 = vmatprep.subr.mxu0 0.0
        %1790 = vmatpush1.msra.mxu0 0.0
        %1791 = vmatprep.subr.mxu0 0.0
        %1792 = vmatpush1.msra.mxu0 0.0
        %1793 = vmatprep.subr.mxu0 0.0
        %1794 = vmatpush1.msra.mxu0 0.0
        %1795 = vmatprep.subr.mxu0 0.0
        %1796 = vmatpush1.msra.mxu0 0.0
        %1797 = vmatprep.subr.mxu0 0.0
        %1798 = vmatpush1.msra.mxu0 0.0
        %1799 = vmatprep.subr.mxu0 0.0
        %1800 = vmatpush1.msra.mxu0 0.0
        %1801 = vmatprep.subr.mxu0 0.0
        %1802 = vmatpush1.msra.mxu0 0.0
        %1803 = vmatprep.subr.mxu0 0.0
        %1804 = vmatpush1.msra.mxu0 0.0
        %1805 = vmatprep.subr.mxu0 0.0
        %1806 = vmatpush1.msra.mxu0 0.0
        %1807 = vmatprep.subr.mxu0 %v1779
        %1808 = vmatpush1.msra.mxu0 %v1778
        %1809 = vmatprep.subr.mxu0 %v1777
        %1810 = vmatpush1.msra.mxu0 %v1776
        %1811 = vmatprep.subr.mxu0 %v1775
        %1812 = vmatpush1.msra.mxu0 %v1774
        %1813 = vmatprep.subr.mxu0 %v1773
        %1814 = vmatpush1.msra.mxu0 %v1772
        %1815 = vmatprep.subr.mxu0 0.0
        %1816 = vmatpush2.msra.mxu0 0.0
        %1817 = vmatprep.subr.mxu0 0.0
        %1818 = vmatpush2.msra.mxu0 0.0
        %1819 = vmatprep.subr.mxu0 0.0
        %1820 = vmatpush2.msra.mxu0 0.0
        %1821 = vmatprep.subr.mxu0 0.0
        %1822 = vmatpush2.msra.mxu0 0.0
        %1823 = vmatprep.subr.mxu0 0.0
        %1824 = vmatpush2.msra.mxu0 0.0
        %1825 = vmatprep.subr.mxu0 0.0
        %1826 = vmatpush2.msra.mxu0 0.0
        %1827 = vmatprep.subr.mxu0 0.0
        %1828 = vmatpush2.msra.mxu0 0.0
        %1829 = vmatprep.subr.mxu0 0.0
        %1830 = vmatpush2.msra.mxu0 0.0
        %1831 = vmatprep.subr.mxu0 0.0
        %1832 = vmatpush2.msra.mxu0 0.0
        %1833 = vmatprep.subr.mxu0 0.0
        %1834 = vmatpush2.msra.mxu0 0.0
        %1835 = vmatprep.subr.mxu0 0.0
        %1836 = vmatpush2.msra.mxu0 0.0
        %1837 = vmatprep.subr.mxu0 0.0
        %1838 = vmatpush2.msra.mxu0 0.0
        %1839 = vmatprep.subr.mxu0 0.0
        %1840 = vmatpush2.msra.mxu0 0.0
        %1841 = vmatprep.subr.mxu0 0.0
        %1842 = vmatpush2.msra.mxu0 0.0
        %1843 = vmatprep.subr.mxu0 0.0
        %1844 = vmatpush2.msra.mxu0 0.0
        %1845 = vmatprep.subr.mxu0 0.0
        %1846 = vmatpush2.msra.mxu0 0.0
        %1847 = vmatprep.mubr.f32.mxu0 0.0
        %1848 = vmatmul.mubr.f32.gmra.mxu0 %v1781
        %v1849 = vpop.f32.mrf.mxu0
        %v1850 = vadd.f32 0.0, %v1849
        %v1851 = vpop.f32.mrf.mxu0
        %v1852 = vadd.f32 0.0, %v1851
        %1853 = vdwg.mxu0
        %v1854 = vadd.f32 %v1731, %v1850
        %v1855 = vadd.f32 %v1732, %v1852
        %v1856 = vld [vmem:[#allocation3 + $0x68] sm:$0xff]
        %v1858 = vsel %vm384, %v1856, 0
        %1860 = vmatprep.subr.mxu0 0.0
        %1861 = vmatpush1.msra.mxu0 0.0
        %1862 = vmatprep.subr.mxu0 0.0
        %1863 = vmatpush1.msra.mxu0 0.0
        %1864 = vmatprep.subr.mxu0 0.0
        %1865 = vmatpush1.msra.mxu0 0.0
        %1866 = vmatprep.subr.mxu0 0.0
        %1867 = vmatpush1.msra.mxu0 0.0
        %1868 = vmatprep.subr.mxu0 0.0
        %1869 = vmatpush1.msra.mxu0 0.0
        %1870 = vmatprep.subr.mxu0 0.0
        %1871 = vmatpush1.msra.mxu0 0.0
        %1872 = vmatprep.subr.mxu0 0.0
        %1873 = vmatpush1.msra.mxu0 0.0
        %1874 = vmatprep.subr.mxu0 0.0
        %1875 = vmatpush1.msra.mxu0 0.0
        %1876 = vmatprep.subr.mxu0 0.0
        %1877 = vmatpush1.msra.mxu0 0.0
        %1878 = vmatprep.subr.mxu0 0.0
        %1879 = vmatpush1.msra.mxu0 0.0
        %1880 = vmatprep.subr.mxu0 0.0
        %1881 = vmatpush1.msra.mxu0 0.0
        %1882 = vmatprep.subr.mxu0 0.0
        %1883 = vmatpush1.msra.mxu0 0.0
        %1884 = vmatprep.subr.mxu0 %v1367
        %1885 = vmatpush1.msra.mxu0 %v1366
        %1886 = vmatprep.subr.mxu0 %v1365
        %1887 = vmatpush1.msra.mxu0 %v1364
        %1888 = vmatprep.subr.mxu0 %v1363
        %1889 = vmatpush1.msra.mxu0 %v1362
        %1890 = vmatprep.subr.mxu0 %v1361
        %1891 = vmatpush1.msra.mxu0 %v1360
        %1892 = vmatprep.subr.mxu0 0.0
        %1893 = vmatpush2.msra.mxu0 0.0
        %1894 = vmatprep.subr.mxu0 0.0
        %1895 = vmatpush2.msra.mxu0 0.0
        %1896 = vmatprep.subr.mxu0 0.0
        %1897 = vmatpush2.msra.mxu0 0.0
        %1898 = vmatprep.subr.mxu0 0.0
        %1899 = vmatpush2.msra.mxu0 0.0
        %1900 = vmatprep.subr.mxu0 0.0
        %1901 = vmatpush2.msra.mxu0 0.0
        %1902 = vmatprep.subr.mxu0 0.0
        %1903 = vmatpush2.msra.mxu0 0.0
        %1904 = vmatprep.subr.mxu0 0.0
        %1905 = vmatpush2.msra.mxu0 0.0
        %1906 = vmatprep.subr.mxu0 0.0
        %1907 = vmatpush2.msra.mxu0 0.0
        %1908 = vmatprep.subr.mxu0 0.0
        %1909 = vmatpush2.msra.mxu0 0.0
        %1910 = vmatprep.subr.mxu0 0.0
        %1911 = vmatpush2.msra.mxu0 0.0
        %1912 = vmatprep.subr.mxu0 0.0
        %1913 = vmatpush2.msra.mxu0 0.0
        %1914 = vmatprep.subr.mxu0 0.0
        %1915 = vmatpush2.msra.mxu0 0.0
        %1916 = vmatprep.subr.mxu0 0.0
        %1917 = vmatpush2.msra.mxu0 0.0
        %1918 = vmatprep.subr.mxu0 0.0
        %1919 = vmatpush2.msra.mxu0 0.0
        %1920 = vmatprep.subr.mxu0 0.0
        %1921 = vmatpush2.msra.mxu0 0.0
        %1922 = vmatprep.subr.mxu0 0.0
        %1923 = vmatpush2.msra.mxu0 0.0
        %1924 = vmatprep.mubr.f32.mxu0 0.0
        %1925 = vmatmul.mubr.f32.gmra.mxu0 %v1858
        %v1926 = vpop.f32.mrf.mxu0
        %v1927 = vadd.f32 0.0, %v1926
        %v1928 = vpop.f32.mrf.mxu0
        %v1929 = vadd.f32 0.0, %v1928
        %1930 = vdwg.mxu0
        %v1931 = vadd.f32 %v1854, %v1927
        %v1932 = vadd.f32 %v1855, %v1929
        %v1933 = vld [vmem:[#allocation3 + $0x70] sm:$0xff]
        %1934 = vrot.lane.b32.xlu0 %v1360, 126
        %v1935 = vpop.permute.xlu0 %1934
        %1936 = vrot.lane.b32.xlu0 %v1362, 126
        %v1937 = vpop.permute.xlu0 %1936
        %1938 = vrot.lane.b32.xlu0 %v1364, 126
        %v1939 = vpop.permute.xlu0 %1938
        %1940 = vrot.lane.b32.xlu0 %v1366, 126
        %v1941 = vpop.permute.xlu0 %1940
        %1942 = vrot.lane.b32.xlu0 %v1361, 126
        %v1943 = vpop.permute.xlu0 %1942
        %1944 = vrot.lane.b32.xlu0 %v1363, 126
        %v1945 = vpop.permute.xlu0 %1944
        %1946 = vrot.lane.b32.xlu0 %v1365, 126
        %v1947 = vpop.permute.xlu0 %1946
        %1948 = vrot.lane.b32.xlu0 %v1367, 126
        %v1949 = vpop.permute.xlu0 %1948
        %vm1950 = vcmp.lt.s32.totalorder %v307, 126
        %v1951 = vsel %vm1950, %v1935, %v1943
        %v1952 = vsel %vm1950, %v1937, %v1945
        %v1953 = vsel %vm1950, %v1939, %v1947
        %v1954 = vsel %vm1950, %v1941, %v1949
        %v1955 = vsel %vm1950, %v1943, %v1935
        %v1956 = vsel %vm1950, %v1945, %v1937
        %v1957 = vsel %vm1950, %v1947, %v1939
        %v1958 = vsel %vm1950, %v1949, %v1941
        %s1959 = scalar_lea.vmem %s1, 22
        %v1960 = vld [vmem:[%s1959] ss:$8 sm:$0x3]
        %v1962 = vlaneseq
        %v1963 = vshrl.u32 %v1962, 7
        %v1964 = vsub.s32 0, %v1963
        %v1965 = vrot.slane %v1960, %v1964
        %v1966 = vlaneseq
        %v1967 = vshrl.u32 %v1966, 7
        %v1968 = vsub.s32 1, %v1967
        %v1969 = vrot.slane %v1960, %v1968
        %v1972 = vmul.f32 %v1951, %v1965
        %v1973 = vmul.f32 %v1955, %v1969
        %v1974 = vmul.f32 %v1952, %v1965
        %v1975 = vmul.f32 %v1956, %v1969
        %v1976 = vmul.f32 %v1953, %v1965
        %v1977 = vmul.f32 %v1957, %v1969
        %v1978 = vmul.f32 %v1954, %v1965
        %v1979 = vmul.f32 %v1958, %v1969
        %v1981 = vsel %vm384, %v1933, 0
        %1983 = vmatprep.subr.mxu0 0.0
        %1984 = vmatpush1.msra.mxu0 0.0
        %1985 = vmatprep.subr.mxu0 0.0
        %1986 = vmatpush1.msra.mxu0 0.0
        %1987 = vmatprep.subr.mxu0 0.0
        %1988 = vmatpush1.msra.mxu0 0.0
        %1989 = vmatprep.subr.mxu0 0.0
        %1990 = vmatpush1.msra.mxu0 0.0
        %1991 = vmatprep.subr.mxu0 0.0
        %1992 = vmatpush1.msra.mxu0 0.0
        %1993 = vmatprep.subr.mxu0 0.0
        %1994 = vmatpush1.msra.mxu0 0.0
        %1995 = vmatprep.subr.mxu0 0.0
        %1996 = vmatpush1.msra.mxu0 0.0
        %1997 = vmatprep.subr.mxu0 0.0
        %1998 = vmatpush1.msra.mxu0 0.0
        %1999 = vmatprep.subr.mxu0 0.0
        %2000 = vmatpush1.msra.mxu0 0.0
        %2001 = vmatprep.subr.mxu0 0.0
        %2002 = vmatpush1.msra.mxu0 0.0
        %2003 = vmatprep.subr.mxu0 0.0
        %2004 = vmatpush1.msra.mxu0 0.0
        %2005 = vmatprep.subr.mxu0 0.0
        %2006 = vmatpush1.msra.mxu0 0.0
        %2007 = vmatprep.subr.mxu0 %v1979
        %2008 = vmatpush1.msra.mxu0 %v1978
        %2009 = vmatprep.subr.mxu0 %v1977
        %2010 = vmatpush1.msra.mxu0 %v1976
        %2011 = vmatprep.subr.mxu0 %v1975
        %2012 = vmatpush1.msra.mxu0 %v1974
        %2013 = vmatprep.subr.mxu0 %v1973
        %2014 = vmatpush1.msra.mxu0 %v1972
        %2015 = vmatprep.subr.mxu0 0.0
        %2016 = vmatpush2.msra.mxu0 0.0
        %2017 = vmatprep.subr.mxu0 0.0
        %2018 = vmatpush2.msra.mxu0 0.0
        %2019 = vmatprep.subr.mxu0 0.0
        %2020 = vmatpush2.msra.mxu0 0.0
        %2021 = vmatprep.subr.mxu0 0.0
        %2022 = vmatpush2.msra.mxu0 0.0
        %2023 = vmatprep.subr.mxu0 0.0
        %2024 = vmatpush2.msra.mxu0 0.0
        %2025 = vmatprep.subr.mxu0 0.0
        %2026 = vmatpush2.msra.mxu0 0.0
        %2027 = vmatprep.subr.mxu0 0.0
        %2028 = vmatpush2.msra.mxu0 0.0
        %2029 = vmatprep.subr.mxu0 0.0
        %2030 = vmatpush2.msra.mxu0 0.0
        %2031 = vmatprep.subr.mxu0 0.0
        %2032 = vmatpush2.msra.mxu0 0.0
        %2033 = vmatprep.subr.mxu0 0.0
        %2034 = vmatpush2.msra.mxu0 0.0
        %2035 = vmatprep.subr.mxu0 0.0
        %2036 = vmatpush2.msra.mxu0 0.0
        %2037 = vmatprep.subr.mxu0 0.0
        %2038 = vmatpush2.msra.mxu0 0.0
        %2039 = vmatprep.subr.mxu0 0.0
        %2040 = vmatpush2.msra.mxu0 0.0
        %2041 = vmatprep.subr.mxu0 0.0
        %2042 = vmatpush2.msra.mxu0 0.0
        %2043 = vmatprep.subr.mxu0 0.0
        %2044 = vmatpush2.msra.mxu0 0.0
        %2045 = vmatprep.subr.mxu0 0.0
        %2046 = vmatpush2.msra.mxu0 0.0
        %2047 = vmatprep.mubr.f32.mxu0 0.0
        %2048 = vmatmul.mubr.f32.gmra.mxu0 %v1981
        %v2049 = vpop.f32.mrf.mxu0
        %v2050 = vadd.f32 0.0, %v2049
        %v2051 = vpop.f32.mrf.mxu0
        %v2052 = vadd.f32 0.0, %v2051
        %2053 = vdwg.mxu0
        %v2054 = vadd.f32 %v1931, %v2050
        %v2055 = vadd.f32 %v1932, %v2052
        %v2056 = vld [vmem:[#allocation3 + $0x78] sm:$0xff]
        %2057 = vrot.lane.b32.xlu0 %v1360, 98
        %v2058 = vpop.permute.xlu0 %2057
        %2059 = vrot.lane.b32.xlu0 %v1362, 98
        %v2060 = vpop.permute.xlu0 %2059
        %2061 = vrot.lane.b32.xlu0 %v1364, 98
        %v2062 = vpop.permute.xlu0 %2061
        %2063 = vrot.lane.b32.xlu0 %v1366, 98
        %v2064 = vpop.permute.xlu0 %2063
        %2065 = vrot.lane.b32.xlu0 %v1361, 98
        %v2066 = vpop.permute.xlu0 %2065
        %2067 = vrot.lane.b32.xlu0 %v1363, 98
        %v2068 = vpop.permute.xlu0 %2067
        %2069 = vrot.lane.b32.xlu0 %v1365, 98
        %v2070 = vpop.permute.xlu0 %2069
        %2071 = vrot.lane.b32.xlu0 %v1367, 98
        %v2072 = vpop.permute.xlu0 %2071
        %vm2073 = vcmp.lt.s32.totalorder %v307, 98
        %v2074 = vsel %vm2073, %v2058, %v2066
        %v2075 = vsel %vm2073, %v2060, %v2068
        %v2076 = vsel %vm2073, %v2062, %v2070
        %v2077 = vsel %vm2073, %v2064, %v2072
        %v2078 = vsel %vm2073, %v2066, %v2058
        %v2079 = vsel %vm2073, %v2068, %v2060
        %v2080 = vsel %vm2073, %v2070, %v2062
        %v2081 = vsel %vm2073, %v2072, %v2064
        %s2082 = scalar_lea.vmem %s1, 23
        %v2083 = vld [vmem:[%s2082] ss:$8 sm:$0x3]
        %v2085 = vlaneseq
        %v2086 = vshrl.u32 %v2085, 7
        %v2087 = vsub.s32 0, %v2086
        %v2088 = vrot.slane %v2083, %v2087
        %v2089 = vlaneseq
        %v2090 = vshrl.u32 %v2089, 7
        %v2091 = vsub.s32 1, %v2090
        %v2092 = vrot.slane %v2083, %v2091
        %v2095 = vmul.f32 %v2074, %v2088
        %v2096 = vmul.f32 %v2078, %v2092
        %v2097 = vmul.f32 %v2075, %v2088
        %v2098 = vmul.f32 %v2079, %v2092
        %v2099 = vmul.f32 %v2076, %v2088
        %v2100 = vmul.f32 %v2080, %v2092
        %v2101 = vmul.f32 %v2077, %v2088
        %v2102 = vmul.f32 %v2081, %v2092
        %v2104 = vsel %vm384, %v2056, 0
        %2106 = vmatprep.subr.mxu0 0.0
        %2107 = vmatpush1.msra.mxu0 0.0
        %2108 = vmatprep.subr.mxu0 0.0
        %2109 = vmatpush1.msra.mxu0 0.0
        %2110 = vmatprep.subr.mxu0 0.0
        %2111 = vmatpush1.msra.mxu0 0.0
        %2112 = vmatprep.subr.mxu0 0.0
        %2113 = vmatpush1.msra.mxu0 0.0
        %2114 = vmatprep.subr.mxu0 0.0
        %2115 = vmatpush1.msra.mxu0 0.0
        %2116 = vmatprep.subr.mxu0 0.0
        %2117 = vmatpush1.msra.mxu0 0.0
        %2118 = vmatprep.subr.mxu0 0.0
        %2119 = vmatpush1.msra.mxu0 0.0
        %2120 = vmatprep.subr.mxu0 0.0
        %2121 = vmatpush1.msra.mxu0 0.0
        %2122 = vmatprep.subr.mxu0 0.0
        %2123 = vmatpush1.msra.mxu0 0.0
        %2124 = vmatprep.subr.mxu0 0.0
        %2125 = vmatpush1.msra.mxu0 0.0
        %2126 = vmatprep.subr.mxu0 0.0
        %2127 = vmatpush1.msra.mxu0 0.0
        %2128 = vmatprep.subr.mxu0 0.0
        %2129 = vmatpush1.msra.mxu0 0.0
        %2130 = vmatprep.subr.mxu0 %v2102
        %2131 = vmatpush1.msra.mxu0 %v2101
        %2132 = vmatprep.subr.mxu0 %v2100
        %2133 = vmatpush1.msra.mxu0 %v2099
        %2134 = vmatprep.subr.mxu0 %v2098
        %2135 = vmatpush1.msra.mxu0 %v2097
        %2136 = vmatprep.subr.mxu0 %v2096
        %2137 = vmatpush1.msra.mxu0 %v2095
        %2138 = vmatprep.subr.mxu0 0.0
        %2139 = vmatpush2.msra.mxu0 0.0
        %2140 = vmatprep.subr.mxu0 0.0
        %2141 = vmatpush2.msra.mxu0 0.0
        %2142 = vmatprep.subr.mxu0 0.0
        %2143 = vmatpush2.msra.mxu0 0.0
        %2144 = vmatprep.subr.mxu0 0.0
        %2145 = vmatpush2.msra.mxu0 0.0
        %2146 = vmatprep.subr.mxu0 0.0
        %2147 = vmatpush2.msra.mxu0 0.0
        %2148 = vmatprep.subr.mxu0 0.0
        %2149 = vmatpush2.msra.mxu0 0.0
        %2150 = vmatprep.subr.mxu0 0.0
        %2151 = vmatpush2.msra.mxu0 0.0
        %2152 = vmatprep.subr.mxu0 0.0
        %2153 = vmatpush2.msra.mxu0 0.0
        %2154 = vmatprep.subr.mxu0 0.0
        %2155 = vmatpush2.msra.mxu0 0.0
        %2156 = vmatprep.subr.mxu0 0.0
        %2157 = vmatpush2.msra.mxu0 0.0
        %2158 = vmatprep.subr.mxu0 0.0
        %2159 = vmatpush2.msra.mxu0 0.0
        %2160 = vmatprep.subr.mxu0 0.0
        %2161 = vmatpush2.msra.mxu0 0.0
        %2162 = vmatprep.subr.mxu0 0.0
        %2163 = vmatpush2.msra.mxu0 0.0
        %2164 = vmatprep.subr.mxu0 0.0
        %2165 = vmatpush2.msra.mxu0 0.0
        %2166 = vmatprep.subr.mxu0 0.0
        %2167 = vmatpush2.msra.mxu0 0.0
        %2168 = vmatprep.subr.mxu0 0.0
        %2169 = vmatpush2.msra.mxu0 0.0
        %2170 = vmatprep.mubr.f32.mxu0 0.0
        %2171 = vmatmul.mubr.f32.gmra.mxu0 %v2104
        %v2172 = vpop.f32.mrf.mxu0
        %v2173 = vadd.f32 0.0, %v2172
        %v2174 = vpop.f32.mrf.mxu0
        %v2175 = vadd.f32 0.0, %v2174
        %2176 = vdwg.mxu0
        %v2177 = vadd.f32 %v2054, %v2173
        %v2178 = vadd.f32 %v2055, %v2175
        %v2179 = vld [vmem:[#allocation3 + $0x80] sm:$0xff]
        %2180 = vrot.lane.b32.xlu0 %v1360, 96
        %v2181 = vpop.permute.xlu0 %2180
        %2182 = vrot.lane.b32.xlu0 %v1362, 96
        %v2183 = vpop.permute.xlu0 %2182
        %2184 = vrot.lane.b32.xlu0 %v1364, 96
        %v2185 = vpop.permute.xlu0 %2184
        %2186 = vrot.lane.b32.xlu0 %v1366, 96
        %v2187 = vpop.permute.xlu0 %2186
        %2188 = vrot.lane.b32.xlu0 %v1361, 96
        %v2189 = vpop.permute.xlu0 %2188
        %2190 = vrot.lane.b32.xlu0 %v1363, 96
        %v2191 = vpop.permute.xlu0 %2190
        %2192 = vrot.lane.b32.xlu0 %v1365, 96
        %v2193 = vpop.permute.xlu0 %2192
        %2194 = vrot.lane.b32.xlu0 %v1367, 96
        %v2195 = vpop.permute.xlu0 %2194
        %vm2196 = vcmp.lt.s32.totalorder %v307, 96
        %v2197 = vsel %vm2196, %v2181, %v2189
        %v2198 = vsel %vm2196, %v2183, %v2191
        %v2199 = vsel %vm2196, %v2185, %v2193
        %v2200 = vsel %vm2196, %v2187, %v2195
        %v2201 = vsel %vm2196, %v2189, %v2181
        %v2202 = vsel %vm2196, %v2191, %v2183
        %v2203 = vsel %vm2196, %v2193, %v2185
        %v2204 = vsel %vm2196, %v2195, %v2187
        %s2205 = scalar_lea.vmem %s1, 32
        %v2206 = vld [vmem:[%s2205] ss:$8 sm:$0x3]
        %v2208 = vlaneseq
        %v2209 = vshrl.u32 %v2208, 7
        %v2210 = vsub.s32 0, %v2209
        %v2211 = vrot.slane %v2206, %v2210
        %v2212 = vlaneseq
        %v2213 = vshrl.u32 %v2212, 7
        %v2214 = vsub.s32 1, %v2213
        %v2215 = vrot.slane %v2206, %v2214
        %v2218 = vmul.f32 %v2197, %v2211
        %v2219 = vmul.f32 %v2201, %v2215
        %v2220 = vmul.f32 %v2198, %v2211
        %v2221 = vmul.f32 %v2202, %v2215
        %v2222 = vmul.f32 %v2199, %v2211
        %v2223 = vmul.f32 %v2203, %v2215
        %v2224 = vmul.f32 %v2200, %v2211
        %v2225 = vmul.f32 %v2204, %v2215
        %v2227 = vsel %vm384, %v2179, 0
        %2229 = vmatprep.subr.mxu0 0.0
        %2230 = vmatpush1.msra.mxu0 0.0
        %2231 = vmatprep.subr.mxu0 0.0
        %2232 = vmatpush1.msra.mxu0 0.0
        %2233 = vmatprep.subr.mxu0 0.0
        %2234 = vmatpush1.msra.mxu0 0.0
        %2235 = vmatprep.subr.mxu0 0.0
        %2236 = vmatpush1.msra.mxu0 0.0
        %2237 = vmatprep.subr.mxu0 0.0
        %2238 = vmatpush1.msra.mxu0 0.0
        %2239 = vmatprep.subr.mxu0 0.0
        %2240 = vmatpush1.msra.mxu0 0.0
        %2241 = vmatprep.subr.mxu0 0.0
        %2242 = vmatpush1.msra.mxu0 0.0
        %2243 = vmatprep.subr.mxu0 0.0
        %2244 = vmatpush1.msra.mxu0 0.0
        %2245 = vmatprep.subr.mxu0 0.0
        %2246 = vmatpush1.msra.mxu0 0.0
        %2247 = vmatprep.subr.mxu0 0.0
        %2248 = vmatpush1.msra.mxu0 0.0
        %2249 = vmatprep.subr.mxu0 0.0
        %2250 = vmatpush1.msra.mxu0 0.0
        %2251 = vmatprep.subr.mxu0 0.0
        %2252 = vmatpush1.msra.mxu0 0.0
        %2253 = vmatprep.subr.mxu0 %v2225
        %2254 = vmatpush1.msra.mxu0 %v2224
        %2255 = vmatprep.subr.mxu0 %v2223
        %2256 = vmatpush1.msra.mxu0 %v2222
        %2257 = vmatprep.subr.mxu0 %v2221
        %2258 = vmatpush1.msra.mxu0 %v2220
        %2259 = vmatprep.subr.mxu0 %v2219
        %2260 = vmatpush1.msra.mxu0 %v2218
        %2261 = vmatprep.subr.mxu0 0.0
        %2262 = vmatpush2.msra.mxu0 0.0
        %2263 = vmatprep.subr.mxu0 0.0
        %2264 = vmatpush2.msra.mxu0 0.0
        %2265 = vmatprep.subr.mxu0 0.0
        %2266 = vmatpush2.msra.mxu0 0.0
        %2267 = vmatprep.subr.mxu0 0.0
        %2268 = vmatpush2.msra.mxu0 0.0
        %2269 = vmatprep.subr.mxu0 0.0
        %2270 = vmatpush2.msra.mxu0 0.0
        %2271 = vmatprep.subr.mxu0 0.0
        %2272 = vmatpush2.msra.mxu0 0.0
        %2273 = vmatprep.subr.mxu0 0.0
        %2274 = vmatpush2.msra.mxu0 0.0
        %2275 = vmatprep.subr.mxu0 0.0
        %2276 = vmatpush2.msra.mxu0 0.0
        %2277 = vmatprep.subr.mxu0 0.0
        %2278 = vmatpush2.msra.mxu0 0.0
        %2279 = vmatprep.subr.mxu0 0.0
        %2280 = vmatpush2.msra.mxu0 0.0
        %2281 = vmatprep.subr.mxu0 0.0
        %2282 = vmatpush2.msra.mxu0 0.0
        %2283 = vmatprep.subr.mxu0 0.0
        %2284 = vmatpush2.msra.mxu0 0.0
        %2285 = vmatprep.subr.mxu0 0.0
        %2286 = vmatpush2.msra.mxu0 0.0
        %2287 = vmatprep.subr.mxu0 0.0
        %2288 = vmatpush2.msra.mxu0 0.0
        %2289 = vmatprep.subr.mxu0 0.0
        %2290 = vmatpush2.msra.mxu0 0.0
        %2291 = vmatprep.subr.mxu0 0.0
        %2292 = vmatpush2.msra.mxu0 0.0
        %2293 = vmatprep.mubr.f32.mxu0 0.0
        %2294 = vmatmul.mubr.f32.gmra.mxu0 %v2227
        %v2295 = vpop.f32.mrf.mxu0
        %v2296 = vadd.f32 0.0, %v2295
        %v2297 = vpop.f32.mrf.mxu0
        %v2298 = vadd.f32 0.0, %v2297
        %2299 = vdwg.mxu0
        %v2300 = vadd.f32 %v2177, %v2296
        %v2301 = vadd.f32 %v2178, %v2298
        %v2302 = vld [vmem:[#allocation3 + $0x88] sm:$0xff]
        %2303 = vrot.lane.b32.xlu0 %v1360, 94
        %v2304 = vpop.permute.xlu0 %2303
        %2305 = vrot.lane.b32.xlu0 %v1362, 94
        %v2306 = vpop.permute.xlu0 %2305
        %2307 = vrot.lane.b32.xlu0 %v1364, 94
        %v2308 = vpop.permute.xlu0 %2307
        %2309 = vrot.lane.b32.xlu0 %v1366, 94
        %v2310 = vpop.permute.xlu0 %2309
        %2311 = vrot.lane.b32.xlu0 %v1361, 94
        %v2312 = vpop.permute.xlu0 %2311
        %2313 = vrot.lane.b32.xlu0 %v1363, 94
        %v2314 = vpop.permute.xlu0 %2313
        %2315 = vrot.lane.b32.xlu0 %v1365, 94
        %v2316 = vpop.permute.xlu0 %2315
        %2317 = vrot.lane.b32.xlu0 %v1367, 94
        %v2318 = vpop.permute.xlu0 %2317
        %vm2319 = vcmp.lt.s32.totalorder %v307, 94
        %v2320 = vsel %vm2319, %v2304, %v2312
        %v2321 = vsel %vm2319, %v2306, %v2314
        %v2322 = vsel %vm2319, %v2308, %v2316
        %v2323 = vsel %vm2319, %v2310, %v2318
        %v2324 = vsel %vm2319, %v2312, %v2304
        %v2325 = vsel %vm2319, %v2314, %v2306
        %v2326 = vsel %vm2319, %v2316, %v2308
        %v2327 = vsel %vm2319, %v2318, %v2310
        %s2328 = scalar_lea.vmem %s1, 33
        %v2329 = vld [vmem:[%s2328] ss:$8 sm:$0x3]
        %v2331 = vlaneseq
        %v2332 = vshrl.u32 %v2331, 7
        %v2333 = vsub.s32 0, %v2332
        %v2334 = vrot.slane %v2329, %v2333
        %v2335 = vlaneseq
        %v2336 = vshrl.u32 %v2335, 7
        %v2337 = vsub.s32 1, %v2336
        %v2338 = vrot.slane %v2329, %v2337
        %v2341 = vmul.f32 %v2320, %v2334
        %v2342 = vmul.f32 %v2324, %v2338
        %v2343 = vmul.f32 %v2321, %v2334
        %v2344 = vmul.f32 %v2325, %v2338
        %v2345 = vmul.f32 %v2322, %v2334
        %v2346 = vmul.f32 %v2326, %v2338
        %v2347 = vmul.f32 %v2323, %v2334
        %v2348 = vmul.f32 %v2327, %v2338
        %v2350 = vsel %vm384, %v2302, 0
        %2352 = vmatprep.subr.mxu0 0.0
        %2353 = vmatpush1.msra.mxu0 0.0
        %2354 = vmatprep.subr.mxu0 0.0
        %2355 = vmatpush1.msra.mxu0 0.0
        %2356 = vmatprep.subr.mxu0 0.0
        %2357 = vmatpush1.msra.mxu0 0.0
        %2358 = vmatprep.subr.mxu0 0.0
        %2359 = vmatpush1.msra.mxu0 0.0
        %2360 = vmatprep.subr.mxu0 0.0
        %2361 = vmatpush1.msra.mxu0 0.0
        %2362 = vmatprep.subr.mxu0 0.0
        %2363 = vmatpush1.msra.mxu0 0.0
        %2364 = vmatprep.subr.mxu0 0.0
        %2365 = vmatpush1.msra.mxu0 0.0
        %2366 = vmatprep.subr.mxu0 0.0
        %2367 = vmatpush1.msra.mxu0 0.0
        %2368 = vmatprep.subr.mxu0 0.0
        %2369 = vmatpush1.msra.mxu0 0.0
        %2370 = vmatprep.subr.mxu0 0.0
        %2371 = vmatpush1.msra.mxu0 0.0
        %2372 = vmatprep.subr.mxu0 0.0
        %2373 = vmatpush1.msra.mxu0 0.0
        %2374 = vmatprep.subr.mxu0 0.0
        %2375 = vmatpush1.msra.mxu0 0.0
        %2376 = vmatprep.subr.mxu0 %v2348
        %2377 = vmatpush1.msra.mxu0 %v2347
        %2378 = vmatprep.subr.mxu0 %v2346
        %2379 = vmatpush1.msra.mxu0 %v2345
        %2380 = vmatprep.subr.mxu0 %v2344
        %2381 = vmatpush1.msra.mxu0 %v2343
        %2382 = vmatprep.subr.mxu0 %v2342
        %2383 = vmatpush1.msra.mxu0 %v2341
        %2384 = vmatprep.subr.mxu0 0.0
        %2385 = vmatpush2.msra.mxu0 0.0
        %2386 = vmatprep.subr.mxu0 0.0
        %2387 = vmatpush2.msra.mxu0 0.0
        %2388 = vmatprep.subr.mxu0 0.0
        %2389 = vmatpush2.msra.mxu0 0.0
        %2390 = vmatprep.subr.mxu0 0.0
        %2391 = vmatpush2.msra.mxu0 0.0
        %2392 = vmatprep.subr.mxu0 0.0
        %2393 = vmatpush2.msra.mxu0 0.0
        %2394 = vmatprep.subr.mxu0 0.0
        %2395 = vmatpush2.msra.mxu0 0.0
        %2396 = vmatprep.subr.mxu0 0.0
        %2397 = vmatpush2.msra.mxu0 0.0
        %2398 = vmatprep.subr.mxu0 0.0
        %2399 = vmatpush2.msra.mxu0 0.0
        %2400 = vmatprep.subr.mxu0 0.0
        %2401 = vmatpush2.msra.mxu0 0.0
        %2402 = vmatprep.subr.mxu0 0.0
        %2403 = vmatpush2.msra.mxu0 0.0
        %2404 = vmatprep.subr.mxu0 0.0
        %2405 = vmatpush2.msra.mxu0 0.0
        %2406 = vmatprep.subr.mxu0 0.0
        %2407 = vmatpush2.msra.mxu0 0.0
        %2408 = vmatprep.subr.mxu0 0.0
        %2409 = vmatpush2.msra.mxu0 0.0
        %2410 = vmatprep.subr.mxu0 0.0
        %2411 = vmatpush2.msra.mxu0 0.0
        %2412 = vmatprep.subr.mxu0 0.0
        %2413 = vmatpush2.msra.mxu0 0.0
        %2414 = vmatprep.subr.mxu0 0.0
        %2415 = vmatpush2.msra.mxu0 0.0
        %2416 = vmatprep.mubr.f32.mxu0 0.0
        %2417 = vmatmul.mubr.f32.gmra.mxu0 %v2350
        %v2418 = vpop.f32.mrf.mxu0
        %v2419 = vadd.f32 0.0, %v2418
        %v2420 = vpop.f32.mrf.mxu0
        %v2421 = vadd.f32 0.0, %v2420
        %2422 = vdwg.mxu0
        %v2423 = vadd.f32 %v2300, %v2419
        %v2424 = vadd.f32 %v2301, %v2421
        %v2425 = vld [vmem:[%s3 + $0x8] sm:$0xff]
        %2427 = vset.pattern.permute.xlu0 0
        %2428 = vperm.xlu0 %2427, %v2425
        %v2429 = vpop.permute.xlu0 %2428
        %v2431 = vadd.f32 %v2423, %v2429
        %v2432 = vadd.f32 %v2424, %v2429
        %v2433 = vmax.f32 %v2431, 0.0
        %v2434 = vmax.f32 %v2432, 0.0
        %2435 = vst [vmem:[#allocation2 + $0x10] sm:$0xff] %v2433
        %2436 = vst [vmem:[#allocation2 + $0x18] sm:$0xff] %v2434
        %v2437 = vld [vmem:[#allocation2] sm:$0xff]
        %v2438 = vld [vmem:[#allocation2 + $0x8] sm:$0xff]
        %v2439 = vld [vmem:[#allocation2 + $0x10] sm:$0xff]
        %v2440 = vld [vmem:[#allocation2 + $0x18] sm:$0xff]
        %v2441 = vld [vmem:[#allocation2 + $0x20] sm:$0xff]
        %v2442 = vld [vmem:[#allocation2 + $0x28] sm:$0xff]
        %v2443 = vld [vmem:[#allocation2 + $0x30] sm:$0xff]
        %v2444 = vld [vmem:[#allocation2 + $0x38] sm:$0xff]
        %v2445 = vld [vmem:[#allocation3 + $0x90] sm:$0xff]
        %2446 = vrot.lane.b32.xlu0 %v2437, 17
        %v2447 = vpop.permute.xlu0 %2446
        %2448 = vrot.lane.b32.xlu0 %v2439, 17
        %v2449 = vpop.permute.xlu0 %2448
        %2450 = vrot.lane.b32.xlu0 %v2441, 17
        %v2451 = vpop.permute.xlu0 %2450
        %2452 = vrot.lane.b32.xlu0 %v2443, 17
        %v2453 = vpop.permute.xlu0 %2452
        %2454 = vrot.lane.b32.xlu0 %v2438, 17
        %v2455 = vpop.permute.xlu0 %2454
        %2456 = vrot.lane.b32.xlu0 %v2440, 17
        %v2457 = vpop.permute.xlu0 %2456
        %2458 = vrot.lane.b32.xlu0 %v2442, 17
        %v2459 = vpop.permute.xlu0 %2458
        %2460 = vrot.lane.b32.xlu0 %v2444, 17
        %v2461 = vpop.permute.xlu0 %2460
        %v2462 = vsel %vm308, %v2447, %v2455
        %v2463 = vsel %vm308, %v2449, %v2457
        %v2464 = vsel %vm308, %v2451, %v2459
        %v2465 = vsel %vm308, %v2453, %v2461
        %v2466 = vsel %vm308, %v2455, %v2447
        %v2467 = vsel %vm308, %v2457, %v2449
        %v2468 = vsel %vm308, %v2459, %v2451
        %v2469 = vsel %vm308, %v2461, %v2453
        %s2470 = scalar_lea.vmem %s1, 34
        %v2471 = vld [vmem:[%s2470] ss:$8 sm:$0x3]
        %v2473 = vlaneseq
        %v2474 = vshrl.u32 %v2473, 7
        %v2475 = vsub.s32 0, %v2474
        %v2476 = vrot.slane %v2471, %v2475
        %v2477 = vlaneseq
        %v2478 = vshrl.u32 %v2477, 7
        %v2479 = vsub.s32 1, %v2478
        %v2480 = vrot.slane %v2471, %v2479
        %v2483 = vmul.f32 %v2466, %v2476
        %v2484 = vmul.f32 %v2462, %v2480
        %v2485 = vmul.f32 %v2467, %v2476
        %v2486 = vmul.f32 %v2463, %v2480
        %v2487 = vmul.f32 %v2468, %v2476
        %v2488 = vmul.f32 %v2464, %v2480
        %v2489 = vmul.f32 %v2469, %v2476
        %v2490 = vmul.f32 %v2465, %v2480
        %v2491 = vld [vmem:[#allocation3 + $0x98] sm:$0xff]
        %2492 = vrot.lane.b32.xlu0 %v2437, 16
        %v2493 = vpop.permute.xlu0 %2492
        %2494 = vrot.lane.b32.xlu0 %v2439, 16
        %v2495 = vpop.permute.xlu0 %2494
        %2496 = vrot.lane.b32.xlu0 %v2441, 16
        %v2497 = vpop.permute.xlu0 %2496
        %2498 = vrot.lane.b32.xlu0 %v2443, 16
        %v2499 = vpop.permute.xlu0 %2498
        %2500 = vrot.lane.b32.xlu0 %v2438, 16
        %v2501 = vpop.permute.xlu0 %2500
        %2502 = vrot.lane.b32.xlu0 %v2440, 16
        %v2503 = vpop.permute.xlu0 %2502
        %2504 = vrot.lane.b32.xlu0 %v2442, 16
        %v2505 = vpop.permute.xlu0 %2504
        %2506 = vrot.lane.b32.xlu0 %v2444, 16
        %v2507 = vpop.permute.xlu0 %2506
        %v2508 = vsel %vm354, %v2493, %v2501
        %v2509 = vsel %vm354, %v2495, %v2503
        %v2510 = vsel %vm354, %v2497, %v2505
        %v2511 = vsel %vm354, %v2499, %v2507
        %v2512 = vsel %vm354, %v2501, %v2493
        %v2513 = vsel %vm354, %v2503, %v2495
        %v2514 = vsel %vm354, %v2505, %v2497
        %v2515 = vsel %vm354, %v2507, %v2499
        %s2516 = scalar_lea.vmem %s1, 35
        %v2517 = vld [vmem:[%s2516] ss:$8 sm:$0x3]
        %v2519 = vlaneseq
        %v2520 = vshrl.u32 %v2519, 7
        %v2521 = vsub.s32 0, %v2520
        %v2522 = vrot.slane %v2517, %v2521
        %v2523 = vlaneseq
        %v2524 = vshrl.u32 %v2523, 7
        %v2525 = vsub.s32 1, %v2524
        %v2526 = vrot.slane %v2517, %v2525
        %v2529 = vmul.f32 %v2512, %v2522
        %v2530 = vmul.f32 %v2508, %v2526
        %v2531 = vmul.f32 %v2513, %v2522
        %v2532 = vmul.f32 %v2509, %v2526
        %v2533 = vmul.f32 %v2514, %v2522
        %v2534 = vmul.f32 %v2510, %v2526
        %v2535 = vmul.f32 %v2515, %v2522
        %v2536 = vmul.f32 %v2511, %v2526
        %v2538 = vsel %vm384, %v2491, 0
        %2540 = vmatprep.subr.mxu0 0.0
        %2541 = vmatpush1.msra.mxu0 0.0
        %2542 = vmatprep.subr.mxu0 0.0
        %2543 = vmatpush1.msra.mxu0 0.0
        %2544 = vmatprep.subr.mxu0 0.0
        %2545 = vmatpush1.msra.mxu0 0.0
        %2546 = vmatprep.subr.mxu0 0.0
        %2547 = vmatpush1.msra.mxu0 0.0
        %2548 = vmatprep.subr.mxu0 0.0
        %2549 = vmatpush1.msra.mxu0 0.0
        %2550 = vmatprep.subr.mxu0 0.0
        %2551 = vmatpush1.msra.mxu0 0.0
        %2552 = vmatprep.subr.mxu0 0.0
        %2553 = vmatpush1.msra.mxu0 0.0
        %2554 = vmatprep.subr.mxu0 0.0
        %2555 = vmatpush1.msra.mxu0 0.0
        %2556 = vmatprep.subr.mxu0 0.0
        %2557 = vmatpush1.msra.mxu0 0.0
        %2558 = vmatprep.subr.mxu0 0.0
        %2559 = vmatpush1.msra.mxu0 0.0
        %2560 = vmatprep.subr.mxu0 0.0
        %2561 = vmatpush1.msra.mxu0 0.0
        %2562 = vmatprep.subr.mxu0 0.0
        %2563 = vmatpush1.msra.mxu0 0.0
        %2564 = vmatprep.subr.mxu0 %v2536
        %2565 = vmatpush1.msra.mxu0 %v2535
        %2566 = vmatprep.subr.mxu0 %v2534
        %2567 = vmatpush1.msra.mxu0 %v2533
        %2568 = vmatprep.subr.mxu0 %v2532
        %2569 = vmatpush1.msra.mxu0 %v2531
        %2570 = vmatprep.subr.mxu0 %v2530
        %2571 = vmatpush1.msra.mxu0 %v2529
        %2572 = vmatprep.subr.mxu0 0.0
        %2573 = vmatpush2.msra.mxu0 0.0
        %2574 = vmatprep.subr.mxu0 0.0
        %2575 = vmatpush2.msra.mxu0 0.0
        %2576 = vmatprep.subr.mxu0 0.0
        %2577 = vmatpush2.msra.mxu0 0.0
        %2578 = vmatprep.subr.mxu0 0.0
        %2579 = vmatpush2.msra.mxu0 0.0
        %2580 = vmatprep.subr.mxu0 0.0
        %2581 = vmatpush2.msra.mxu0 0.0
        %2582 = vmatprep.subr.mxu0 0.0
        %2583 = vmatpush2.msra.mxu0 0.0
        %2584 = vmatprep.subr.mxu0 0.0
        %2585 = vmatpush2.msra.mxu0 0.0
        %2586 = vmatprep.subr.mxu0 0.0
        %2587 = vmatpush2.msra.mxu0 0.0
        %2588 = vmatprep.subr.mxu0 0.0
        %2589 = vmatpush2.msra.mxu0 0.0
        %2590 = vmatprep.subr.mxu0 0.0
        %2591 = vmatpush2.msra.mxu0 0.0
        %2592 = vmatprep.subr.mxu0 0.0
        %2593 = vmatpush2.msra.mxu0 0.0
        %2594 = vmatprep.subr.mxu0 0.0
        %2595 = vmatpush2.msra.mxu0 0.0
        %2596 = vmatprep.subr.mxu0 0.0
        %2597 = vmatpush2.msra.mxu0 0.0
        %2598 = vmatprep.subr.mxu0 0.0
        %2599 = vmatpush2.msra.mxu0 0.0
        %2600 = vmatprep.subr.mxu0 0.0
        %2601 = vmatpush2.msra.mxu0 0.0
        %2602 = vmatprep.subr.mxu0 0.0
        %2603 = vmatpush2.msra.mxu0 0.0
        %2604 = vmatprep.mubr.f32.mxu0 0.0
        %2605 = vmatmul.mubr.f32.gmra.mxu0 %v2538
        %v2606 = vpop.f32.mrf.mxu0
        %v2607 = vadd.f32 0.0, %v2606
        %v2608 = vpop.f32.mrf.mxu0
        %v2609 = vadd.f32 0.0, %v2608
        %2610 = vdwg.mxu0
        %v2612 = vsel %vm384, %v2445, 0
        %2614 = vmatprep.subr.mxu0 0.0
        %2615 = vmatpush1.msra.mxu0 0.0
        %2616 = vmatprep.subr.mxu0 0.0
        %2617 = vmatpush1.msra.mxu0 0.0
        %2618 = vmatprep.subr.mxu0 0.0
        %2619 = vmatpush1.msra.mxu0 0.0
        %2620 = vmatprep.subr.mxu0 0.0
        %2621 = vmatpush1.msra.mxu0 0.0
        %2622 = vmatprep.subr.mxu0 0.0
        %2623 = vmatpush1.msra.mxu0 0.0
        %2624 = vmatprep.subr.mxu0 0.0
        %2625 = vmatpush1.msra.mxu0 0.0
        %2626 = vmatprep.subr.mxu0 0.0
        %2627 = vmatpush1.msra.mxu0 0.0
        %2628 = vmatprep.subr.mxu0 0.0
        %2629 = vmatpush1.msra.mxu0 0.0
        %2630 = vmatprep.subr.mxu0 0.0
        %2631 = vmatpush1.msra.mxu0 0.0
        %2632 = vmatprep.subr.mxu0 0.0
        %2633 = vmatpush1.msra.mxu0 0.0
        %2634 = vmatprep.subr.mxu0 0.0
        %2635 = vmatpush1.msra.mxu0 0.0
        %2636 = vmatprep.subr.mxu0 0.0
        %2637 = vmatpush1.msra.mxu0 0.0
        %2638 = vmatprep.subr.mxu0 %v2490
        %2639 = vmatpush1.msra.mxu0 %v2489
        %2640 = vmatprep.subr.mxu0 %v2488
        %2641 = vmatpush1.msra.mxu0 %v2487
        %2642 = vmatprep.subr.mxu0 %v2486
        %2643 = vmatpush1.msra.mxu0 %v2485
        %2644 = vmatprep.subr.mxu0 %v2484
        %2645 = vmatpush1.msra.mxu0 %v2483
        %2646 = vmatprep.subr.mxu0 0.0
        %2647 = vmatpush2.msra.mxu0 0.0
        %2648 = vmatprep.subr.mxu0 0.0
        %2649 = vmatpush2.msra.mxu0 0.0
        %2650 = vmatprep.subr.mxu0 0.0
        %2651 = vmatpush2.msra.mxu0 0.0
        %2652 = vmatprep.subr.mxu0 0.0
        %2653 = vmatpush2.msra.mxu0 0.0
        %2654 = vmatprep.subr.mxu0 0.0
        %2655 = vmatpush2.msra.mxu0 0.0
        %2656 = vmatprep.subr.mxu0 0.0
        %2657 = vmatpush2.msra.mxu0 0.0
        %2658 = vmatprep.subr.mxu0 0.0
        %2659 = vmatpush2.msra.mxu0 0.0
        %2660 = vmatprep.subr.mxu0 0.0
        %2661 = vmatpush2.msra.mxu0 0.0
        %2662 = vmatprep.subr.mxu0 0.0
        %2663 = vmatpush2.msra.mxu0 0.0
        %2664 = vmatprep.subr.mxu0 0.0
        %2665 = vmatpush2.msra.mxu0 0.0
        %2666 = vmatprep.subr.mxu0 0.0
        %2667 = vmatpush2.msra.mxu0 0.0
        %2668 = vmatprep.subr.mxu0 0.0
        %2669 = vmatpush2.msra.mxu0 0.0
        %2670 = vmatprep.subr.mxu0 0.0
        %2671 = vmatpush2.msra.mxu0 0.0
        %2672 = vmatprep.subr.mxu0 0.0
        %2673 = vmatpush2.msra.mxu0 0.0
        %2674 = vmatprep.subr.mxu0 0.0
        %2675 = vmatpush2.msra.mxu0 0.0
        %2676 = vmatprep.subr.mxu0 0.0
        %2677 = vmatpush2.msra.mxu0 0.0
        %2678 = vmatprep.mubr.f32.mxu0 0.0
        %2679 = vmatmul.mubr.f32.gmra.mxu0 %v2612
        %v2680 = vpop.f32.mrf.mxu0
        %v2681 = vadd.f32 %v2607, %v2680
        %v2682 = vpop.f32.mrf.mxu0
        %v2683 = vadd.f32 %v2609, %v2682
        %2684 = vdwg.mxu0
        %v2685 = vld [vmem:[#allocation3 + $0xa0] sm:$0xff]
        %2686 = vrot.lane.b32.xlu0 %v2437, 15
        %v2687 = vpop.permute.xlu0 %2686
        %2688 = vrot.lane.b32.xlu0 %v2439, 15
        %v2689 = vpop.permute.xlu0 %2688
        %2690 = vrot.lane.b32.xlu0 %v2441, 15
        %v2691 = vpop.permute.xlu0 %2690
        %2692 = vrot.lane.b32.xlu0 %v2443, 15
        %v2693 = vpop.permute.xlu0 %2692
        %2694 = vrot.lane.b32.xlu0 %v2438, 15
        %v2695 = vpop.permute.xlu0 %2694
        %2696 = vrot.lane.b32.xlu0 %v2440, 15
        %v2697 = vpop.permute.xlu0 %2696
        %2698 = vrot.lane.b32.xlu0 %v2442, 15
        %v2699 = vpop.permute.xlu0 %2698
        %2700 = vrot.lane.b32.xlu0 %v2444, 15
        %v2701 = vpop.permute.xlu0 %2700
        %v2702 = vsel %vm550, %v2687, %v2695
        %v2703 = vsel %vm550, %v2689, %v2697
        %v2704 = vsel %vm550, %v2691, %v2699
        %v2705 = vsel %vm550, %v2693, %v2701
        %v2706 = vsel %vm550, %v2695, %v2687
        %v2707 = vsel %vm550, %v2697, %v2689
        %v2708 = vsel %vm550, %v2699, %v2691
        %v2709 = vsel %vm550, %v2701, %v2693
        %s2710 = scalar_lea.vmem %s1, 36
        %v2711 = vld [vmem:[%s2710] ss:$8 sm:$0x3]
        %v2713 = vlaneseq
        %v2714 = vshrl.u32 %v2713, 7
        %v2715 = vsub.s32 0, %v2714
        %v2716 = vrot.slane %v2711, %v2715
        %v2717 = vlaneseq
        %v2718 = vshrl.u32 %v2717, 7
        %v2719 = vsub.s32 1, %v2718
        %v2720 = vrot.slane %v2711, %v2719
        %v2723 = vmul.f32 %v2706, %v2716
        %v2724 = vmul.f32 %v2702, %v2720
        %v2725 = vmul.f32 %v2707, %v2716
        %v2726 = vmul.f32 %v2703, %v2720
        %v2727 = vmul.f32 %v2708, %v2716
        %v2728 = vmul.f32 %v2704, %v2720
        %v2729 = vmul.f32 %v2709, %v2716
        %v2730 = vmul.f32 %v2705, %v2720
        %v2732 = vsel %vm384, %v2685, 0
        %2734 = vmatprep.subr.mxu0 0.0
        %2735 = vmatpush1.msra.mxu0 0.0
        %2736 = vmatprep.subr.mxu0 0.0
        %2737 = vmatpush1.msra.mxu0 0.0
        %2738 = vmatprep.subr.mxu0 0.0
        %2739 = vmatpush1.msra.mxu0 0.0
        %2740 = vmatprep.subr.mxu0 0.0
        %2741 = vmatpush1.msra.mxu0 0.0
        %2742 = vmatprep.subr.mxu0 0.0
        %2743 = vmatpush1.msra.mxu0 0.0
        %2744 = vmatprep.subr.mxu0 0.0
        %2745 = vmatpush1.msra.mxu0 0.0
        %2746 = vmatprep.subr.mxu0 0.0
        %2747 = vmatpush1.msra.mxu0 0.0
        %2748 = vmatprep.subr.mxu0 0.0
        %2749 = vmatpush1.msra.mxu0 0.0
        %2750 = vmatprep.subr.mxu0 0.0
        %2751 = vmatpush1.msra.mxu0 0.0
        %2752 = vmatprep.subr.mxu0 0.0
        %2753 = vmatpush1.msra.mxu0 0.0
        %2754 = vmatprep.subr.mxu0 0.0
        %2755 = vmatpush1.msra.mxu0 0.0
        %2756 = vmatprep.subr.mxu0 0.0
        %2757 = vmatpush1.msra.mxu0 0.0
        %2758 = vmatprep.subr.mxu0 %v2730
        %2759 = vmatpush1.msra.mxu0 %v2729
        %2760 = vmatprep.subr.mxu0 %v2728
        %2761 = vmatpush1.msra.mxu0 %v2727
        %2762 = vmatprep.subr.mxu0 %v2726
        %2763 = vmatpush1.msra.mxu0 %v2725
        %2764 = vmatprep.subr.mxu0 %v2724
        %2765 = vmatpush1.msra.mxu0 %v2723
        %2766 = vmatprep.subr.mxu0 0.0
        %2767 = vmatpush2.msra.mxu0 0.0
        %2768 = vmatprep.subr.mxu0 0.0
        %2769 = vmatpush2.msra.mxu0 0.0
        %2770 = vmatprep.subr.mxu0 0.0
        %2771 = vmatpush2.msra.mxu0 0.0
        %2772 = vmatprep.subr.mxu0 0.0
        %2773 = vmatpush2.msra.mxu0 0.0
        %2774 = vmatprep.subr.mxu0 0.0
        %2775 = vmatpush2.msra.mxu0 0.0
        %2776 = vmatprep.subr.mxu0 0.0
        %2777 = vmatpush2.msra.mxu0 0.0
        %2778 = vmatprep.subr.mxu0 0.0
        %2779 = vmatpush2.msra.mxu0 0.0
        %2780 = vmatprep.subr.mxu0 0.0
        %2781 = vmatpush2.msra.mxu0 0.0
        %2782 = vmatprep.subr.mxu0 0.0
        %2783 = vmatpush2.msra.mxu0 0.0
        %2784 = vmatprep.subr.mxu0 0.0
        %2785 = vmatpush2.msra.mxu0 0.0
        %2786 = vmatprep.subr.mxu0 0.0
        %2787 = vmatpush2.msra.mxu0 0.0
        %2788 = vmatprep.subr.mxu0 0.0
        %2789 = vmatpush2.msra.mxu0 0.0
        %2790 = vmatprep.subr.mxu0 0.0
        %2791 = vmatpush2.msra.mxu0 0.0
        %2792 = vmatprep.subr.mxu0 0.0
        %2793 = vmatpush2.msra.mxu0 0.0
        %2794 = vmatprep.subr.mxu0 0.0
        %2795 = vmatpush2.msra.mxu0 0.0
        %2796 = vmatprep.subr.mxu0 0.0
        %2797 = vmatpush2.msra.mxu0 0.0
        %2798 = vmatprep.mubr.f32.mxu0 0.0
        %2799 = vmatmul.mubr.f32.gmra.mxu0 %v2732
        %v2800 = vpop.f32.mrf.mxu0
        %v2801 = vadd.f32 0.0, %v2800
        %v2802 = vpop.f32.mrf.mxu0
        %v2803 = vadd.f32 0.0, %v2802
        %2804 = vdwg.mxu0
        %v2805 = vadd.f32 %v2681, %v2801
        %v2806 = vadd.f32 %v2683, %v2803
        %v2807 = vld [vmem:[#allocation3 + $0xa8] sm:$0xff]
        %2808 = vrot.lane.b32.xlu0 %v2437, 1
        %v2809 = vpop.permute.xlu0 %2808
        %2810 = vrot.lane.b32.xlu0 %v2439, 1
        %v2811 = vpop.permute.xlu0 %2810
        %2812 = vrot.lane.b32.xlu0 %v2441, 1
        %v2813 = vpop.permute.xlu0 %2812
        %2814 = vrot.lane.b32.xlu0 %v2443, 1
        %v2815 = vpop.permute.xlu0 %2814
        %2816 = vrot.lane.b32.xlu0 %v2438, 1
        %v2817 = vpop.permute.xlu0 %2816
        %2818 = vrot.lane.b32.xlu0 %v2440, 1
        %v2819 = vpop.permute.xlu0 %2818
        %2820 = vrot.lane.b32.xlu0 %v2442, 1
        %v2821 = vpop.permute.xlu0 %2820
        %2822 = vrot.lane.b32.xlu0 %v2444, 1
        %v2823 = vpop.permute.xlu0 %2822
        %v2824 = vsel %vm673, %v2809, %v2817
        %v2825 = vsel %vm673, %v2811, %v2819
        %v2826 = vsel %vm673, %v2813, %v2821
        %v2827 = vsel %vm673, %v2815, %v2823
        %v2828 = vsel %vm673, %v2817, %v2809
        %v2829 = vsel %vm673, %v2819, %v2811
        %v2830 = vsel %vm673, %v2821, %v2813
        %v2831 = vsel %vm673, %v2823, %v2815
        %s2832 = scalar_lea.vmem %s1, 37
        %v2833 = vld [vmem:[%s2832] ss:$8 sm:$0x3]
        %v2835 = vlaneseq
        %v2836 = vshrl.u32 %v2835, 7
        %v2837 = vsub.s32 0, %v2836
        %v2838 = vrot.slane %v2833, %v2837
        %v2839 = vlaneseq
        %v2840 = vshrl.u32 %v2839, 7
        %v2841 = vsub.s32 1, %v2840
        %v2842 = vrot.slane %v2833, %v2841
        %v2845 = vmul.f32 %v2828, %v2838
        %v2846 = vmul.f32 %v2824, %v2842
        %v2847 = vmul.f32 %v2829, %v2838
        %v2848 = vmul.f32 %v2825, %v2842
        %v2849 = vmul.f32 %v2830, %v2838
        %v2850 = vmul.f32 %v2826, %v2842
        %v2851 = vmul.f32 %v2831, %v2838
        %v2852 = vmul.f32 %v2827, %v2842
        %v2854 = vsel %vm384, %v2807, 0
        %2856 = vmatprep.subr.mxu0 0.0
        %2857 = vmatpush1.msra.mxu0 0.0
        %2858 = vmatprep.subr.mxu0 0.0
        %2859 = vmatpush1.msra.mxu0 0.0
        %2860 = vmatprep.subr.mxu0 0.0
        %2861 = vmatpush1.msra.mxu0 0.0
        %2862 = vmatprep.subr.mxu0 0.0
        %2863 = vmatpush1.msra.mxu0 0.0
        %2864 = vmatprep.subr.mxu0 0.0
        %2865 = vmatpush1.msra.mxu0 0.0
        %2866 = vmatprep.subr.mxu0 0.0
        %2867 = vmatpush1.msra.mxu0 0.0
        %2868 = vmatprep.subr.mxu0 0.0
        %2869 = vmatpush1.msra.mxu0 0.0
        %2870 = vmatprep.subr.mxu0 0.0
        %2871 = vmatpush1.msra.mxu0 0.0
        %2872 = vmatprep.subr.mxu0 0.0
        %2873 = vmatpush1.msra.mxu0 0.0
        %2874 = vmatprep.subr.mxu0 0.0
        %2875 = vmatpush1.msra.mxu0 0.0
        %2876 = vmatprep.subr.mxu0 0.0
        %2877 = vmatpush1.msra.mxu0 0.0
        %2878 = vmatprep.subr.mxu0 0.0
        %2879 = vmatpush1.msra.mxu0 0.0
        %2880 = vmatprep.subr.mxu0 %v2852
        %2881 = vmatpush1.msra.mxu0 %v2851
        %2882 = vmatprep.subr.mxu0 %v2850
        %2883 = vmatpush1.msra.mxu0 %v2849
        %2884 = vmatprep.subr.mxu0 %v2848
        %2885 = vmatpush1.msra.mxu0 %v2847
        %2886 = vmatprep.subr.mxu0 %v2846
        %2887 = vmatpush1.msra.mxu0 %v2845
        %2888 = vmatprep.subr.mxu0 0.0
        %2889 = vmatpush2.msra.mxu0 0.0
        %2890 = vmatprep.subr.mxu0 0.0
        %2891 = vmatpush2.msra.mxu0 0.0
        %2892 = vmatprep.subr.mxu0 0.0
        %2893 = vmatpush2.msra.mxu0 0.0
        %2894 = vmatprep.subr.mxu0 0.0
        %2895 = vmatpush2.msra.mxu0 0.0
        %2896 = vmatprep.subr.mxu0 0.0
        %2897 = vmatpush2.msra.mxu0 0.0
        %2898 = vmatprep.subr.mxu0 0.0
        %2899 = vmatpush2.msra.mxu0 0.0
        %2900 = vmatprep.subr.mxu0 0.0
        %2901 = vmatpush2.msra.mxu0 0.0
        %2902 = vmatprep.subr.mxu0 0.0
        %2903 = vmatpush2.msra.mxu0 0.0
        %2904 = vmatprep.subr.mxu0 0.0
        %2905 = vmatpush2.msra.mxu0 0.0
        %2906 = vmatprep.subr.mxu0 0.0
        %2907 = vmatpush2.msra.mxu0 0.0
        %2908 = vmatprep.subr.mxu0 0.0
        %2909 = vmatpush2.msra.mxu0 0.0
        %2910 = vmatprep.subr.mxu0 0.0
        %2911 = vmatpush2.msra.mxu0 0.0
        %2912 = vmatprep.subr.mxu0 0.0
        %2913 = vmatpush2.msra.mxu0 0.0
        %2914 = vmatprep.subr.mxu0 0.0
        %2915 = vmatpush2.msra.mxu0 0.0
        %2916 = vmatprep.subr.mxu0 0.0
        %2917 = vmatpush2.msra.mxu0 0.0
        %2918 = vmatprep.subr.mxu0 0.0
        %2919 = vmatpush2.msra.mxu0 0.0
        %2920 = vmatprep.mubr.f32.mxu0 0.0
        %2921 = vmatmul.mubr.f32.gmra.mxu0 %v2854
        %v2922 = vpop.f32.mrf.mxu0
        %v2923 = vadd.f32 0.0, %v2922
        %v2924 = vpop.f32.mrf.mxu0
        %v2925 = vadd.f32 0.0, %v2924
        %2926 = vdwg.mxu0
        %v2927 = vadd.f32 %v2805, %v2923
        %v2928 = vadd.f32 %v2806, %v2925
        %v2929 = vld [vmem:[#allocation3 + $0xb0] sm:$0xff]
        %v2931 = vsel %vm384, %v2929, 0
        %2933 = vmatprep.subr.mxu0 0.0
        %2934 = vmatpush1.msra.mxu0 0.0
        %2935 = vmatprep.subr.mxu0 0.0
        %2936 = vmatpush1.msra.mxu0 0.0
        %2937 = vmatprep.subr.mxu0 0.0
        %2938 = vmatpush1.msra.mxu0 0.0
        %2939 = vmatprep.subr.mxu0 0.0
        %2940 = vmatpush1.msra.mxu0 0.0
        %2941 = vmatprep.subr.mxu0 0.0
        %2942 = vmatpush1.msra.mxu0 0.0
        %2943 = vmatprep.subr.mxu0 0.0
        %2944 = vmatpush1.msra.mxu0 0.0
        %2945 = vmatprep.subr.mxu0 0.0
        %2946 = vmatpush1.msra.mxu0 0.0
        %2947 = vmatprep.subr.mxu0 0.0
        %2948 = vmatpush1.msra.mxu0 0.0
        %2949 = vmatprep.subr.mxu0 0.0
        %2950 = vmatpush1.msra.mxu0 0.0
        %2951 = vmatprep.subr.mxu0 0.0
        %2952 = vmatpush1.msra.mxu0 0.0
        %2953 = vmatprep.subr.mxu0 0.0
        %2954 = vmatpush1.msra.mxu0 0.0
        %2955 = vmatprep.subr.mxu0 0.0
        %2956 = vmatpush1.msra.mxu0 0.0
        %2957 = vmatprep.subr.mxu0 %v2444
        %2958 = vmatpush1.msra.mxu0 %v2443
        %2959 = vmatprep.subr.mxu0 %v2442
        %2960 = vmatpush1.msra.mxu0 %v2441
        %2961 = vmatprep.subr.mxu0 %v2440
        %2962 = vmatpush1.msra.mxu0 %v2439
        %2963 = vmatprep.subr.mxu0 %v2438
        %2964 = vmatpush1.msra.mxu0 %v2437
        %2965 = vmatprep.subr.mxu0 0.0
        %2966 = vmatpush2.msra.mxu0 0.0
        %2967 = vmatprep.subr.mxu0 0.0
        %2968 = vmatpush2.msra.mxu0 0.0
        %2969 = vmatprep.subr.mxu0 0.0
        %2970 = vmatpush2.msra.mxu0 0.0
        %2971 = vmatprep.subr.mxu0 0.0
        %2972 = vmatpush2.msra.mxu0 0.0
        %2973 = vmatprep.subr.mxu0 0.0
        %2974 = vmatpush2.msra.mxu0 0.0
        %2975 = vmatprep.subr.mxu0 0.0
        %2976 = vmatpush2.msra.mxu0 0.0
        %2977 = vmatprep.subr.mxu0 0.0
        %2978 = vmatpush2.msra.mxu0 0.0
        %2979 = vmatprep.subr.mxu0 0.0
        %2980 = vmatpush2.msra.mxu0 0.0
        %2981 = vmatprep.subr.mxu0 0.0
        %2982 = vmatpush2.msra.mxu0 0.0
        %2983 = vmatprep.subr.mxu0 0.0
        %2984 = vmatpush2.msra.mxu0 0.0
        %2985 = vmatprep.subr.mxu0 0.0
        %2986 = vmatpush2.msra.mxu0 0.0
        %2987 = vmatprep.subr.mxu0 0.0
        %2988 = vmatpush2.msra.mxu0 0.0
        %2989 = vmatprep.subr.mxu0 0.0
        %2990 = vmatpush2.msra.mxu0 0.0
        %2991 = vmatprep.subr.mxu0 0.0
        %2992 = vmatpush2.msra.mxu0 0.0
        %2993 = vmatprep.subr.mxu0 0.0
        %2994 = vmatpush2.msra.mxu0 0.0
        %2995 = vmatprep.subr.mxu0 0.0
        %2996 = vmatpush2.msra.mxu0 0.0
        %2997 = vmatprep.mubr.f32.mxu0 0.0
        %2998 = vmatmul.mubr.f32.gmra.mxu0 %v2931
        %v2999 = vpop.f32.mrf.mxu0
        %v3000 = vadd.f32 0.0, %v2999
        %v3001 = vpop.f32.mrf.mxu0
        %v3002 = vadd.f32 0.0, %v3001
        %3003 = vdwg.mxu0
        %v3004 = vadd.f32 %v2927, %v3000
        %v3005 = vadd.f32 %v2928, %v3002
        %v3006 = vld [vmem:[#allocation3 + $0xb8] sm:$0xff]
        %3007 = vrot.lane.b32.xlu0 %v2437, 127
        %v3008 = vpop.permute.xlu0 %3007
        %3009 = vrot.lane.b32.xlu0 %v2439, 127
        %v3010 = vpop.permute.xlu0 %3009
        %3011 = vrot.lane.b32.xlu0 %v2441, 127
        %v3012 = vpop.permute.xlu0 %3011
        %3013 = vrot.lane.b32.xlu0 %v2443, 127
        %v3014 = vpop.permute.xlu0 %3013
        %3015 = vrot.lane.b32.xlu0 %v2438, 127
        %v3016 = vpop.permute.xlu0 %3015
        %3017 = vrot.lane.b32.xlu0 %v2440, 127
        %v3018 = vpop.permute.xlu0 %3017
        %3019 = vrot.lane.b32.xlu0 %v2442, 127
        %v3020 = vpop.permute.xlu0 %3019
        %3021 = vrot.lane.b32.xlu0 %v2444, 127
        %v3022 = vpop.permute.xlu0 %3021
        %v3023 = vsel %vm873, %v3008, %v3016
        %v3024 = vsel %vm873, %v3010, %v3018
        %v3025 = vsel %vm873, %v3012, %v3020
        %v3026 = vsel %vm873, %v3014, %v3022
        %v3027 = vsel %vm873, %v3016, %v3008
        %v3028 = vsel %vm873, %v3018, %v3010
        %v3029 = vsel %vm873, %v3020, %v3012
        %v3030 = vsel %vm873, %v3022, %v3014
        %s3031 = scalar_lea.vmem %s1, 39
        %v3032 = vld [vmem:[%s3031] ss:$8 sm:$0x3]
        %v3034 = vlaneseq
        %v3035 = vshrl.u32 %v3034, 7
        %v3036 = vsub.s32 0, %v3035
        %v3037 = vrot.slane %v3032, %v3036
        %v3038 = vlaneseq
        %v3039 = vshrl.u32 %v3038, 7
        %v3040 = vsub.s32 1, %v3039
        %v3041 = vrot.slane %v3032, %v3040
        %v3044 = vmul.f32 %v3023, %v3037
        %v3045 = vmul.f32 %v3027, %v3041
        %v3046 = vmul.f32 %v3024, %v3037
        %v3047 = vmul.f32 %v3028, %v3041
        %v3048 = vmul.f32 %v3025, %v3037
        %v3049 = vmul.f32 %v3029, %v3041
        %v3050 = vmul.f32 %v3026, %v3037
        %v3051 = vmul.f32 %v3030, %v3041
        %v3053 = vsel %vm384, %v3006, 0
        %3055 = vmatprep.subr.mxu0 0.0
        %3056 = vmatpush1.msra.mxu0 0.0
        %3057 = vmatprep.subr.mxu0 0.0
        %3058 = vmatpush1.msra.mxu0 0.0
        %3059 = vmatprep.subr.mxu0 0.0
        %3060 = vmatpush1.msra.mxu0 0.0
        %3061 = vmatprep.subr.mxu0 0.0
        %3062 = vmatpush1.msra.mxu0 0.0
        %3063 = vmatprep.subr.mxu0 0.0
        %3064 = vmatpush1.msra.mxu0 0.0
        %3065 = vmatprep.subr.mxu0 0.0
        %3066 = vmatpush1.msra.mxu0 0.0
        %3067 = vmatprep.subr.mxu0 0.0
        %3068 = vmatpush1.msra.mxu0 0.0
        %3069 = vmatprep.subr.mxu0 0.0
        %3070 = vmatpush1.msra.mxu0 0.0
        %3071 = vmatprep.subr.mxu0 0.0
        %3072 = vmatpush1.msra.mxu0 0.0
        %3073 = vmatprep.subr.mxu0 0.0
        %3074 = vmatpush1.msra.mxu0 0.0
        %3075 = vmatprep.subr.mxu0 0.0
        %3076 = vmatpush1.msra.mxu0 0.0
        %3077 = vmatprep.subr.mxu0 0.0
        %3078 = vmatpush1.msra.mxu0 0.0
        %3079 = vmatprep.subr.mxu0 %v3051
        %3080 = vmatpush1.msra.mxu0 %v3050
        %3081 = vmatprep.subr.mxu0 %v3049
        %3082 = vmatpush1.msra.mxu0 %v3048
        %3083 = vmatprep.subr.mxu0 %v3047
        %3084 = vmatpush1.msra.mxu0 %v3046
        %3085 = vmatprep.subr.mxu0 %v3045
        %3086 = vmatpush1.msra.mxu0 %v3044
        %3087 = vmatprep.subr.mxu0 0.0
        %3088 = vmatpush2.msra.mxu0 0.0
        %3089 = vmatprep.subr.mxu0 0.0
        %3090 = vmatpush2.msra.mxu0 0.0
        %3091 = vmatprep.subr.mxu0 0.0
        %3092 = vmatpush2.msra.mxu0 0.0
        %3093 = vmatprep.subr.mxu0 0.0
        %3094 = vmatpush2.msra.mxu0 0.0
        %3095 = vmatprep.subr.mxu0 0.0
        %3096 = vmatpush2.msra.mxu0 0.0
        %3097 = vmatprep.subr.mxu0 0.0
        %3098 = vmatpush2.msra.mxu0 0.0
        %3099 = vmatprep.subr.mxu0 0.0
        %3100 = vmatpush2.msra.mxu0 0.0
        %3101 = vmatprep.subr.mxu0 0.0
        %3102 = vmatpush2.msra.mxu0 0.0
        %3103 = vmatprep.subr.mxu0 0.0
        %3104 = vmatpush2.msra.mxu0 0.0
        %3105 = vmatprep.subr.mxu0 0.0
        %3106 = vmatpush2.msra.mxu0 0.0
        %3107 = vmatprep.subr.mxu0 0.0
        %3108 = vmatpush2.msra.mxu0 0.0
        %3109 = vmatprep.subr.mxu0 0.0
        %3110 = vmatpush2.msra.mxu0 0.0
        %3111 = vmatprep.subr.mxu0 0.0
        %3112 = vmatpush2.msra.mxu0 0.0
        %3113 = vmatprep.subr.mxu0 0.0
        %3114 = vmatpush2.msra.mxu0 0.0
        %3115 = vmatprep.subr.mxu0 0.0
        %3116 = vmatpush2.msra.mxu0 0.0
        %3117 = vmatprep.subr.mxu0 0.0
        %3118 = vmatpush2.msra.mxu0 0.0
        %3119 = vmatprep.mubr.f32.mxu0 0.0
        %3120 = vmatmul.mubr.f32.gmra.mxu0 %v3053
        %v3121 = vpop.f32.mrf.mxu0
        %v3122 = vadd.f32 0.0, %v3121
        %v3123 = vpop.f32.mrf.mxu0
        %v3124 = vadd.f32 0.0, %v3123
        %3125 = vdwg.mxu0
        %v3126 = vadd.f32 %v3004, %v3122
        %v3127 = vadd.f32 %v3005, %v3124
        %v3128 = vld [vmem:[#allocation3 + $0xc0] sm:$0xff]
        %3129 = vrot.lane.b32.xlu0 %v2437, 113
        %v3130 = vpop.permute.xlu0 %3129
        %3131 = vrot.lane.b32.xlu0 %v2439, 113
        %v3132 = vpop.permute.xlu0 %3131
        %3133 = vrot.lane.b32.xlu0 %v2441, 113
        %v3134 = vpop.permute.xlu0 %3133
        %3135 = vrot.lane.b32.xlu0 %v2443, 113
        %v3136 = vpop.permute.xlu0 %3135
        %3137 = vrot.lane.b32.xlu0 %v2438, 113
        %v3138 = vpop.permute.xlu0 %3137
        %3139 = vrot.lane.b32.xlu0 %v2440, 113
        %v3140 = vpop.permute.xlu0 %3139
        %3141 = vrot.lane.b32.xlu0 %v2442, 113
        %v3142 = vpop.permute.xlu0 %3141
        %3143 = vrot.lane.b32.xlu0 %v2444, 113
        %v3144 = vpop.permute.xlu0 %3143
        %v3145 = vsel %vm996, %v3130, %v3138
        %v3146 = vsel %vm996, %v3132, %v3140
        %v3147 = vsel %vm996, %v3134, %v3142
        %v3148 = vsel %vm996, %v3136, %v3144
        %v3149 = vsel %vm996, %v3138, %v3130
        %v3150 = vsel %vm996, %v3140, %v3132
        %v3151 = vsel %vm996, %v3142, %v3134
        %v3152 = vsel %vm996, %v3144, %v3136
        %s3153 = scalar_lea.vmem %s1, 48
        %v3154 = vld [vmem:[%s3153] ss:$8 sm:$0x3]
        %v3156 = vlaneseq
        %v3157 = vshrl.u32 %v3156, 7
        %v3158 = vsub.s32 0, %v3157
        %v3159 = vrot.slane %v3154, %v3158
        %v3160 = vlaneseq
        %v3161 = vshrl.u32 %v3160, 7
        %v3162 = vsub.s32 1, %v3161
        %v3163 = vrot.slane %v3154, %v3162
        %v3166 = vmul.f32 %v3145, %v3159
        %v3167 = vmul.f32 %v3149, %v3163
        %v3168 = vmul.f32 %v3146, %v3159
        %v3169 = vmul.f32 %v3150, %v3163
        %v3170 = vmul.f32 %v3147, %v3159
        %v3171 = vmul.f32 %v3151, %v3163
        %v3172 = vmul.f32 %v3148, %v3159
        %v3173 = vmul.f32 %v3152, %v3163
        %v3175 = vsel %vm384, %v3128, 0
        %3177 = vmatprep.subr.mxu0 0.0
        %3178 = vmatpush1.msra.mxu0 0.0
        %3179 = vmatprep.subr.mxu0 0.0
        %3180 = vmatpush1.msra.mxu0 0.0
        %3181 = vmatprep.subr.mxu0 0.0
        %3182 = vmatpush1.msra.mxu0 0.0
        %3183 = vmatprep.subr.mxu0 0.0
        %3184 = vmatpush1.msra.mxu0 0.0
        %3185 = vmatprep.subr.mxu0 0.0
        %3186 = vmatpush1.msra.mxu0 0.0
        %3187 = vmatprep.subr.mxu0 0.0
        %3188 = vmatpush1.msra.mxu0 0.0
        %3189 = vmatprep.subr.mxu0 0.0
        %3190 = vmatpush1.msra.mxu0 0.0
        %3191 = vmatprep.subr.mxu0 0.0
        %3192 = vmatpush1.msra.mxu0 0.0
        %3193 = vmatprep.subr.mxu0 0.0
        %3194 = vmatpush1.msra.mxu0 0.0
        %3195 = vmatprep.subr.mxu0 0.0
        %3196 = vmatpush1.msra.mxu0 0.0
        %3197 = vmatprep.subr.mxu0 0.0
        %3198 = vmatpush1.msra.mxu0 0.0
        %3199 = vmatprep.subr.mxu0 0.0
        %3200 = vmatpush1.msra.mxu0 0.0
        %3201 = vmatprep.subr.mxu0 %v3173
        %3202 = vmatpush1.msra.mxu0 %v3172
        %3203 = vmatprep.subr.mxu0 %v3171
        %3204 = vmatpush1.msra.mxu0 %v3170
        %3205 = vmatprep.subr.mxu0 %v3169
        %3206 = vmatpush1.msra.mxu0 %v3168
        %3207 = vmatprep.subr.mxu0 %v3167
        %3208 = vmatpush1.msra.mxu0 %v3166
        %3209 = vmatprep.subr.mxu0 0.0
        %3210 = vmatpush2.msra.mxu0 0.0
        %3211 = vmatprep.subr.mxu0 0.0
        %3212 = vmatpush2.msra.mxu0 0.0
        %3213 = vmatprep.subr.mxu0 0.0
        %3214 = vmatpush2.msra.mxu0 0.0
        %3215 = vmatprep.subr.mxu0 0.0
        %3216 = vmatpush2.msra.mxu0 0.0
        %3217 = vmatprep.subr.mxu0 0.0
        %3218 = vmatpush2.msra.mxu0 0.0
        %3219 = vmatprep.subr.mxu0 0.0
        %3220 = vmatpush2.msra.mxu0 0.0
        %3221 = vmatprep.subr.mxu0 0.0
        %3222 = vmatpush2.msra.mxu0 0.0
        %3223 = vmatprep.subr.mxu0 0.0
        %3224 = vmatpush2.msra.mxu0 0.0
        %3225 = vmatprep.subr.mxu0 0.0
        %3226 = vmatpush2.msra.mxu0 0.0
        %3227 = vmatprep.subr.mxu0 0.0
        %3228 = vmatpush2.msra.mxu0 0.0
        %3229 = vmatprep.subr.mxu0 0.0
        %3230 = vmatpush2.msra.mxu0 0.0
        %3231 = vmatprep.subr.mxu0 0.0
        %3232 = vmatpush2.msra.mxu0 0.0
        %3233 = vmatprep.subr.mxu0 0.0
        %3234 = vmatpush2.msra.mxu0 0.0
        %3235 = vmatprep.subr.mxu0 0.0
        %3236 = vmatpush2.msra.mxu0 0.0
        %3237 = vmatprep.subr.mxu0 0.0
        %3238 = vmatpush2.msra.mxu0 0.0
        %3239 = vmatprep.subr.mxu0 0.0
        %3240 = vmatpush2.msra.mxu0 0.0
        %3241 = vmatprep.mubr.f32.mxu0 0.0
        %3242 = vmatmul.mubr.f32.gmra.mxu0 %v3175
        %v3243 = vpop.f32.mrf.mxu0
        %v3244 = vadd.f32 0.0, %v3243
        %v3245 = vpop.f32.mrf.mxu0
        %v3246 = vadd.f32 0.0, %v3245
        %3247 = vdwg.mxu0
        %v3248 = vadd.f32 %v3126, %v3244
        %v3249 = vadd.f32 %v3127, %v3246
        %v3250 = vld [vmem:[#allocation3 + $0xc8] sm:$0xff]
        %3251 = vrot.lane.b32.xlu0 %v2437, 112
        %v3252 = vpop.permute.xlu0 %3251
        %3253 = vrot.lane.b32.xlu0 %v2439, 112
        %v3254 = vpop.permute.xlu0 %3253
        %3255 = vrot.lane.b32.xlu0 %v2441, 112
        %v3256 = vpop.permute.xlu0 %3255
        %3257 = vrot.lane.b32.xlu0 %v2443, 112
        %v3258 = vpop.permute.xlu0 %3257
        %3259 = vrot.lane.b32.xlu0 %v2438, 112
        %v3260 = vpop.permute.xlu0 %3259
        %3261 = vrot.lane.b32.xlu0 %v2440, 112
        %v3262 = vpop.permute.xlu0 %3261
        %3263 = vrot.lane.b32.xlu0 %v2442, 112
        %v3264 = vpop.permute.xlu0 %3263
        %3265 = vrot.lane.b32.xlu0 %v2444, 112
        %v3266 = vpop.permute.xlu0 %3265
        %v3267 = vsel %vm1119, %v3252, %v3260
        %v3268 = vsel %vm1119, %v3254, %v3262
        %v3269 = vsel %vm1119, %v3256, %v3264
        %v3270 = vsel %vm1119, %v3258, %v3266
        %v3271 = vsel %vm1119, %v3260, %v3252
        %v3272 = vsel %vm1119, %v3262, %v3254
        %v3273 = vsel %vm1119, %v3264, %v3256
        %v3274 = vsel %vm1119, %v3266, %v3258
        %s3275 = scalar_lea.vmem %s1, 49
        %v3276 = vld [vmem:[%s3275] ss:$8 sm:$0x3]
        %v3278 = vlaneseq
        %v3279 = vshrl.u32 %v3278, 7
        %v3280 = vsub.s32 0, %v3279
        %v3281 = vrot.slane %v3276, %v3280
        %v3282 = vlaneseq
        %v3283 = vshrl.u32 %v3282, 7
        %v3284 = vsub.s32 1, %v3283
        %v3285 = vrot.slane %v3276, %v3284
        %v3288 = vmul.f32 %v3267, %v3281
        %v3289 = vmul.f32 %v3271, %v3285
        %v3290 = vmul.f32 %v3268, %v3281
        %v3291 = vmul.f32 %v3272, %v3285
        %v3292 = vmul.f32 %v3269, %v3281
        %v3293 = vmul.f32 %v3273, %v3285
        %v3294 = vmul.f32 %v3270, %v3281
        %v3295 = vmul.f32 %v3274, %v3285
        %v3297 = vsel %vm384, %v3250, 0
        %3299 = vmatprep.subr.mxu0 0.0
        %3300 = vmatpush1.msra.mxu0 0.0
        %3301 = vmatprep.subr.mxu0 0.0
        %3302 = vmatpush1.msra.mxu0 0.0
        %3303 = vmatprep.subr.mxu0 0.0
        %3304 = vmatpush1.msra.mxu0 0.0
        %3305 = vmatprep.subr.mxu0 0.0
        %3306 = vmatpush1.msra.mxu0 0.0
        %3307 = vmatprep.subr.mxu0 0.0
        %3308 = vmatpush1.msra.mxu0 0.0
        %3309 = vmatprep.subr.mxu0 0.0
        %3310 = vmatpush1.msra.mxu0 0.0
        %3311 = vmatprep.subr.mxu0 0.0
        %3312 = vmatpush1.msra.mxu0 0.0
        %3313 = vmatprep.subr.mxu0 0.0
        %3314 = vmatpush1.msra.mxu0 0.0
        %3315 = vmatprep.subr.mxu0 0.0
        %3316 = vmatpush1.msra.mxu0 0.0
        %3317 = vmatprep.subr.mxu0 0.0
        %3318 = vmatpush1.msra.mxu0 0.0
        %3319 = vmatprep.subr.mxu0 0.0
        %3320 = vmatpush1.msra.mxu0 0.0
        %3321 = vmatprep.subr.mxu0 0.0
        %3322 = vmatpush1.msra.mxu0 0.0
        %3323 = vmatprep.subr.mxu0 %v3295
        %3324 = vmatpush1.msra.mxu0 %v3294
        %3325 = vmatprep.subr.mxu0 %v3293
        %3326 = vmatpush1.msra.mxu0 %v3292
        %3327 = vmatprep.subr.mxu0 %v3291
        %3328 = vmatpush1.msra.mxu0 %v3290
        %3329 = vmatprep.subr.mxu0 %v3289
        %3330 = vmatpush1.msra.mxu0 %v3288
        %3331 = vmatprep.subr.mxu0 0.0
        %3332 = vmatpush2.msra.mxu0 0.0
        %3333 = vmatprep.subr.mxu0 0.0
        %3334 = vmatpush2.msra.mxu0 0.0
        %3335 = vmatprep.subr.mxu0 0.0
        %3336 = vmatpush2.msra.mxu0 0.0
        %3337 = vmatprep.subr.mxu0 0.0
        %3338 = vmatpush2.msra.mxu0 0.0
        %3339 = vmatprep.subr.mxu0 0.0
        %3340 = vmatpush2.msra.mxu0 0.0
        %3341 = vmatprep.subr.mxu0 0.0
        %3342 = vmatpush2.msra.mxu0 0.0
        %3343 = vmatprep.subr.mxu0 0.0
        %3344 = vmatpush2.msra.mxu0 0.0
        %3345 = vmatprep.subr.mxu0 0.0
        %3346 = vmatpush2.msra.mxu0 0.0
        %3347 = vmatprep.subr.mxu0 0.0
        %3348 = vmatpush2.msra.mxu0 0.0
        %3349 = vmatprep.subr.mxu0 0.0
        %3350 = vmatpush2.msra.mxu0 0.0
        %3351 = vmatprep.subr.mxu0 0.0
        %3352 = vmatpush2.msra.mxu0 0.0
        %3353 = vmatprep.subr.mxu0 0.0
        %3354 = vmatpush2.msra.mxu0 0.0
        %3355 = vmatprep.subr.mxu0 0.0
        %3356 = vmatpush2.msra.mxu0 0.0
        %3357 = vmatprep.subr.mxu0 0.0
        %3358 = vmatpush2.msra.mxu0 0.0
        %3359 = vmatprep.subr.mxu0 0.0
        %3360 = vmatpush2.msra.mxu0 0.0
        %3361 = vmatprep.subr.mxu0 0.0
        %3362 = vmatpush2.msra.mxu0 0.0
        %3363 = vmatprep.mubr.f32.mxu0 0.0
        %3364 = vmatmul.mubr.f32.gmra.mxu0 %v3297
        %v3365 = vpop.f32.mrf.mxu0
        %v3366 = vadd.f32 0.0, %v3365
        %v3367 = vpop.f32.mrf.mxu0
        %v3368 = vadd.f32 0.0, %v3367
        %3369 = vdwg.mxu0
        %v3370 = vadd.f32 %v3248, %v3366
        %v3371 = vadd.f32 %v3249, %v3368
        %v3372 = vld [vmem:[#allocation3 + $0xd0] sm:$0xff]
        %3373 = vrot.lane.b32.xlu0 %v2437, 111
        %v3374 = vpop.permute.xlu0 %3373
        %3375 = vrot.lane.b32.xlu0 %v2439, 111
        %v3376 = vpop.permute.xlu0 %3375
        %3377 = vrot.lane.b32.xlu0 %v2441, 111
        %v3378 = vpop.permute.xlu0 %3377
        %3379 = vrot.lane.b32.xlu0 %v2443, 111
        %v3380 = vpop.permute.xlu0 %3379
        %3381 = vrot.lane.b32.xlu0 %v2438, 111
        %v3382 = vpop.permute.xlu0 %3381
        %3383 = vrot.lane.b32.xlu0 %v2440, 111
        %v3384 = vpop.permute.xlu0 %3383
        %3385 = vrot.lane.b32.xlu0 %v2442, 111
        %v3386 = vpop.permute.xlu0 %3385
        %3387 = vrot.lane.b32.xlu0 %v2444, 111
        %v3388 = vpop.permute.xlu0 %3387
        %v3389 = vsel %vm1242, %v3374, %v3382
        %v3390 = vsel %vm1242, %v3376, %v3384
        %v3391 = vsel %vm1242, %v3378, %v3386
        %v3392 = vsel %vm1242, %v3380, %v3388
        %v3393 = vsel %vm1242, %v3382, %v3374
        %v3394 = vsel %vm1242, %v3384, %v3376
        %v3395 = vsel %vm1242, %v3386, %v3378
        %v3396 = vsel %vm1242, %v3388, %v3380
        %s3397 = scalar_lea.vmem %s1, 50
        %v3398 = vld [vmem:[%s3397] ss:$8 sm:$0x3]
        %v3400 = vlaneseq
        %v3401 = vshrl.u32 %v3400, 7
        %v3402 = vsub.s32 0, %v3401
        %v3403 = vrot.slane %v3398, %v3402
        %v3404 = vlaneseq
        %v3405 = vshrl.u32 %v3404, 7
        %v3406 = vsub.s32 1, %v3405
        %v3407 = vrot.slane %v3398, %v3406
        %v3410 = vmul.f32 %v3389, %v3403
        %v3411 = vmul.f32 %v3393, %v3407
        %v3412 = vmul.f32 %v3390, %v3403
        %v3413 = vmul.f32 %v3394, %v3407
        %v3414 = vmul.f32 %v3391, %v3403
        %v3415 = vmul.f32 %v3395, %v3407
        %v3416 = vmul.f32 %v3392, %v3403
        %v3417 = vmul.f32 %v3396, %v3407
        %v3419 = vsel %vm384, %v3372, 0
        %3421 = vmatprep.subr.mxu0 0.0
        %3422 = vmatpush1.msra.mxu0 0.0
        %3423 = vmatprep.subr.mxu0 0.0
        %3424 = vmatpush1.msra.mxu0 0.0
        %3425 = vmatprep.subr.mxu0 0.0
        %3426 = vmatpush1.msra.mxu0 0.0
        %3427 = vmatprep.subr.mxu0 0.0
        %3428 = vmatpush1.msra.mxu0 0.0
        %3429 = vmatprep.subr.mxu0 0.0
        %3430 = vmatpush1.msra.mxu0 0.0
        %3431 = vmatprep.subr.mxu0 0.0
        %3432 = vmatpush1.msra.mxu0 0.0
        %3433 = vmatprep.subr.mxu0 0.0
        %3434 = vmatpush1.msra.mxu0 0.0
        %3435 = vmatprep.subr.mxu0 0.0
        %3436 = vmatpush1.msra.mxu0 0.0
        %3437 = vmatprep.subr.mxu0 0.0
        %3438 = vmatpush1.msra.mxu0 0.0
        %3439 = vmatprep.subr.mxu0 0.0
        %3440 = vmatpush1.msra.mxu0 0.0
        %3441 = vmatprep.subr.mxu0 0.0
        %3442 = vmatpush1.msra.mxu0 0.0
        %3443 = vmatprep.subr.mxu0 0.0
        %3444 = vmatpush1.msra.mxu0 0.0
        %3445 = vmatprep.subr.mxu0 %v3417
        %3446 = vmatpush1.msra.mxu0 %v3416
        %3447 = vmatprep.subr.mxu0 %v3415
        %3448 = vmatpush1.msra.mxu0 %v3414
        %3449 = vmatprep.subr.mxu0 %v3413
        %3450 = vmatpush1.msra.mxu0 %v3412
        %3451 = vmatprep.subr.mxu0 %v3411
        %3452 = vmatpush1.msra.mxu0 %v3410
        %3453 = vmatprep.subr.mxu0 0.0
        %3454 = vmatpush2.msra.mxu0 0.0
        %3455 = vmatprep.subr.mxu0 0.0
        %3456 = vmatpush2.msra.mxu0 0.0
        %3457 = vmatprep.subr.mxu0 0.0
        %3458 = vmatpush2.msra.mxu0 0.0
        %3459 = vmatprep.subr.mxu0 0.0
        %3460 = vmatpush2.msra.mxu0 0.0
        %3461 = vmatprep.subr.mxu0 0.0
        %3462 = vmatpush2.msra.mxu0 0.0
        %3463 = vmatprep.subr.mxu0 0.0
        %3464 = vmatpush2.msra.mxu0 0.0
        %3465 = vmatprep.subr.mxu0 0.0
        %3466 = vmatpush2.msra.mxu0 0.0
        %3467 = vmatprep.subr.mxu0 0.0
        %3468 = vmatpush2.msra.mxu0 0.0
        %3469 = vmatprep.subr.mxu0 0.0
        %3470 = vmatpush2.msra.mxu0 0.0
        %3471 = vmatprep.subr.mxu0 0.0
        %3472 = vmatpush2.msra.mxu0 0.0
        %3473 = vmatprep.subr.mxu0 0.0
        %3474 = vmatpush2.msra.mxu0 0.0
        %3475 = vmatprep.subr.mxu0 0.0
        %3476 = vmatpush2.msra.mxu0 0.0
        %3477 = vmatprep.subr.mxu0 0.0
        %3478 = vmatpush2.msra.mxu0 0.0
        %3479 = vmatprep.subr.mxu0 0.0
        %3480 = vmatpush2.msra.mxu0 0.0
        %3481 = vmatprep.subr.mxu0 0.0
        %3482 = vmatpush2.msra.mxu0 0.0
        %3483 = vmatprep.subr.mxu0 0.0
        %3484 = vmatpush2.msra.mxu0 0.0
        %3485 = vmatprep.mubr.f32.mxu0 0.0
        %3486 = vmatmul.mubr.f32.gmra.mxu0 %v3419
        %v3487 = vpop.f32.mrf.mxu0
        %v3488 = vadd.f32 0.0, %v3487
        %v3489 = vpop.f32.mrf.mxu0
        %v3490 = vadd.f32 0.0, %v3489
        %3491 = vdwg.mxu0
        %v3492 = vadd.f32 %v3370, %v3488
        %v3493 = vadd.f32 %v3371, %v3490
        %v3494 = vld [vmem:[%s3 + $0x10] sm:$0xff]
        %3496 = vset.pattern.permute.xlu0 0
        %3497 = vperm.xlu0 %3496, %v3494
        %v3498 = vpop.permute.xlu0 %3497
        %v3500 = vadd.f32 %v3492, %v3498
        %v3501 = vadd.f32 %v3493, %v3498
        %v3502 = vmax.f32 %v3500, 0.0
        %v3503 = vmax.f32 %v3501, 0.0
        %3504 = vst [vmem:[#allocation2 + $0x20] sm:$0xff] %v3502
        %3505 = vst [vmem:[#allocation2 + $0x28] sm:$0xff] %v3503
        %v3506 = vld [vmem:[%s4] sm:$0xf]
        %v3507 = vld [vmem:[#allocation2] sm:$0xff]
        %v3508 = vld [vmem:[#allocation2 + $0x8] sm:$0xff]
        %v3509 = vld [vmem:[#allocation2 + $0x10] sm:$0xff]
        %v3510 = vld [vmem:[#allocation2 + $0x18] sm:$0xff]
        %v3511 = vld [vmem:[#allocation2 + $0x20] sm:$0xff]
        %v3512 = vld [vmem:[#allocation2 + $0x28] sm:$0xff]
        %v3513 = vld [vmem:[#allocation2 + $0x30] sm:$0xff]
        %v3514 = vld [vmem:[#allocation2 + $0x38] sm:$0xff]
        %v3515 = vld [vmem:[%s5] sm:$0xf]
        %3517 = vset.pattern.permute.xlu0 0
        %3518 = vperm.xlu0 %3517, %v3515
        %v3519 = vpop.permute.xlu0 %3518
        %v3522 = vsel %vm384, %v3506, 0
        %3524 = vmatprep.subr.mxu0 0.0
        %3525 = vmatpush1.msra.mxu0 0.0
        %3526 = vmatprep.subr.mxu0 0.0
        %3527 = vmatpush1.msra.mxu0 0.0
        %3528 = vmatprep.subr.mxu0 0.0
        %3529 = vmatpush1.msra.mxu0 0.0
        %3530 = vmatprep.subr.mxu0 0.0
        %3531 = vmatpush1.msra.mxu0 0.0
        %3532 = vmatprep.subr.mxu0 0.0
        %3533 = vmatpush1.msra.mxu0 0.0
        %3534 = vmatprep.subr.mxu0 0.0
        %3535 = vmatpush1.msra.mxu0 0.0
        %3536 = vmatprep.subr.mxu0 0.0
        %3537 = vmatpush1.msra.mxu0 0.0
        %3538 = vmatprep.subr.mxu0 0.0
        %3539 = vmatpush1.msra.mxu0 0.0
        %3540 = vmatprep.subr.mxu0 0.0
        %3541 = vmatpush1.msra.mxu0 0.0
        %3542 = vmatprep.subr.mxu0 0.0
        %3543 = vmatpush1.msra.mxu0 0.0
        %3544 = vmatprep.subr.mxu0 0.0
        %3545 = vmatpush1.msra.mxu0 0.0
        %3546 = vmatprep.subr.mxu0 0.0
        %3547 = vmatpush1.msra.mxu0 0.0
        %3548 = vmatprep.subr.mxu0 %v3514
        %3549 = vmatpush1.msra.mxu0 %v3513
        %3550 = vmatprep.subr.mxu0 %v3512
        %3551 = vmatpush1.msra.mxu0 %v3511
        %3552 = vmatprep.subr.mxu0 %v3510
        %3553 = vmatpush1.msra.mxu0 %v3509
        %3554 = vmatprep.subr.mxu0 %v3508
        %3555 = vmatpush1.msra.mxu0 %v3507
        %3556 = vmatprep.subr.mxu0 0.0
        %3557 = vmatpush2.msra.mxu0 0.0
        %3558 = vmatprep.subr.mxu0 0.0
        %3559 = vmatpush2.msra.mxu0 0.0
        %3560 = vmatprep.subr.mxu0 0.0
        %3561 = vmatpush2.msra.mxu0 0.0
        %3562 = vmatprep.subr.mxu0 0.0
        %3563 = vmatpush2.msra.mxu0 0.0
        %3564 = vmatprep.subr.mxu0 0.0
        %3565 = vmatpush2.msra.mxu0 0.0
        %3566 = vmatprep.subr.mxu0 0.0
        %3567 = vmatpush2.msra.mxu0 0.0
        %3568 = vmatprep.subr.mxu0 0.0
        %3569 = vmatpush2.msra.mxu0 0.0
        %3570 = vmatprep.subr.mxu0 0.0
        %3571 = vmatpush2.msra.mxu0 0.0
        %3572 = vmatprep.subr.mxu0 0.0
        %3573 = vmatpush2.msra.mxu0 0.0
        %3574 = vmatprep.subr.mxu0 0.0
        %3575 = vmatpush2.msra.mxu0 0.0
        %3576 = vmatprep.subr.mxu0 0.0
        %3577 = vmatpush2.msra.mxu0 0.0
        %3578 = vmatprep.subr.mxu0 0.0
        %3579 = vmatpush2.msra.mxu0 0.0
        %3580 = vmatprep.subr.mxu0 0.0
        %3581 = vmatpush2.msra.mxu0 0.0
        %3582 = vmatprep.subr.mxu0 0.0
        %3583 = vmatpush2.msra.mxu0 0.0
        %3584 = vmatprep.subr.mxu0 0.0
        %3585 = vmatpush2.msra.mxu0 0.0
        %3586 = vmatprep.subr.mxu0 0.0
        %3587 = vmatpush2.msra.mxu0 0.0
        %3588 = vmatprep.mubr.f32.mxu0 0.0
        %3589 = vmatmul.mubr.f32.gmra.mxu0 %v3522
        %v3590 = vpop.f32.mrf.mxu0
        %v3591 = vadd.f32 %v3519, %v3590
        %v3592 = vpop.f32.mrf.mxu0
        %v3593 = vadd.f32 %v3519, %v3592
        %3594 = vdwg.mxu0
        %v3595 = vadd.f32 %v3591, %v267
        %v3596 = vadd.f32 %v3593, %v277
        %v3599 = vcombine.low %v3595, %v3596
        %3601 = vst [vmem:[%s266] sm:$0xff] %v3599
        %p3602 = scmp.lt.s32.totalorder %s18, 1
        %s3603 = scalar_select %p3602, %s18, 1
        %s3604 = smul.addr %s3603, 2
        %s3605 = smul.addr %s3604, 4
        %s3606 = scalar_lea.vmem %s6, %s3605
        // Predicated region
        $region49: #{rdb_fwd.1} parent=43 // pred_check
          %p3607 = pneg %p167
        $region50: #{rdb_fwd.1} parent=43 // pred_check_branch
          %3609 = sbr.rel (%p3607) target = $region52
        $region51: #{rdb_fwd.1} parent=43 // pred_region
          _
        $region52: #{rdb_fwd.1} parent=43 // pred_fallthru
          _
      $region44: #{rdb_fwd.1} parent=5 // pred_fallthru
        _
      %p3610 = scmp.le.s32.totalorder 2, %s13
      // Predicated region
      $region53: #{rdb_fwd.1} parent=5 // pred_check
        %p3611 = pneg %p3610
      $region54: #{rdb_fwd.1} parent=5 // pred_check_branch
        %3613 = sbr.rel (%p3611) target = $region56
      $region55: #{rdb_fwd.1} parent=5 // pred_region
        %s3614 = ssub.s32 %s13, 2
        // Predicated region
        $region57: #{rdb_fwd.1} parent=55 // pred_check
          %p3615 = pneg %p173
        $region58: #{rdb_fwd.1} parent=55 // pred_check_branch
          %3617 = sbr.rel (%p3615) target = $region60
        $region59: #{rdb_fwd.1} parent=55 // pred_region
          %p3618 = scmp.lt.s32.totalorder %s19, 1
          %s3619 = scalar_select %p3618, %s19, 1
          %s3620 = smul.addr %s3619, 2
          %s3621 = smul.addr %s3620, 4
          %s3622 = scalar_lea.vmem %s6, %s3621
        $region60: #{rdb_fwd.1} parent=55 // pred_fallthru
          _
      $region56: #{rdb_fwd.1} parent=5 // pred_fallthru
        _
    $region6: #{rdb_fwd.1} parent=1 // loop_footer
      %s17 = sadd.s32 1, %s13
    $region7: #{rdb_fwd.1} parent=1 // loop_footer_branch
      %12 = sbr.rel target = $region3
    $region8: #{rdb_fwd.1} parent=1 // loop_exit
      _
    %3623 = vsyncpa [#allocation4], 1
    %s3624 = scalar_lea.sflag [#allocation4], 1
    %3625 = vsyncpa %s3624, 1

</llo_original>
